<compile_context>
chip_gen: v5e
topology: v5e:2x2
jax: 0.10.0
libtpu: 0.0.40
codegen_flags: <defaults>
</compile_context>

<pallas_src>
import math
import jax
import jax.numpy as jnp
from jax.experimental import pallas as pl
from jax.experimental.pallas import tpu as pltpu


# ---------------------------------------------------------------------------
# Fused kernel: per-batch NetVLAD pooling + fc + sigmoid
# ---------------------------------------------------------------------------
def netvlad_fc_kernel(x_ref, clusters_ref, clusters2t_ref, bn_scale_ref,
                      bn_shift_ref, w3_ref, fcb_ref, out_ref):
    x = x_ref[0]                                                   # (N, D)
    N = x.shape[0]
    D = x.shape[1]

    # ---- soft assignment: softmax(BN_eval(x @ clusters)) -------------------
    logits = jnp.dot(x, clusters_ref[...],
                     preferred_element_type=jnp.float32)           # (N, K)
    logits = logits * bn_scale_ref[...] + bn_shift_ref[...]        # folded eval BN
    logits = logits - jnp.max(logits, axis=-1, keepdims=True)
    e = jnp.exp(logits)
    assign = e * (1.0 / jnp.sum(e, axis=-1, keepdims=True))        # (N, K)

    # ---- VLAD residual aggregation in lane-dense (K, D) layout -------------
    # raw[k, d] = sum_n assign[n, k] * x[n, d]   (MXU, A^T @ B form)
    raw = jax.lax.dot_general(
        assign, x,
        dimension_numbers=(((0,), (0,)), ((), ())),
        preferred_element_type=jnp.float32)                        # (K, D)
    # a_k1[k] = sum_n assign[n, k]  via a tiny MXU matvec (no (N,D) ones splat,
    # no 512-lane-wide broadcast matmul result)
    ones_n1 = jnp.ones((N, 1), dtype=jnp.float32)
    a_k1 = jax.lax.dot_general(
        assign, ones_n1,
        dimension_numbers=(((0,), (0,)), ((), ())),
        preferred_element_type=jnp.float32)                        # (K, 1)
    vlad = raw - a_k1 * clusters2t_ref[...]                        # (K, D)

    # ---- intra-normalization (L2 over D per cluster, clamp like F.normalize)
    # squared row sums on the MXU: (vlad*vlad) @ ones(D,1) -> (K,1)
    ones_d1 = jnp.ones((D, 1), dtype=jnp.float32)
    intra_sq = jax.lax.dot_general(
        vlad * vlad, ones_d1,
        dimension_numbers=(((1,), (0,)), ((), ())),
        preferred_element_type=jnp.float32)                        # (K, 1)
    intra = jnp.sqrt(intra_sq)                                     # (K, 1)
    inv_intra = 1.0 / jnp.maximum(intra, 1e-12)                    # (K, 1)

    # ---- global L2 normalization, derived from the intra norms -------------
    # After intra-normalization each row has norm intra_k * inv_intra_k, so
    # total^2 = sum_k (intra_k * inv_intra_k)^2  (64 values instead of re-reducing
    # the full (K, D) vlad).
    r = intra * inv_intra                                          # (K, 1)
    total = jnp.sqrt(jnp.sum(r * r))                               # scalar
    inv_total = 1.0 / jnp.maximum(total, 1e-12)

    # single fused (K,1) scale for both normalizations
    vlad = vlad * (inv_intra * inv_total)                          # (K, D)

    # ---- fused fc + sigmoid: logit[c] = <vlad, W3[c]>_Frobenius + b[c] ------
    # w3[c, k, d] == fc_w[d*K + k, c]  (flatten-order-preserving permutation)
    # Reduce over K (sublane axis) FIRST -> cheap VPU vadds + few sublane
    # reduces; only the small (C, D) result hits the cross-lane reducer.
    prod = w3_ref[...] * vlad[None, :, :]                          # (C, K, D)
    s1 = jnp.sum(prod, axis=1)                                     # (C, D)
    fc = jnp.sum(s1, axis=1, keepdims=True) + fcb_ref[...]         # (C, 1)
    out_ref[0] = 1.0 / (1.0 + jnp.exp(-fc))                        # (C, 1)


# ---------------------------------------------------------------------------
# Wrapper
# ---------------------------------------------------------------------------
def netvlad_model_forward(x, clusters, clusters2, bn_scale, bn_shift, fc_w, fc_b):
    """x: (B, N, D) float32. Returns sigmoid class scores (B, num_classes+1).

    bn_scale / bn_shift must be the eval-mode BatchNorm1d(K) folded into a
    per-cluster scale/shift pair:
        bn_scale = gamma / sqrt(running_var + eps),  bn_shift = beta - running_mean * bn_scale
    (with gamma=1, beta=0 if affine parameters are absent).
    """
    B, N, D = x.shape
    K = clusters.shape[1]
    C = fc_w.shape[1]

    # Static layout preprocessing (plain XLA ops, done once per call):
    clusters2_t = clusters2.T                                      # (K, D) lane-dense
    # fc_w: (D*K, C) with PyTorch flatten index d*K + k  ->  (C, K, D) so the
    # long contiguous axis (D=512) is the lane dim; row ordering preserved.
    w3 = jnp.transpose(fc_w.reshape(D, K, C), (2, 1, 0))           # (C, K, D)
    fc_b_col = fc_b.reshape(C, 1)

    out = pl.pallas_call(
        netvlad_fc_kernel,
        out_shape=jax.ShapeDtypeStruct((B, C, 1), jnp.float32),
        grid=(B,),
        in_specs=[
            pl.BlockSpec((1, N, D), lambda b: (b, 0, 0)),          # x
            pl.BlockSpec((D, K), lambda b: (0, 0)),                # clusters
            pl.BlockSpec((K, D), lambda b: (0, 0)),                # clusters2^T
            pl.BlockSpec((1, K), lambda b: (0, 0)),                # bn scale
            pl.BlockSpec((1, K), lambda b: (0, 0)),                # bn shift
            pl.BlockSpec((C, K, D), lambda b: (0, 0, 0)),          # fc weight (re-laid)
            pl.BlockSpec((C, 1), lambda b: (0, 0)),                # fc bias
        ],
        out_specs=pl.BlockSpec((1, C, 1), lambda b: (b, 0, 0)),
        compiler_params=pltpu.CompilerParams(
            dimension_semantics=("parallel",)),                    # 2 TCs on v7x
    )(x, clusters, clusters2_t, bn_scale, bn_shift, w3, fc_b_col)

    return out.reshape(B, C)


# ---------------------------------------------------------------------------
# Pure-JAX reference (mirrors the PyTorch NetVLAD forward) for a sanity check
# ---------------------------------------------------------------------------
def reference_forward(x, clusters, clusters2, bn_scale, bn_shift, fc_w, fc_b):
    B, N, D = x.shape
    K = clusters.shape[1]
    xf = x.reshape(B * N, D)
    assign = xf @ clusters
    assign = assign * bn_scale + bn_shift
    assign = jax.nn.softmax(assign, axis=1)
    assign = assign.reshape(B, N, K)
    a_sum = assign.sum(axis=1, keepdims=True)          # (B, 1, K)
    a = a_sum * clusters2[None]                        # (B, D, K)
    vlad = jnp.einsum('bnk,bnd->bdk', assign, x) - a   # (B, D, K)
    vlad = vlad / jnp.maximum(
        jnp.linalg.norm(vlad, axis=1, keepdims=True), 1e-12)
    vlad = vlad.reshape(B, D * K)                      # d*K + k flatten order
    vlad = vlad / jnp.maximum(
        jnp.linalg.norm(vlad, axis=1, keepdims=True), 1e-12)
    return jax.nn.sigmoid(vlad @ fc_w + fc_b)


if __name__ == "__main__":
    # Small shapes consistent with the module defaults
    B = 2            # batch
    N = 8            # frames in the window (forward only uses the actual length)
    D = 512          # input_size (== 512 -> feature_extractor is skipped)
    K = 64           # vocab_size (NetVLAD cluster count)
    NUM_CLASSES = 17
    C = NUM_CLASSES + 1

    key = jax.random.PRNGKey(0)
    k_x, k_c1, k_c2, k_w, k_b = jax.random.split(key, 5)

    x = jax.random.normal(k_x, (B, N, D), dtype=jnp.float32)

    # NetVLAD parameters (as in the reference NetVLAD: (1/sqrt(D)) * randn)
    clusters = (1.0 / math.sqrt(D)) * jax.random.normal(k_c1, (D, K), jnp.float32)
    clusters2 = (1.0 / math.sqrt(D)) * jax.random.normal(k_c2, (D, K), jnp.float32)

    # BatchNorm1d(K) in eval mode with default stats: scale = 1/sqrt(var+eps), shift = 0
    eps = 1e-5
    bn_scale = jnp.full((1, K), 1.0 / math.sqrt(1.0 + eps), dtype=jnp.float32)
    bn_shift = jnp.zeros((1, K), dtype=jnp.float32)

    # fc: Linear(D*K -> num_classes+1), PyTorch-style uniform init
    bound = 1.0 / math.sqrt(D * K)
    fc_w = jax.random.uniform(k_w, (D * K, C), jnp.float32, -bound, bound)
    fc_b = jax.random.uniform(k_b, (C,), jnp.float32, -bound, bound)

    out = netvlad_model_forward(x, clusters, clusters2, bn_scale, bn_shift, fc_w, fc_b)
    out = jax.block_until_ready(out)

    ref = reference_forward(x, clusters, clusters2, bn_scale, bn_shift, fc_w, fc_b)
    ref = jax.block_until_ready(ref)

    assert out.shape == (B, C), out.shape
    assert jnp.allclose(out, ref, atol=1e-4, rtol=1e-4), (
        f"max abs diff {jnp.max(jnp.abs(out - ref))}")

    print("KERNEL_OK")
</pallas_src>

<mosaic_0001>
module attributes {stable_mosaic.version = 11 : i64} {
  func.func @netvlad_fc_kernel(%arg0: i32, %arg1: memref<1x8x512xf32, #tpu.memory_space<vmem>>, %arg2: memref<512x64xf32, #tpu.memory_space<vmem>>, %arg3: memref<64x512xf32, #tpu.memory_space<vmem>>, %arg4: memref<1x64xf32, #tpu.memory_space<vmem>>, %arg5: memref<1x64xf32, #tpu.memory_space<vmem>>, %arg6: memref<18x64x512xf32, #tpu.memory_space<vmem>>, %arg7: memref<18x1xf32, #tpu.memory_space<vmem>>, %arg8: memref<1x18x1xf32, #tpu.memory_space<vmem>>) attributes {dimension_semantics = [#tpu.dimension_semantics<parallel>], iteration_bounds = array<i64: 2>, scalar_prefetch = 0 : i64, scratch_operands = 0 : i64, tpu.core_type = #tpu.core_type<tc>, window_params = [{transform_indices = @transform_0, window_bounds = array<i64: 1, 8, 512>}, {pipeline_mode = #tpu.pipeline_mode<synchronous>, transform_indices = @transform_1, window_bounds = array<i64: 512, 64>}, {pipeline_mode = #tpu.pipeline_mode<synchronous>, transform_indices = @transform_2, window_bounds = array<i64: 64, 512>}, {pipeline_mode = #tpu.pipeline_mode<synchronous>, transform_indices = @transform_3, window_bounds = array<i64: 1, 64>}, {pipeline_mode = #tpu.pipeline_mode<synchronous>, transform_indices = @transform_4, window_bounds = array<i64: 1, 64>}, {pipeline_mode = #tpu.pipeline_mode<synchronous>, transform_indices = @transform_5, window_bounds = array<i64: 18, 64, 512>}, {pipeline_mode = #tpu.pipeline_mode<synchronous>, transform_indices = @transform_6, window_bounds = array<i64: 18, 1>}, {transform_indices = @transform_7, window_bounds = array<i64: 1, 18, 1>}]} {
    %c0 = arith.constant 0 : index
    %c0_0 = arith.constant 0 : index
    %c0_1 = arith.constant 0 : index
    %0 = vector.load %arg1[%c0, %c0_0, %c0_1] : memref<1x8x512xf32, #tpu.memory_space<vmem>>, vector<1x8x512xf32>
    %1 = vector.shape_cast %0 : vector<1x8x512xf32> to vector<8x512xf32>
    %c0_2 = arith.constant 0 : index
    %c0_3 = arith.constant 0 : index
    %2 = vector.load %arg2[%c0_2, %c0_3] : memref<512x64xf32, #tpu.memory_space<vmem>>, vector<512x64xf32>
    %cst = arith.constant dense<0.000000e+00> : vector<8x64xf32>
    %3 = tpu.matmul %1, %2, %cst {dimension_numbers = #tpu.dot_dimension_numbers<[1], [0], [0], [1], [0, 0, 1, 1], [], []>} : vector<8x512xf32>, vector<512x64xf32>, vector<8x64xf32> -> vector<8x64xf32>
    %c0_4 = arith.constant 0 : index
    %c0_5 = arith.constant 0 : index
    %4 = vector.load %arg4[%c0_4, %c0_5] : memref<1x64xf32, #tpu.memory_space<vmem>>, vector<1x64xf32>
    %5 = vector.broadcast %4 : vector<1x64xf32> to vector<8x64xf32>
    %6 = arith.mulf %3, %5 : vector<8x64xf32>
    %c0_6 = arith.constant 0 : index
    %c0_7 = arith.constant 0 : index
    %7 = vector.load %arg5[%c0_6, %c0_7] : memref<1x64xf32, #tpu.memory_space<vmem>>, vector<1x64xf32>
    %8 = vector.broadcast %7 : vector<1x64xf32> to vector<8x64xf32>
    %9 = arith.addf %6, %8 : vector<8x64xf32>
    %cst_8 = arith.constant dense<0xFF800000> : vector<8xf32>
    %10 = vector.multi_reduction <maximumf>, %9, %cst_8 [1] : vector<8x64xf32> to vector<8xf32>
    %11 = vector.shape_cast %10 : vector<8xf32> to vector<8x1xf32>
    %12 = vector.broadcast %11 : vector<8x1xf32> to vector<8x64xf32>
    %13 = arith.subf %9, %12 : vector<8x64xf32>
    %14 = math.exp %13 : vector<8x64xf32>
    %cst_9 = arith.constant dense<0.000000e+00> : vector<8xf32>
    %15 = vector.multi_reduction <add>, %14, %cst_9 [1] : vector<8x64xf32> to vector<8xf32>
    %16 = vector.shape_cast %15 : vector<8xf32> to vector<8x1xf32>
    %cst_10 = arith.constant 1.000000e+00 : f32
    %17 = vector.broadcast %cst_10 : f32 to vector<8x1xf32>
    %18 = arith.divf %17, %16 : vector<8x1xf32>
    %19 = vector.broadcast %18 : vector<8x1xf32> to vector<8x64xf32>
    %20 = arith.mulf %14, %19 : vector<8x64xf32>
    %cst_11 = arith.constant dense<0.000000e+00> : vector<64x512xf32>
    %21 = tpu.matmul %20, %1, %cst_11 {dimension_numbers = #tpu.dot_dimension_numbers<[0], [0], [1], [1], [0, 1, 1, 1], [], []>} : vector<8x64xf32>, vector<8x512xf32>, vector<64x512xf32> -> vector<64x512xf32>
    %cst_12 = arith.constant 1.000000e+00 : f32
    %22 = vector.broadcast %cst_12 : f32 to vector<8x1xf32>
    %cst_13 = arith.constant dense<0.000000e+00> : vector<64x1xf32>
    %23 = tpu.matmul %20, %22, %cst_13 {dimension_numbers = #tpu.dot_dimension_numbers<[0], [0], [1], [1], [0, 1, 1, 1], [], []>} : vector<8x64xf32>, vector<8x1xf32>, vector<64x1xf32> -> vector<64x1xf32>
    %c0_14 = arith.constant 0 : index
    %c0_15 = arith.constant 0 : index
    %24 = vector.load %arg3[%c0_14, %c0_15] : memref<64x512xf32, #tpu.memory_space<vmem>>, vector<64x512xf32>
    %25 = vector.broadcast %23 : vector<64x1xf32> to vector<64x512xf32>
    %26 = arith.mulf %25, %24 : vector<64x512xf32>
    %27 = arith.subf %21, %26 : vector<64x512xf32>
    %cst_16 = arith.constant 1.000000e+00 : f32
    %28 = vector.broadcast %cst_16 : f32 to vector<512x1xf32>
    %29 = arith.mulf %27, %27 : vector<64x512xf32>
    %cst_17 = arith.constant dense<0.000000e+00> : vector<64x1xf32>
    %30 = tpu.matmul %29, %28, %cst_17 {dimension_numbers = #tpu.dot_dimension_numbers<[1], [0], [0], [1], [0, 0, 1, 1], [], []>} : vector<64x512xf32>, vector<512x1xf32>, vector<64x1xf32> -> vector<64x1xf32>
    %31 = math.sqrt %30 : vector<64x1xf32>
    %cst_18 = arith.constant 9.99999996E-13 : f32
    %32 = vector.broadcast %cst_18 : f32 to vector<64x1xf32>
    %33 = arith.maximumf %31, %32 : vector<64x1xf32>
    %cst_19 = arith.constant 1.000000e+00 : f32
    %34 = vector.broadcast %cst_19 : f32 to vector<64x1xf32>
    %35 = arith.divf %34, %33 : vector<64x1xf32>
    %36 = arith.mulf %31, %35 : vector<64x1xf32>
    %37 = arith.mulf %36, %36 : vector<64x1xf32>
    %38 = vector.shape_cast %37 : vector<64x1xf32> to vector<1x64x1xf32>
    %cst_20 = arith.constant dense<0.000000e+00> : vector<1xf32>
    %39 = vector.multi_reduction <add>, %38, %cst_20 [1, 2] : vector<1x64x1xf32> to vector<1xf32>
    %40 = vector.shape_cast %39 : vector<1xf32> to vector<1x1x1xf32>
    %41 = vector.extract %40[0, 0, 0] : f32 from vector<1x1x1xf32>
    %42 = math.sqrt %41 : f32
    %cst_21 = arith.constant 9.99999996E-13 : f32
    %43 = arith.maximumf %42, %cst_21 : f32
    %cst_22 = arith.constant 1.000000e+00 : f32
    %44 = arith.divf %cst_22, %43 : f32
    %45 = vector.broadcast %44 : f32 to vector<64x1xf32>
    %46 = arith.mulf %35, %45 : vector<64x1xf32>
    %47 = vector.broadcast %46 : vector<64x1xf32> to vector<64x512xf32>
    %48 = arith.mulf %27, %47 : vector<64x512xf32>
    %c0_23 = arith.constant 0 : index
    %c0_24 = arith.constant 0 : index
    %c0_25 = arith.constant 0 : index
    %49 = vector.load %arg6[%c0_23, %c0_24, %c0_25] : memref<18x64x512xf32, #tpu.memory_space<vmem>>, vector<18x64x512xf32>
    %50 = vector.shape_cast %48 : vector<64x512xf32> to vector<1x64x512xf32>
    %51 = vector.broadcast %50 : vector<1x64x512xf32> to vector<18x64x512xf32>
    %52 = arith.mulf %49, %51 : vector<18x64x512xf32>
    %cst_26 = arith.constant dense<0.000000e+00> : vector<18x512xf32>
    %53 = vector.multi_reduction <add>, %52, %cst_26 [1] : vector<18x64x512xf32> to vector<18x512xf32>
    %cst_27 = arith.constant dense<0.000000e+00> : vector<18xf32>
    %54 = vector.multi_reduction <add>, %53, %cst_27 [1] : vector<18x512xf32> to vector<18xf32>
    %55 = vector.shape_cast %54 : vector<18xf32> to vector<18x1xf32>
    %c0_28 = arith.constant 0 : index
    %c0_29 = arith.constant 0 : index
    %56 = vector.load %arg7[%c0_28, %c0_29] : memref<18x1xf32, #tpu.memory_space<vmem>>, vector<18x1xf32>
    %57 = arith.addf %55, %56 : vector<18x1xf32>
    %cst_30 = arith.constant 0.000000e+00 : f32
    %58 = vector.broadcast %cst_30 : f32 to vector<18x1xf32>
    %59 = arith.subf %58, %57 : vector<18x1xf32>
    %60 = math.exp %59 : vector<18x1xf32>
    %cst_31 = arith.constant 1.000000e+00 : f32
    %61 = vector.broadcast %cst_31 : f32 to vector<18x1xf32>
    %62 = arith.addf %61, %60 : vector<18x1xf32>
    %cst_32 = arith.constant 1.000000e+00 : f32
    %63 = vector.broadcast %cst_32 : f32 to vector<18x1xf32>
    %64 = arith.divf %63, %62 : vector<18x1xf32>
    %c0_33 = arith.constant 0 : index
    %c0_34 = arith.constant 0 : index
    %c0_35 = arith.constant 0 : index
    %65 = vector.load %arg8[%c0_33, %c0_34, %c0_35] : memref<1x18x1xf32, #tpu.memory_space<vmem>>, vector<1x18x1xf32>
    %66 = vector.shape_cast %65 : vector<1x18x1xf32> to vector<18x1xf32>
    %67 = vector.shape_cast %64 : vector<18x1xf32> to vector<1x18x1xf32>
    tpu.vector_store %arg8[%c0_33, %c0_34, %c0_35], %67 {strides = array<i32>} : memref<1x18x1xf32, #tpu.memory_space<vmem>>, vector<1x18x1xf32>,
    return
  }
  func.func @transform_0(%arg0: i32) -> (i32, i32, i32) {
    %c0_i32 = arith.constant 0 : i32
    %c0_i32_0 = arith.constant 0 : i32
    %c0_i32_1 = arith.constant 0 : i32
    return %arg0, %c0_i32, %c0_i32_0 : i32, i32, i32
  }
  func.func @transform_1(%arg0: i32) -> (i32, i32) {
    %c0_i32 = arith.constant 0 : i32
    %c0_i32_0 = arith.constant 0 : i32
    %c0_i32_1 = arith.constant 0 : i32
    return %c0_i32, %c0_i32_0 : i32, i32
  }
  func.func @transform_2(%arg0: i32) -> (i32, i32) {
    %c0_i32 = arith.constant 0 : i32
    %c0_i32_0 = arith.constant 0 : i32
    %c0_i32_1 = arith.constant 0 : i32
    return %c0_i32, %c0_i32_0 : i32, i32
  }
  func.func @transform_3(%arg0: i32) -> (i32, i32) {
    %c0_i32 = arith.constant 0 : i32
    %c0_i32_0 = arith.constant 0 : i32
    %c0_i32_1 = arith.constant 0 : i32
    return %c0_i32, %c0_i32_0 : i32, i32
  }
  func.func @transform_4(%arg0: i32) -> (i32, i32) {
    %c0_i32 = arith.constant 0 : i32
    %c0_i32_0 = arith.constant 0 : i32
    %c0_i32_1 = arith.constant 0 : i32
    return %c0_i32, %c0_i32_0 : i32, i32
  }
  func.func @transform_5(%arg0: i32) -> (i32, i32, i32) {
    %c0_i32 = arith.constant 0 : i32
    %c0_i32_0 = arith.constant 0 : i32
    %c0_i32_1 = arith.constant 0 : i32
    %c0_i32_2 = arith.constant 0 : i32
    return %c0_i32, %c0_i32_0, %c0_i32_1 : i32, i32, i32
  }
  func.func @transform_6(%arg0: i32) -> (i32, i32) {
    %c0_i32 = arith.constant 0 : i32
    %c0_i32_0 = arith.constant 0 : i32
    %c0_i32_1 = arith.constant 0 : i32
    return %c0_i32, %c0_i32_0 : i32, i32
  }
  func.func @transform_7(%arg0: i32) -> (i32, i32, i32) {
    %c0_i32 = arith.constant 0 : i32
    %c0_i32_0 = arith.constant 0 : i32
    %c0_i32_1 = arith.constant 0 : i32
    return %arg0, %c0_i32, %c0_i32_0 : i32, i32, i32
  }
}

</mosaic_0001>

<llo_original>
// kernel: tpu_custom_call.1
$region0: #{tpu_custom_call.1}
  #allocation0 [shape = 'u32[]', space=smem, size = 0x4, offset = 0x4, fixed_abs, tag = 'smem constant byte address 0x4 - core index']
  #allocation1 [shape = 'u32[72,128]{1,0:T(1,128)}', space=vmem, size = 0x9000, scoped, tag = 'internal scratch']
  %s0 = inlined_call_operand.hbm [shape: f32[2,8,512], index: 0, kind: input, shape index: {}]
  %s1 = inlined_call_operand.vmem [shape: f32[512,64], index: 1, kind: input, shape index: {}]
  %s2 = inlined_call_operand.hbm [shape: f32[64,512], index: 2, kind: input, shape index: {}]
  %s3 = inlined_call_operand.hbm [shape: f32[1,64], index: 3, kind: input, shape index: {}]
  %s4 = inlined_call_operand.hbm [shape: f32[1,64], index: 4, kind: input, shape index: {}]
  %s5 = inlined_call_operand.hbm [shape: f32[18,64,512], index: 5, kind: input, shape index: {}]
  %s6 = inlined_call_operand.vmem [shape: f32[18,1], index: 6, kind: input, shape index: {}]
  %s7 = inlined_call_operand.vmem [shape: f32[2,18,1], index: 7, kind: output, shape index: {}]
  %s8 = sld [smem:[#allocation0]]
  $region81: #{tpu_custom_call.1} parent=0
    _
  %s10 = ssub.s32 1, %s8
  %s11 = scalar_select 0, %s10, %s8
  $region1: #{tpu_custom_call.1} parent=0
    #allocation2 [shape = 'u8[32768]{0}', space=vmem, size = 0x8000, scoped, tag = 'input window, operand 0']
    #allocation3 [shape = 's32[2]{0}', space=sflag, size = 0x8, scoped, tag = 'scoped memory for tpu_custom_call.1']
    #allocation4 [shape = 'u8[131072]{0}', space=vmem, size = 0x20000, scoped, tag = 'input window, operand 2, single buffered']
    #allocation5 [shape = 's32[1]{0}', space=sflag, size = 0x4, scoped, tag = 'scoped memory for tpu_custom_call.1']
    #allocation6 [shape = 'u8[512]{0}', space=vmem, size = 0x400, scoped, tag = 'input window, operand 3, single buffered']
    #allocation7 [shape = 'u8[512]{0}', space=vmem, size = 0x400, scoped, tag = 'input window, operand 4, single buffered']
    #allocation8 [shape = 's32[1]{0}', space=sflag, size = 0x4, scoped, tag = 'scoped memory for tpu_custom_call.1']
    #allocation9 [shape = 'u8[2359296]{0}', space=vmem, size = 0x240000, scoped, tag = 'input window, operand 5, single buffered']
    %12 = vsyncpa [#allocation3], 0
    %s13 = scalar_lea.sflag [#allocation3], 1
    %14 = vsyncpa %s13, 0
    %15 = vsyncpa [#allocation5], 0
    %16 = vsyncpa [#allocation8], 0
    loop: start=0, step=1, limit=4
    $region2: #{tpu_custom_call.1} parent=1 // loop_pre_header
      _
    $region3: #{tpu_custom_call.1} parent=1 // loop_header
      %s18 = sphi 0, %s22
      %p19 = scmp.ge.s32.totalorder %s18, 4
      %s28 = sphi 0, %s30
      %s31 = sphi 0, %s28
      %s32 = sphi 0, %s31
      %s48 = sphi 0, %s32
      %s52 = sphi 0, %s52
      %s54 = sphi 0, %s52
      %s55 = sphi 0, %s54
      %s69 = sphi 0, %s55
      %s73 = sphi 0, %s73
      %s75 = sphi 0, %s73
      %s76 = sphi 0, %s75
      %s90 = sphi 0, %s76
      %s94 = sphi 0, %s94
      %s96 = sphi 0, %s94
      %s97 = sphi 0, %s96
      %s111 = sphi 0, %s97
      %s115 = sphi 0, %s115
      %s117 = sphi 0, %s115
      %s118 = sphi 0, %s117
      %s132 = sphi 0, %s118
      %s136 = sphi 0, %s136
      %s138 = sphi 0, %s136
      %s139 = sphi 0, %s138
      %s153 = sphi 0, %s139
      %s157 = sphi 0, %s157
      %s159 = sphi 0, %s157
      %s160 = sphi 0, %s159
      %s174 = sphi 0, %s160
      %s180 = sphi 0, %s182
      %s183 = sphi 0, %s180
      %s184 = sphi 0, %s183
      %s200 = sphi 0, %s184
    $region4: #{tpu_custom_call.1} parent=1 // loop_header_branch
      %21 = sbr.rel (%p19) target = $region8
    $region5: #{tpu_custom_call.1} parent=1 // loop_body
      %s23 = ssub.s32 %s18, 1
      %s24 = ssub.s32 %s18, 2
      %s25 = sadd.s32 %s18, 1
      %s26 = ssub.s32 %s18, %s25
      %p27 = scmp.eq.s32.totalorder %s26, 0
      %s29 = sadd.s32 %s28, 1
      %s30 = scalar_select %p27, %s28, %s29
      %p33 = pneg %p27
      %p34 = scmp.eq.s32.totalorder %s18, 1
      %p35 = por %p33, %p34
      %p36 = scmp.ne.s32.totalorder %s28, %s31
      %p37 = scmp.eq.s32.totalorder %s18, 0
      %p38 = por %p36, %p37
      %p39 = scmp.ne.s32.totalorder %s28, %s31
      %p40 = scmp.eq.s32.totalorder %s23, 1
      %p41 = por %p39, %p40
      %p42 = scmp.ne.s32.totalorder %s31, %s32
      %p43 = scmp.eq.s32.totalorder %s23, 0
      %p44 = por %p42, %p43
      %p45 = scmp.ne.s32.totalorder %s31, %s32
      %p46 = scmp.eq.s32.totalorder %s24, 1
      %p47 = por %p45, %p46
      %p49 = scmp.ne.s32.totalorder %s32, %s48
      %p50 = scmp.eq.s32.totalorder %s24, 0
      %p51 = por %p49, %p50
      %s53 = sadd.s32 %s52, 1
      %p56 = scmp.eq.s32.totalorder %s18, 1
      %p57 = scmp.ne.s32.totalorder %s52, %s54
      %p58 = scmp.eq.s32.totalorder %s18, 0
      %p59 = por %p57, %p58
      %p60 = scmp.ne.s32.totalorder %s52, %s54
      %p61 = scmp.eq.s32.totalorder %s23, 1
      %p62 = por %p60, %p61
      %p63 = scmp.ne.s32.totalorder %s54, %s55
      %p64 = scmp.eq.s32.totalorder %s23, 0
      %p65 = por %p63, %p64
      %p66 = scmp.ne.s32.totalorder %s54, %s55
      %p67 = scmp.eq.s32.totalorder %s24, 1
      %p68 = por %p66, %p67
      %p70 = scmp.ne.s32.totalorder %s55, %s69
      %p71 = scmp.eq.s32.totalorder %s24, 0
      %p72 = por %p70, %p71
      %s74 = sadd.s32 %s73, 1
      %p77 = scmp.eq.s32.totalorder %s18, 1
      %p78 = scmp.ne.s32.totalorder %s73, %s75
      %p79 = scmp.eq.s32.totalorder %s18, 0
      %p80 = por %p78, %p79
      %p81 = scmp.ne.s32.totalorder %s73, %s75
      %p82 = scmp.eq.s32.totalorder %s23, 1
      %p83 = por %p81, %p82
      %p84 = scmp.ne.s32.totalorder %s75, %s76
      %p85 = scmp.eq.s32.totalorder %s23, 0
      %p86 = por %p84, %p85
      %p87 = scmp.ne.s32.totalorder %s75, %s76
      %p88 = scmp.eq.s32.totalorder %s24, 1
      %p89 = por %p87, %p88
      %p91 = scmp.ne.s32.totalorder %s76, %s90
      %p92 = scmp.eq.s32.totalorder %s24, 0
      %p93 = por %p91, %p92
      %s95 = sadd.s32 %s94, 1
      %p98 = scmp.eq.s32.totalorder %s18, 1
      %p99 = scmp.ne.s32.totalorder %s94, %s96
      %p100 = scmp.eq.s32.totalorder %s18, 0
      %p101 = por %p99, %p100
      %p102 = scmp.ne.s32.totalorder %s94, %s96
      %p103 = scmp.eq.s32.totalorder %s23, 1
      %p104 = por %p102, %p103
      %p105 = scmp.ne.s32.totalorder %s96, %s97
      %p106 = scmp.eq.s32.totalorder %s23, 0
      %p107 = por %p105, %p106
      %p108 = scmp.ne.s32.totalorder %s96, %s97
      %p109 = scmp.eq.s32.totalorder %s24, 1
      %p110 = por %p108, %p109
      %p112 = scmp.ne.s32.totalorder %s97, %s111
      %p113 = scmp.eq.s32.totalorder %s24, 0
      %p114 = por %p112, %p113
      %s116 = sadd.s32 %s115, 1
      %p119 = scmp.eq.s32.totalorder %s18, 1
      %p120 = scmp.ne.s32.totalorder %s115, %s117
      %p121 = scmp.eq.s32.totalorder %s18, 0
      %p122 = por %p120, %p121
      %p123 = scmp.ne.s32.totalorder %s115, %s117
      %p124 = scmp.eq.s32.totalorder %s23, 1
      %p125 = por %p123, %p124
      %p126 = scmp.ne.s32.totalorder %s117, %s118
      %p127 = scmp.eq.s32.totalorder %s23, 0
      %p128 = por %p126, %p127
      %p129 = scmp.ne.s32.totalorder %s117, %s118
      %p130 = scmp.eq.s32.totalorder %s24, 1
      %p131 = por %p129, %p130
      %p133 = scmp.ne.s32.totalorder %s118, %s132
      %p134 = scmp.eq.s32.totalorder %s24, 0
      %p135 = por %p133, %p134
      %s137 = sadd.s32 %s136, 1
      %p140 = scmp.eq.s32.totalorder %s18, 1
      %p141 = scmp.ne.s32.totalorder %s136, %s138
      %p142 = scmp.eq.s32.totalorder %s18, 0
      %p143 = por %p141, %p142
      %p144 = scmp.ne.s32.totalorder %s136, %s138
      %p145 = scmp.eq.s32.totalorder %s23, 1
      %p146 = por %p144, %p145
      %p147 = scmp.ne.s32.totalorder %s138, %s139
      %p148 = scmp.eq.s32.totalorder %s23, 0
      %p149 = por %p147, %p148
      %p150 = scmp.ne.s32.totalorder %s138, %s139
      %p151 = scmp.eq.s32.totalorder %s24, 1
      %p152 = por %p150, %p151
      %p154 = scmp.ne.s32.totalorder %s139, %s153
      %p155 = scmp.eq.s32.totalorder %s24, 0
      %p156 = por %p154, %p155
      %s158 = sadd.s32 %s157, 1
      %p161 = scmp.eq.s32.totalorder %s18, 1
      %p162 = scmp.ne.s32.totalorder %s157, %s159
      %p163 = scmp.eq.s32.totalorder %s18, 0
      %p164 = por %p162, %p163
      %p165 = scmp.ne.s32.totalorder %s157, %s159
      %p166 = scmp.eq.s32.totalorder %s23, 1
      %p167 = por %p165, %p166
      %p168 = scmp.ne.s32.totalorder %s159, %s160
      %p169 = scmp.eq.s32.totalorder %s23, 0
      %p170 = por %p168, %p169
      %p171 = scmp.ne.s32.totalorder %s159, %s160
      %p172 = scmp.eq.s32.totalorder %s24, 1
      %p173 = por %p171, %p172
      %p175 = scmp.ne.s32.totalorder %s160, %s174
      %p176 = scmp.eq.s32.totalorder %s24, 0
      %p177 = por %p175, %p176
      %s178 = ssub.s32 %s18, %s25
      %p179 = scmp.eq.s32.totalorder %s178, 0
      %s181 = sadd.s32 %s180, 1
      %s182 = scalar_select %p179, %s180, %s181
      %p185 = pneg %p179
      %p186 = scmp.eq.s32.totalorder %s18, 1
      %p187 = por %p185, %p186
      %p188 = scmp.ne.s32.totalorder %s180, %s183
      %p189 = scmp.eq.s32.totalorder %s18, 0
      %p190 = por %p188, %p189
      %p191 = scmp.ne.s32.totalorder %s180, %s183
      %p192 = scmp.eq.s32.totalorder %s23, 1
      %p193 = por %p191, %p192
      %p194 = scmp.ne.s32.totalorder %s183, %s184
      %p195 = scmp.eq.s32.totalorder %s23, 0
      %p196 = por %p194, %p195
      %p197 = scmp.ne.s32.totalorder %s183, %s184
      %p198 = scmp.eq.s32.totalorder %s24, 1
      %p199 = por %p197, %p198
      %p201 = scmp.ne.s32.totalorder %s184, %s200
      %p202 = scmp.eq.s32.totalorder %s24, 0
      %p203 = por %p201, %p202
      %p204 = scmp.le.s32.totalorder 1, %s18
      %p205 = scmp.lt.s32.totalorder %s18, 3
      %p206 = pnand %p204, %p205
      %p207 = pneg %p206
      // Predicated region
      $region9: #{tpu_custom_call.1} parent=5 // pred_check
        _
      $region10: #{tpu_custom_call.1} parent=5 // pred_check_branch
        %209 = sbr.rel (%p206) target = $region12
      $region11: #{tpu_custom_call.1} parent=5 // pred_region
        %s210 = ssub.s32 %s18, 1
        // Predicated region
        $region13: #{tpu_custom_call.1} parent=11 // pred_check
          %p211 = pneg %p65
        $region14: #{tpu_custom_call.1} parent=11 // pred_check_branch
          %213 = sbr.rel (%p211) target = $region16
        $region15: #{tpu_custom_call.1} parent=11 // pred_region
          _
        $region16: #{tpu_custom_call.1} parent=11 // pred_fallthru
          _
        // Predicated region
        $region17: #{tpu_custom_call.1} parent=11 // pred_check
          %p214 = pneg %p86
        $region18: #{tpu_custom_call.1} parent=11 // pred_check_branch
          %216 = sbr.rel (%p214) target = $region20
        $region19: #{tpu_custom_call.1} parent=11 // pred_region
          %218 = vsyncadd [#allocation5], 0
          %s219 = sshll.u32 %s2, 4
          %s220 = int_to_ptr.hbm [resolvable:$true] %s219
          %s221 = sshll.u32 [#allocation4], 4
          %s222 = int_to_ptr.vmem [resolvable:$true] %s221
          %227 = dma.hbm_to_vmem [thread:$0]  %s220, 4096, %s222, [#allocation5], 512, 512, 32
        $region20: #{tpu_custom_call.1} parent=11 // pred_fallthru
          _
        // Predicated region
        $region21: #{tpu_custom_call.1} parent=11 // pred_check
          %p228 = pneg %p107
        $region22: #{tpu_custom_call.1} parent=11 // pred_check_branch
          %230 = sbr.rel (%p228) target = $region24
        $region23: #{tpu_custom_call.1} parent=11 // pred_region
          %232 = vsyncadd [#allocation5], 0
          %s234 = sshll.u32 %s3, 4
          %s235 = int_to_ptr.hbm [resolvable:$true] %s234
          %s236 = sshll.u32 [#allocation6], 4
          %s237 = int_to_ptr.vmem [resolvable:$true] %s236
          %239 = dma.hbm_to_vmem [thread:$0]  %s235, 16, %s237, [#allocation5]
        $region24: #{tpu_custom_call.1} parent=11 // pred_fallthru
          _
        // Predicated region
        $region25: #{tpu_custom_call.1} parent=11 // pred_check
          %p240 = pneg %p128
        $region26: #{tpu_custom_call.1} parent=11 // pred_check_branch
          %242 = sbr.rel (%p240) target = $region28
        $region27: #{tpu_custom_call.1} parent=11 // pred_region
          %244 = vsyncadd [#allocation8], 0
          %s246 = sshll.u32 %s4, 4
          %s247 = int_to_ptr.hbm [resolvable:$true] %s246
          %s248 = sshll.u32 [#allocation7], 4
          %s249 = int_to_ptr.vmem [resolvable:$true] %s248
          %251 = dma.hbm_to_vmem [thread:$0]  %s247, 16, %s249, [#allocation8]
        $region28: #{tpu_custom_call.1} parent=11 // pred_fallthru
          _
        // Predicated region
        $region29: #{tpu_custom_call.1} parent=11 // pred_check
          %p252 = pneg %p149
        $region30: #{tpu_custom_call.1} parent=11 // pred_check_branch
          %254 = sbr.rel (%p252) target = $region32
        $region31: #{tpu_custom_call.1} parent=11 // pred_region
          %256 = vsyncadd [#allocation8], 0
          %s257 = sshll.u32 %s5, 4
          %s258 = int_to_ptr.hbm [resolvable:$true] %s257
          %s259 = sshll.u32 [#allocation9], 4
          %s260 = int_to_ptr.vmem [resolvable:$true] %s259
          %265 = dma.hbm_to_vmem [thread:$0]  %s258, 73728, %s260, [#allocation8], 512, 512, 32
        $region32: #{tpu_custom_call.1} parent=11 // pred_fallthru
          _
        // Predicated region
        $region33: #{tpu_custom_call.1} parent=11 // pred_check
          %p266 = pneg %p170
        $region34: #{tpu_custom_call.1} parent=11 // pred_check_branch
          %268 = sbr.rel (%p266) target = $region36
        $region35: #{tpu_custom_call.1} parent=11 // pred_region
          _
        $region36: #{tpu_custom_call.1} parent=11 // pred_fallthru
          _
      $region12: #{tpu_custom_call.1} parent=5 // pred_fallthru
        _
      %p269 = scmp.lt.s32.totalorder %s18, 2
      // Predicated region
      $region37: #{tpu_custom_call.1} parent=5 // pred_check
        %p270 = pneg %p269
      $region38: #{tpu_custom_call.1} parent=5 // pred_check_branch
        %272 = sbr.rel (%p270) target = $region40
      $region39: #{tpu_custom_call.1} parent=5 // pred_region
        // Predicated region
        $region41: #{tpu_custom_call.1} parent=39 // pred_check
          %p273 = pneg %p38
        $region42: #{tpu_custom_call.1} parent=39 // pred_check_branch
          %275 = sbr.rel (%p273) target = $region44
        $region43: #{tpu_custom_call.1} parent=39 // pred_region
          %s276 = sand.u32 %s28, 1
          %s277 = scalar_lea.sflag [#allocation3], %s276
          %s278 = sand.u32 %s28, 1
          %s279 = smul.addr %s278, 32
          %s280 = scalar_lea.vmem [#allocation2], %s279
          %282 = vsyncadd %s277, 0
          %s283 = smul.addr %s18, 4
          %s284 = smul.addr %s283, 8
          %s285 = scalar_lea.hbm %s0, %s284
          %s287 = sshll.u32 %s285, 4
          %s288 = int_to_ptr.hbm [resolvable:$true] %s287
          %s289 = sshll.u32 %s280, 4
          %s290 = int_to_ptr.vmem [resolvable:$true] %s289
          %292 = dma.hbm_to_vmem [thread:$0]  %s288, 512, %s290, %s277
        $region44: #{tpu_custom_call.1} parent=39 // pred_fallthru
          _
      $region40: #{tpu_custom_call.1} parent=5 // pred_fallthru
        _
      %p293 = scmp.le.s32.totalorder 1, %s18
      %p294 = scmp.lt.s32.totalorder %s18, 3
      %p295 = pnand %p293, %p294
      %p296 = pneg %p295
      // Predicated region
      $region45: #{tpu_custom_call.1} parent=5 // pred_check
        _
      $region46: #{tpu_custom_call.1} parent=5 // pred_check_branch
        %298 = sbr.rel (%p295) target = $region48
      $region47: #{tpu_custom_call.1} parent=5 // pred_region
        %s299 = ssub.s32 %s18, 1
        %s300 = sand.u32 %s31, 1
        %s301 = scalar_lea.sflag [#allocation3], %s300
        %s302 = sand.u32 %s31, 1
        %s303 = smul.addr %s302, 32
        %s304 = scalar_lea.vmem [#allocation2], %s303
        // Predicated region
        $region49: #{tpu_custom_call.1} parent=47 // pred_check
          %p305 = pneg %p44
        $region50: #{tpu_custom_call.1} parent=47 // pred_check_branch
          %307 = sbr.rel (%p305) target = $region52
        $region51: #{tpu_custom_call.1} parent=47 // pred_region
          %309 = dma.done %s301, 512
        $region52: #{tpu_custom_call.1} parent=47 // pred_fallthru
          _
        // Predicated region
        $region53: #{tpu_custom_call.1} parent=47 // pred_check
          %p310 = pneg %p86
        $region54: #{tpu_custom_call.1} parent=47 // pred_check_branch
          %312 = sbr.rel (%p310) target = $region56
        $region55: #{tpu_custom_call.1} parent=47 // pred_region
          %314 = dma.done [#allocation5], 4096
        $region56: #{tpu_custom_call.1} parent=47 // pred_fallthru
          _
        // Predicated region
        $region57: #{tpu_custom_call.1} parent=47 // pred_check
          %p315 = pneg %p107
        $region58: #{tpu_custom_call.1} parent=47 // pred_check_branch
          %317 = sbr.rel (%p315) target = $region60
        $region59: #{tpu_custom_call.1} parent=47 // pred_region
          %319 = dma.done [#allocation5], 16
        $region60: #{tpu_custom_call.1} parent=47 // pred_fallthru
          _
        // Predicated region
        $region61: #{tpu_custom_call.1} parent=47 // pred_check
          %p320 = pneg %p128
        $region62: #{tpu_custom_call.1} parent=47 // pred_check_branch
          %322 = sbr.rel (%p320) target = $region64
        $region63: #{tpu_custom_call.1} parent=47 // pred_region
          %324 = dma.done [#allocation8], 16
        $region64: #{tpu_custom_call.1} parent=47 // pred_fallthru
          _
        // Predicated region
        $region65: #{tpu_custom_call.1} parent=47 // pred_check
          %p325 = pneg %p149
        $region66: #{tpu_custom_call.1} parent=47 // pred_check_branch
          %327 = sbr.rel (%p325) target = $region68
        $region67: #{tpu_custom_call.1} parent=47 // pred_region
          %329 = dma.done [#allocation8], 73728
        $region68: #{tpu_custom_call.1} parent=47 // pred_fallthru
          _
        %s330 = sand.u32 %s31, 1
        %s331 = scalar_lea.sflag [#allocation3], %s330
        %s332 = sand.u32 %s31, 1
        %s333 = smul.addr %s332, 32
        %s334 = scalar_lea.vmem [#allocation2], %s333
        %p335 = pneg %p44
        %p336 = pneg %p41
        %p337 = pneg %p65
        %p338 = pneg %p62
        %p339 = pneg %p86
        %p340 = pneg %p83
        %p341 = pneg %p107
        %p342 = pneg %p104
        %p343 = pneg %p128
        %p344 = pneg %p125
        %p345 = pneg %p149
        %p346 = pneg %p146
        %p347 = pneg %p170
        %p348 = pneg %p167
        %p349 = pneg %p196
        %p350 = pneg %p193
        %p351 = scmp.lt.s32.totalorder %s23, 1
        %s352 = scalar_select %p351, %s23, 1
        %s353 = smul.addr %s352, 3
        %s354 = smul.addr %s353, 8
        %s355 = scalar_lea.vmem %s7, %s354
        %p356 = scmp.lt.s32.totalorder %s23, 1
        %s357 = scalar_select %p356, %s23, 1
        %s358 = smul.addr %s357, 3
        %s359 = smul.addr %s358, 8
        %s360 = scalar_lea.vmem %s7, %s359
        %v361 = vld [vmem:[%s304] sm:$0xff]
        %v362 = vld [vmem:[%s304 + $0x8] sm:$0xff]
        %v363 = vld [vmem:[%s304 + $0x10] sm:$0xff]
        %v364 = vld [vmem:[%s304 + $0x18] sm:$0xff]
        %v365 = vld [vmem:[%s1] sm:$0xff]
        %v366 = vld [vmem:[%s1 + $0x8] sm:$0xff]
        %v367 = vld [vmem:[%s1 + $0x10] sm:$0xff]
        %v368 = vld [vmem:[%s1 + $0x18] sm:$0xff]
        %v369 = vld [vmem:[%s1 + $0x20] sm:$0xff]
        %v370 = vld [vmem:[%s1 + $0x28] sm:$0xff]
        %v371 = vld [vmem:[%s1 + $0x30] sm:$0xff]
        %v372 = vld [vmem:[%s1 + $0x38] sm:$0xff]
        %v373 = vld [vmem:[%s1 + $0x40] sm:$0xff]
        %v374 = vld [vmem:[%s1 + $0x48] sm:$0xff]
        %v375 = vld [vmem:[%s1 + $0x50] sm:$0xff]
        %v376 = vld [vmem:[%s1 + $0x58] sm:$0xff]
        %v377 = vld [vmem:[%s1 + $0x60] sm:$0xff]
        %v378 = vld [vmem:[%s1 + $0x68] sm:$0xff]
        %v379 = vld [vmem:[%s1 + $0x70] sm:$0xff]
        %v380 = vld [vmem:[%s1 + $0x78] sm:$0xff]
        %v381 = vld [vmem:[%s1 + $0x80] sm:$0xff]
        %v382 = vld [vmem:[%s1 + $0x88] sm:$0xff]
        %v383 = vld [vmem:[%s1 + $0x90] sm:$0xff]
        %v384 = vld [vmem:[%s1 + $0x98] sm:$0xff]
        %v385 = vld [vmem:[%s1 + $0xa0] sm:$0xff]
        %v386 = vld [vmem:[%s1 + $0xa8] sm:$0xff]
        %v387 = vld [vmem:[%s1 + $0xb0] sm:$0xff]
        %v388 = vld [vmem:[%s1 + $0xb8] sm:$0xff]
        %v389 = vld [vmem:[%s1 + $0xc0] sm:$0xff]
        %v390 = vld [vmem:[%s1 + $0xc8] sm:$0xff]
        %v391 = vld [vmem:[%s1 + $0xd0] sm:$0xff]
        %v392 = vld [vmem:[%s1 + $0xd8] sm:$0xff]
        %v393 = vld [vmem:[%s1 + $0xe0] sm:$0xff]
        %v394 = vld [vmem:[%s1 + $0xe8] sm:$0xff]
        %v395 = vld [vmem:[%s1 + $0xf0] sm:$0xff]
        %v396 = vld [vmem:[%s1 + $0xf8] sm:$0xff]
        %v397 = vld [vmem:[%s1 + $0x100] sm:$0xff]
        %v398 = vld [vmem:[%s1 + $0x108] sm:$0xff]
        %v399 = vld [vmem:[%s1 + $0x110] sm:$0xff]
        %v400 = vld [vmem:[%s1 + $0x118] sm:$0xff]
        %v401 = vld [vmem:[%s1 + $0x120] sm:$0xff]
        %v402 = vld [vmem:[%s1 + $0x128] sm:$0xff]
        %v403 = vld [vmem:[%s1 + $0x130] sm:$0xff]
        %v404 = vld [vmem:[%s1 + $0x138] sm:$0xff]
        %v405 = vld [vmem:[%s1 + $0x140] sm:$0xff]
        %v406 = vld [vmem:[%s1 + $0x148] sm:$0xff]
        %v407 = vld [vmem:[%s1 + $0x150] sm:$0xff]
        %v408 = vld [vmem:[%s1 + $0x158] sm:$0xff]
        %v409 = vld [vmem:[%s1 + $0x160] sm:$0xff]
        %v410 = vld [vmem:[%s1 + $0x168] sm:$0xff]
        %v411 = vld [vmem:[%s1 + $0x170] sm:$0xff]
        %v412 = vld [vmem:[%s1 + $0x178] sm:$0xff]
        %v413 = vld [vmem:[%s1 + $0x180] sm:$0xff]
        %v414 = vld [vmem:[%s1 + $0x188] sm:$0xff]
        %v415 = vld [vmem:[%s1 + $0x190] sm:$0xff]
        %v416 = vld [vmem:[%s1 + $0x198] sm:$0xff]
        %v417 = vld [vmem:[%s1 + $0x1a0] sm:$0xff]
        %v418 = vld [vmem:[%s1 + $0x1a8] sm:$0xff]
        %v419 = vld [vmem:[%s1 + $0x1b0] sm:$0xff]
        %v420 = vld [vmem:[%s1 + $0x1b8] sm:$0xff]
        %v421 = vld [vmem:[%s1 + $0x1c0] sm:$0xff]
        %v422 = vld [vmem:[%s1 + $0x1c8] sm:$0xff]
        %v423 = vld [vmem:[%s1 + $0x1d0] sm:$0xff]
        %v424 = vld [vmem:[%s1 + $0x1d8] sm:$0xff]
        %v425 = vld [vmem:[%s1 + $0x1e0] sm:$0xff]
        %v426 = vld [vmem:[%s1 + $0x1e8] sm:$0xff]
        %v427 = vld [vmem:[%s1 + $0x1f0] sm:$0xff]
        %v428 = vld [vmem:[%s1 + $0x1f8] sm:$0xff]
        %429 = vmatpush.msra.mxu0 %v380
        %430 = vmatpush.msra.mxu0 %v379
        %431 = vmatpush.msra.mxu0 %v378
        %432 = vmatpush.msra.mxu0 %v377
        %433 = vmatpush.msra.mxu0 %v376
        %434 = vmatpush.msra.mxu0 %v375
        %435 = vmatpush.msra.mxu0 %v374
        %436 = vmatpush.msra.mxu0 %v373
        %437 = vmatpush.msra.mxu0 %v372
        %438 = vmatpush.msra.mxu0 %v371
        %439 = vmatpush.msra.mxu0 %v370
        %440 = vmatpush.msra.mxu0 %v369
        %441 = vmatpush.msra.mxu0 %v368
        %442 = vmatpush.msra.mxu0 %v367
        %443 = vmatpush.msra.mxu0 %v366
        %444 = vmatpush.msra.mxu0 %v365
        %445 = vmatmul.f32.gmra.mxu0 %v361
        %v446 = vpop.f32.mrf.mxu0
        %v447 = vadd.f32 0.0, %v446
        %448 = vdwg.mxu0
        %449 = vmatpush.msra.mxu0 %v396
        %450 = vmatpush.msra.mxu0 %v395
        %451 = vmatpush.msra.mxu0 %v394
        %452 = vmatpush.msra.mxu0 %v393
        %453 = vmatpush.msra.mxu0 %v392
        %454 = vmatpush.msra.mxu0 %v391
        %455 = vmatpush.msra.mxu0 %v390
        %456 = vmatpush.msra.mxu0 %v389
        %457 = vmatpush.msra.mxu0 %v388
        %458 = vmatpush.msra.mxu0 %v387
        %459 = vmatpush.msra.mxu0 %v386
        %460 = vmatpush.msra.mxu0 %v385
        %461 = vmatpush.msra.mxu0 %v384
        %462 = vmatpush.msra.mxu0 %v383
        %463 = vmatpush.msra.mxu0 %v382
        %464 = vmatpush.msra.mxu0 %v381
        %465 = vmatmul.f32.gmra.mxu0 %v362
        %v466 = vpop.f32.mrf.mxu0
        %v467 = vadd.f32 %v447, %v466
        %468 = vdwg.mxu0
        %469 = vmatpush.msra.mxu0 %v412
        %470 = vmatpush.msra.mxu0 %v411
        %471 = vmatpush.msra.mxu0 %v410
        %472 = vmatpush.msra.mxu0 %v409
        %473 = vmatpush.msra.mxu0 %v408
        %474 = vmatpush.msra.mxu0 %v407
        %475 = vmatpush.msra.mxu0 %v406
        %476 = vmatpush.msra.mxu0 %v405
        %477 = vmatpush.msra.mxu0 %v404
        %478 = vmatpush.msra.mxu0 %v403
        %479 = vmatpush.msra.mxu0 %v402
        %480 = vmatpush.msra.mxu0 %v401
        %481 = vmatpush.msra.mxu0 %v400
        %482 = vmatpush.msra.mxu0 %v399
        %483 = vmatpush.msra.mxu0 %v398
        %484 = vmatpush.msra.mxu0 %v397
        %485 = vmatmul.f32.gmra.mxu0 %v363
        %v486 = vpop.f32.mrf.mxu0
        %v487 = vadd.f32 %v467, %v486
        %488 = vdwg.mxu0
        %489 = vmatpush.msra.mxu0 %v428
        %490 = vmatpush.msra.mxu0 %v427
        %491 = vmatpush.msra.mxu0 %v426
        %492 = vmatpush.msra.mxu0 %v425
        %493 = vmatpush.msra.mxu0 %v424
        %494 = vmatpush.msra.mxu0 %v423
        %495 = vmatpush.msra.mxu0 %v422
        %496 = vmatpush.msra.mxu0 %v421
        %497 = vmatpush.msra.mxu0 %v420
        %498 = vmatpush.msra.mxu0 %v419
        %499 = vmatpush.msra.mxu0 %v418
        %500 = vmatpush.msra.mxu0 %v417
        %501 = vmatpush.msra.mxu0 %v416
        %502 = vmatpush.msra.mxu0 %v415
        %503 = vmatpush.msra.mxu0 %v414
        %504 = vmatpush.msra.mxu0 %v413
        %505 = vmatmul.f32.gmra.mxu0 %v364
        %v506 = vpop.f32.mrf.mxu0
        %v507 = vadd.f32 %v487, %v506
        %508 = vdwg.mxu0
        %v509 = vld [vmem:[#allocation6] sm:$0x1]
        %v511 = vperm.slane %v509, 0
        %v513 = vmul.f32 %v507, %v511
        %v514 = vld [vmem:[#allocation7] sm:$0x1]
        %v516 = vperm.slane %v514, 0
        %v518 = vadd.f32 %v513, %v516
        %vm519 = vcmask 523264
        %v520 = vsel %vm519, %v518, -inf
        %521 = vmax.xlane.f32.xlu0 %v520
        %v522 = vpop.xlane.xlu0 %521
        %v523 = vsub.f32 %v518, %v522
        %v524 = vmul.f32 %v523, 1.442695
        %v525 = vpow.pop %v524
        %v526 = vsel %vm519, %v525, 0.0
        %527 = vadd.xlane.f32.xlu0 %v526
        %v528 = vpop.xlane.xlu0 %527
        %v529 = vrcp.pop %v528
        %v530 = vmul.f32 %v528, %v529
        %v531 = vsub.f32 1.0, %v530
        %v532 = vmul.f32 %v529, %v531
        %v533 = vadd.f32 %v529, %v532
        %vm534 = vweird.f32 %v528
        %vm535 = vweird.f32 %v529
        %vm536 = vmor %vm534, %vm535
        %v537 = vsel %vm536, %v529, %v533
        %v538 = vand.u32 2147483647, %v528
        %vm539 = vcmp.eq.f32.partialorder %v538, 8.507059e+37
        %v540 = vand.u32 %v528, 2147483648
        %v541 = vor.u32 1.1754944e-38, %v540
        %v542 = vsel %vm539, %v541, %v537
        %v543 = vmul.f32 1.0, %v542
        %v544 = vmul.f32 %v525, %v543
        %545 = vxpose.xlu0.b32.start [1/16] %v544, 128
        %546 = vxpose.xlu0.b32.cont [2/16] 0.0, 128
        %547 = vxpose.xlu0.b32.cont [3/16] 0.0, 128
        %548 = vxpose.xlu0.b32.cont [4/16] 0.0, 128
        %549 = vxpose.xlu0.b32.cont [5/16] 0.0, 128
        %550 = vxpose.xlu0.b32.cont [6/16] 0.0, 128
        %551 = vxpose.xlu0.b32.cont [7/16] 0.0, 128
        %552 = vxpose.xlu0.b32.cont [8/16] 0.0, 128
        %553 = vxpose.xlu0.b32.cont [9/16] 0.0, 128
        %554 = vxpose.xlu0.b32.cont [10/16] 0.0, 128
        %555 = vxpose.xlu0.b32.cont [11/16] 0.0, 128
        %556 = vxpose.xlu0.b32.cont [12/16] 0.0, 128
        %557 = vxpose.xlu0.b32.cont [13/16] 0.0, 128
        %558 = vxpose.xlu0.b32.cont [14/16] 0.0, 128
        %559 = vxpose.xlu0.b32.cont [15/16] 0.0, 128
        %560 = vxpose.xlu0.b32.end [16/16] 0.0, 128
        %v561 = vpop.trf.xlu0
        %v562 = vpop.trf.xlu0
        %v563 = vpop.trf.xlu0
        %v564 = vpop.trf.xlu0
        %v565 = vpop.trf.xlu0
        %v566 = vpop.trf.xlu0
        %v567 = vpop.trf.xlu0
        %v568 = vpop.trf.xlu0
        %v569 = vpop.trf.xlu0
        %v570 = vpop.trf.xlu0
        %v571 = vpop.trf.xlu0
        %v572 = vpop.trf.xlu0
        %v573 = vpop.trf.xlu0
        %v574 = vpop.trf.xlu0
        %v575 = vpop.trf.xlu0
        %v576 = vpop.trf.xlu0
        %vm577 = vcmask 64512
        %v579 = vsel %vm577, %v561, 0
        %v582 = vsel %vm577, %v562, 0
        %v585 = vsel %vm577, %v563, 0
        %v588 = vsel %vm577, %v564, 0
        %v591 = vsel %vm577, %v565, 0
        %v594 = vsel %vm577, %v566, 0
        %v597 = vsel %vm577, %v567, 0
        %v600 = vsel %vm577, %v568, 0
        %602 = vmatpush.msra.mxu0 0.0
        %603 = vmatpush.msra.mxu0 0.0
        %604 = vmatpush.msra.mxu0 0.0
        %605 = vmatpush.msra.mxu0 0.0
        %606 = vmatpush.msra.mxu0 0.0
        %607 = vmatpush.msra.mxu0 0.0
        %608 = vmatpush.msra.mxu0 0.0
        %609 = vmatpush.msra.mxu0 0.0
        %610 = vmatpush.msra.mxu0 0.0
        %611 = vmatpush.msra.mxu0 0.0
        %612 = vmatpush.msra.mxu0 0.0
        %613 = vmatpush.msra.mxu0 0.0
        %614 = vmatpush.msra.mxu0 0.0
        %615 = vmatpush.msra.mxu0 0.0
        %616 = vmatpush.msra.mxu0 0.0
        %617 = vmatpush.msra.mxu0 %v361
        %618 = vmatmul.f32.gmra.mxu0 %v579
        %v619 = vpop.f32.mrf.mxu0
        %v620 = vadd.f32 0.0, %v619
        %621 = vmatmul.f32.gmra.mxu0 %v582
        %v622 = vpop.f32.mrf.mxu0
        %v623 = vadd.f32 0.0, %v622
        %624 = vmatmul.f32.gmra.mxu0 %v585
        %v625 = vpop.f32.mrf.mxu0
        %v626 = vadd.f32 0.0, %v625
        %627 = vmatmul.f32.gmra.mxu0 %v588
        %v628 = vpop.f32.mrf.mxu0
        %v629 = vadd.f32 0.0, %v628
        %630 = vmatmul.f32.gmra.mxu0 %v591
        %v631 = vpop.f32.mrf.mxu0
        %v632 = vadd.f32 0.0, %v631
        %633 = vmatmul.f32.gmra.mxu0 %v594
        %v634 = vpop.f32.mrf.mxu0
        %v635 = vadd.f32 0.0, %v634
        %636 = vmatmul.f32.gmra.mxu0 %v597
        %v637 = vpop.f32.mrf.mxu0
        %v638 = vadd.f32 0.0, %v637
        %639 = vmatmul.f32.gmra.mxu0 %v600
        %v640 = vpop.f32.mrf.mxu0
        %v641 = vadd.f32 0.0, %v640
        %642 = vdwg.mxu0
        %643 = vmatpush.msra.mxu0 0.0
        %644 = vmatpush.msra.mxu0 0.0
        %645 = vmatpush.msra.mxu0 0.0
        %646 = vmatpush.msra.mxu0 0.0
        %647 = vmatpush.msra.mxu0 0.0
        %648 = vmatpush.msra.mxu0 0.0
        %649 = vmatpush.msra.mxu0 0.0
        %650 = vmatpush.msra.mxu0 0.0
        %651 = vmatpush.msra.mxu0 0.0
        %652 = vmatpush.msra.mxu0 0.0
        %653 = vmatpush.msra.mxu0 0.0
        %654 = vmatpush.msra.mxu0 0.0
        %655 = vmatpush.msra.mxu0 0.0
        %656 = vmatpush.msra.mxu0 0.0
        %657 = vmatpush.msra.mxu0 0.0
        %658 = vmatpush.msra.mxu0 %v362
        %659 = vmatmul.f32.gmra.mxu0 %v579
        %v660 = vpop.f32.mrf.mxu0
        %v661 = vadd.f32 0.0, %v660
        %662 = vmatmul.f32.gmra.mxu0 %v582
        %v663 = vpop.f32.mrf.mxu0
        %v664 = vadd.f32 0.0, %v663
        %665 = vmatmul.f32.gmra.mxu0 %v585
        %v666 = vpop.f32.mrf.mxu0
        %v667 = vadd.f32 0.0, %v666
        %668 = vmatmul.f32.gmra.mxu0 %v588
        %v669 = vpop.f32.mrf.mxu0
        %v670 = vadd.f32 0.0, %v669
        %671 = vmatmul.f32.gmra.mxu0 %v591
        %v672 = vpop.f32.mrf.mxu0
        %v673 = vadd.f32 0.0, %v672
        %674 = vmatmul.f32.gmra.mxu0 %v594
        %v675 = vpop.f32.mrf.mxu0
        %v676 = vadd.f32 0.0, %v675
        %677 = vmatmul.f32.gmra.mxu0 %v597
        %v678 = vpop.f32.mrf.mxu0
        %v679 = vadd.f32 0.0, %v678
        %680 = vmatmul.f32.gmra.mxu0 %v600
        %v681 = vpop.f32.mrf.mxu0
        %v682 = vadd.f32 0.0, %v681
        %683 = vdwg.mxu0
        %684 = vmatpush.msra.mxu0 0.0
        %685 = vmatpush.msra.mxu0 0.0
        %686 = vmatpush.msra.mxu0 0.0
        %687 = vmatpush.msra.mxu0 0.0
        %688 = vmatpush.msra.mxu0 0.0
        %689 = vmatpush.msra.mxu0 0.0
        %690 = vmatpush.msra.mxu0 0.0
        %691 = vmatpush.msra.mxu0 0.0
        %692 = vmatpush.msra.mxu0 0.0
        %693 = vmatpush.msra.mxu0 0.0
        %694 = vmatpush.msra.mxu0 0.0
        %695 = vmatpush.msra.mxu0 0.0
        %696 = vmatpush.msra.mxu0 0.0
        %697 = vmatpush.msra.mxu0 0.0
        %698 = vmatpush.msra.mxu0 0.0
        %699 = vmatpush.msra.mxu0 %v363
        %700 = vmatmul.f32.gmra.mxu0 %v579
        %v701 = vpop.f32.mrf.mxu0
        %v702 = vadd.f32 0.0, %v701
        %703 = vmatmul.f32.gmra.mxu0 %v582
        %v704 = vpop.f32.mrf.mxu0
        %v705 = vadd.f32 0.0, %v704
        %706 = vmatmul.f32.gmra.mxu0 %v585
        %v707 = vpop.f32.mrf.mxu0
        %v708 = vadd.f32 0.0, %v707
        %709 = vmatmul.f32.gmra.mxu0 %v588
        %v710 = vpop.f32.mrf.mxu0
        %v711 = vadd.f32 0.0, %v710
        %712 = vmatmul.f32.gmra.mxu0 %v591
        %v713 = vpop.f32.mrf.mxu0
        %v714 = vadd.f32 0.0, %v713
        %715 = vmatmul.f32.gmra.mxu0 %v594
        %v716 = vpop.f32.mrf.mxu0
        %v717 = vadd.f32 0.0, %v716
        %718 = vmatmul.f32.gmra.mxu0 %v597
        %v719 = vpop.f32.mrf.mxu0
        %v720 = vadd.f32 0.0, %v719
        %721 = vmatmul.f32.gmra.mxu0 %v600
        %v722 = vpop.f32.mrf.mxu0
        %v723 = vadd.f32 0.0, %v722
        %724 = vdwg.mxu0
        %725 = vmatpush.msra.mxu0 0.0
        %726 = vmatpush.msra.mxu0 0.0
        %727 = vmatpush.msra.mxu0 0.0
        %728 = vmatpush.msra.mxu0 0.0
        %729 = vmatpush.msra.mxu0 0.0
        %730 = vmatpush.msra.mxu0 0.0
        %731 = vmatpush.msra.mxu0 0.0
        %732 = vmatpush.msra.mxu0 0.0
        %733 = vmatpush.msra.mxu0 0.0
        %734 = vmatpush.msra.mxu0 0.0
        %735 = vmatpush.msra.mxu0 0.0
        %736 = vmatpush.msra.mxu0 0.0
        %737 = vmatpush.msra.mxu0 0.0
        %738 = vmatpush.msra.mxu0 0.0
        %739 = vmatpush.msra.mxu0 0.0
        %740 = vmatpush.msra.mxu0 %v364
        %741 = vmatmul.f32.gmra.mxu0 %v579
        %v742 = vpop.f32.mrf.mxu0
        %v743 = vadd.f32 0.0, %v742
        %744 = vmatmul.f32.gmra.mxu0 %v582
        %v745 = vpop.f32.mrf.mxu0
        %v746 = vadd.f32 0.0, %v745
        %747 = vmatmul.f32.gmra.mxu0 %v585
        %v748 = vpop.f32.mrf.mxu0
        %v749 = vadd.f32 0.0, %v748
        %750 = vmatmul.f32.gmra.mxu0 %v588
        %v751 = vpop.f32.mrf.mxu0
        %v752 = vadd.f32 0.0, %v751
        %753 = vmatmul.f32.gmra.mxu0 %v591
        %v754 = vpop.f32.mrf.mxu0
        %v755 = vadd.f32 0.0, %v754
        %756 = vmatmul.f32.gmra.mxu0 %v594
        %v757 = vpop.f32.mrf.mxu0
        %v758 = vadd.f32 0.0, %v757
        %759 = vmatmul.f32.gmra.mxu0 %v597
        %v760 = vpop.f32.mrf.mxu0
        %v761 = vadd.f32 0.0, %v760
        %762 = vmatmul.f32.gmra.mxu0 %v600
        %v763 = vpop.f32.mrf.mxu0
        %v764 = vadd.f32 0.0, %v763
        %765 = vdwg.mxu0
        %766 = vmatpush.msra.mxu0 0.0
        %767 = vmatpush.msra.mxu0 0.0
        %768 = vmatpush.msra.mxu0 0.0
        %769 = vmatpush.msra.mxu0 0.0
        %770 = vmatpush.msra.mxu0 0.0
        %771 = vmatpush.msra.mxu0 0.0
        %772 = vmatpush.msra.mxu0 0.0
        %773 = vmatpush.msra.mxu0 0.0
        %774 = vmatpush.msra.mxu0 0.0
        %775 = vmatpush.msra.mxu0 0.0
        %776 = vmatpush.msra.mxu0 0.0
        %777 = vmatpush.msra.mxu0 0.0
        %778 = vmatpush.msra.mxu0 0.0
        %779 = vmatpush.msra.mxu0 0.0
        %780 = vmatpush.msra.mxu0 0.0
        %781 = vmatpush.msra.mxu0 1.0
        %782 = vmatmul.f32.gmra.mxu0 %v579
        %v783 = vpop.f32.mrf.mxu0
        %v784 = vadd.f32 0.0, %v783
        %785 = vmatmul.f32.gmra.mxu0 %v582
        %v786 = vpop.f32.mrf.mxu0
        %v787 = vadd.f32 0.0, %v786
        %788 = vmatmul.f32.gmra.mxu0 %v585
        %v789 = vpop.f32.mrf.mxu0
        %v790 = vadd.f32 0.0, %v789
        %791 = vmatmul.f32.gmra.mxu0 %v588
        %v792 = vpop.f32.mrf.mxu0
        %v793 = vadd.f32 0.0, %v792
        %794 = vmatmul.f32.gmra.mxu0 %v591
        %v795 = vpop.f32.mrf.mxu0
        %v796 = vadd.f32 0.0, %v795
        %797 = vmatmul.f32.gmra.mxu0 %v594
        %v798 = vpop.f32.mrf.mxu0
        %v799 = vadd.f32 0.0, %v798
        %800 = vmatmul.f32.gmra.mxu0 %v597
        %v801 = vpop.f32.mrf.mxu0
        %v802 = vadd.f32 0.0, %v801
        %803 = vmatmul.f32.gmra.mxu0 %v600
        %v804 = vpop.f32.mrf.mxu0
        %v805 = vadd.f32 0.0, %v804
        %806 = vdwg.mxu0
        %v807 = vld [vmem:[#allocation4] sm:$0xff]
        %v808 = vld [vmem:[#allocation4 + $0x8] sm:$0xff]
        %v809 = vld [vmem:[#allocation4 + $0x10] sm:$0xff]
        %v810 = vld [vmem:[#allocation4 + $0x18] sm:$0xff]
        %v811 = vld [vmem:[#allocation4 + $0x20] sm:$0xff]
        %v812 = vld [vmem:[#allocation4 + $0x28] sm:$0xff]
        %v813 = vld [vmem:[#allocation4 + $0x30] sm:$0xff]
        %v814 = vld [vmem:[#allocation4 + $0x38] sm:$0xff]
        %v815 = vld [vmem:[#allocation4 + $0x40] sm:$0xff]
        %v816 = vld [vmem:[#allocation4 + $0x48] sm:$0xff]
        %v817 = vld [vmem:[#allocation4 + $0x50] sm:$0xff]
        %v818 = vld [vmem:[#allocation4 + $0x58] sm:$0xff]
        %v819 = vld [vmem:[#allocation4 + $0x60] sm:$0xff]
        %v820 = vld [vmem:[#allocation4 + $0x68] sm:$0xff]
        %v821 = vld [vmem:[#allocation4 + $0x70] sm:$0xff]
        %v822 = vld [vmem:[#allocation4 + $0x78] sm:$0xff]
        %v823 = vld [vmem:[#allocation4 + $0x80] sm:$0xff]
        %v824 = vld [vmem:[#allocation4 + $0x88] sm:$0xff]
        %v825 = vld [vmem:[#allocation4 + $0x90] sm:$0xff]
        %v826 = vld [vmem:[#allocation4 + $0x98] sm:$0xff]
        %v827 = vld [vmem:[#allocation4 + $0xa0] sm:$0xff]
        %v828 = vld [vmem:[#allocation4 + $0xa8] sm:$0xff]
        %v829 = vld [vmem:[#allocation4 + $0xb0] sm:$0xff]
        %v830 = vld [vmem:[#allocation4 + $0xb8] sm:$0xff]
        %v831 = vld [vmem:[#allocation4 + $0xc0] sm:$0xff]
        %v832 = vld [vmem:[#allocation4 + $0xc8] sm:$0xff]
        %v833 = vld [vmem:[#allocation4 + $0xd0] sm:$0xff]
        %v834 = vld [vmem:[#allocation4 + $0xd8] sm:$0xff]
        %v835 = vld [vmem:[#allocation4 + $0xe0] sm:$0xff]
        %v836 = vld [vmem:[#allocation4 + $0xe8] sm:$0xff]
        %v837 = vld [vmem:[#allocation4 + $0xf0] sm:$0xff]
        %v838 = vld [vmem:[#allocation4 + $0xf8] sm:$0xff]
        %840 = vset.pattern.permute.xlu0 0
        %841 = vperm.xlu0 %840, %v784
        %v842 = vpop.permute.xlu0 %841
        %845 = vset.pattern.permute.xlu0 0
        %846 = vperm.xlu0 %845, %v787
        %v847 = vpop.permute.xlu0 %846
        %850 = vset.pattern.permute.xlu0 0
        %851 = vperm.xlu0 %850, %v790
        %v852 = vpop.permute.xlu0 %851
        %855 = vset.pattern.permute.xlu0 0
        %856 = vperm.xlu0 %855, %v793
        %v857 = vpop.permute.xlu0 %856
        %860 = vset.pattern.permute.xlu0 0
        %861 = vperm.xlu0 %860, %v796
        %v862 = vpop.permute.xlu0 %861
        %865 = vset.pattern.permute.xlu0 0
        %866 = vperm.xlu0 %865, %v799
        %v867 = vpop.permute.xlu0 %866
        %870 = vset.pattern.permute.xlu0 0
        %871 = vperm.xlu0 %870, %v802
        %v872 = vpop.permute.xlu0 %871
        %875 = vset.pattern.permute.xlu0 0
        %876 = vperm.xlu0 %875, %v805
        %v877 = vpop.permute.xlu0 %876
        %v879 = vmul.f32 %v842, %v807
        %v880 = vmul.f32 %v842, %v808
        %v881 = vmul.f32 %v842, %v809
        %v882 = vmul.f32 %v842, %v810
        %v883 = vmul.f32 %v847, %v811
        %v884 = vmul.f32 %v847, %v812
        %v885 = vmul.f32 %v847, %v813
        %v886 = vmul.f32 %v847, %v814
        %v887 = vmul.f32 %v852, %v815
        %v888 = vmul.f32 %v852, %v816
        %v889 = vmul.f32 %v852, %v817
        %v890 = vmul.f32 %v852, %v818
        %v891 = vmul.f32 %v857, %v819
        %v892 = vmul.f32 %v857, %v820
        %v893 = vmul.f32 %v857, %v821
        %v894 = vmul.f32 %v857, %v822
        %v895 = vmul.f32 %v862, %v823
        %v896 = vmul.f32 %v862, %v824
        %v897 = vmul.f32 %v862, %v825
        %v898 = vmul.f32 %v862, %v826
        %v899 = vmul.f32 %v867, %v827
        %v900 = vmul.f32 %v867, %v828
        %v901 = vmul.f32 %v867, %v829
        %v902 = vmul.f32 %v867, %v830
        %v903 = vmul.f32 %v872, %v831
        %v904 = vmul.f32 %v872, %v832
        %v905 = vmul.f32 %v872, %v833
        %v906 = vmul.f32 %v872, %v834
        %v907 = vmul.f32 %v877, %v835
        %v908 = vmul.f32 %v877, %v836
        %v909 = vmul.f32 %v877, %v837
        %v910 = vmul.f32 %v877, %v838
        %v911 = vsub.f32 %v620, %v879
        %v912 = vsub.f32 %v661, %v880
        %v913 = vsub.f32 %v702, %v881
        %v914 = vsub.f32 %v743, %v882
        %v915 = vsub.f32 %v623, %v883
        %v916 = vsub.f32 %v664, %v884
        %v917 = vsub.f32 %v705, %v885
        %v918 = vsub.f32 %v746, %v886
        %v919 = vsub.f32 %v626, %v887
        %v920 = vsub.f32 %v667, %v888
        %v921 = vsub.f32 %v708, %v889
        %v922 = vsub.f32 %v749, %v890
        %v923 = vsub.f32 %v629, %v891
        %v924 = vsub.f32 %v670, %v892
        %v925 = vsub.f32 %v711, %v893
        %v926 = vsub.f32 %v752, %v894
        %v927 = vsub.f32 %v632, %v895
        %v928 = vsub.f32 %v673, %v896
        %v929 = vsub.f32 %v714, %v897
        %v930 = vsub.f32 %v755, %v898
        %v931 = vsub.f32 %v635, %v899
        %v932 = vsub.f32 %v676, %v900
        %v933 = vsub.f32 %v717, %v901
        %v934 = vsub.f32 %v758, %v902
        %v935 = vsub.f32 %v638, %v903
        %v936 = vsub.f32 %v679, %v904
        %v937 = vsub.f32 %v720, %v905
        %v938 = vsub.f32 %v761, %v906
        %v939 = vsub.f32 %v641, %v907
        %v940 = vsub.f32 %v682, %v908
        %v941 = vsub.f32 %v723, %v909
        %v942 = vsub.f32 %v764, %v910
        %v943 = vmul.f32 %v911, %v911
        %v944 = vmul.f32 %v912, %v912
        %v945 = vmul.f32 %v913, %v913
        %v946 = vmul.f32 %v914, %v914
        %v947 = vmul.f32 %v915, %v915
        %v948 = vmul.f32 %v916, %v916
        %v949 = vmul.f32 %v917, %v917
        %v950 = vmul.f32 %v918, %v918
        %v951 = vmul.f32 %v919, %v919
        %v952 = vmul.f32 %v920, %v920
        %v953 = vmul.f32 %v921, %v921
        %v954 = vmul.f32 %v922, %v922
        %v955 = vmul.f32 %v923, %v923
        %v956 = vmul.f32 %v924, %v924
        %v957 = vmul.f32 %v925, %v925
        %v958 = vmul.f32 %v926, %v926
        %v959 = vmul.f32 %v927, %v927
        %v960 = vmul.f32 %v928, %v928
        %v961 = vmul.f32 %v929, %v929
        %v962 = vmul.f32 %v930, %v930
        %v963 = vmul.f32 %v931, %v931
        %v964 = vmul.f32 %v932, %v932
        %v965 = vmul.f32 %v933, %v933
        %v966 = vmul.f32 %v934, %v934
        %v967 = vmul.f32 %v935, %v935
        %v968 = vmul.f32 %v936, %v936
        %v969 = vmul.f32 %v937, %v937
        %v970 = vmul.f32 %v938, %v938
        %v971 = vmul.f32 %v939, %v939
        %v972 = vmul.f32 %v940, %v940
        %v973 = vmul.f32 %v941, %v941
        %v974 = vmul.f32 %v942, %v942
        %975 = vmatpush.msra.mxu0 1.0
        %976 = vmatpush.msra.mxu0 1.0
        %977 = vmatpush.msra.mxu0 1.0
        %978 = vmatpush.msra.mxu0 1.0
        %979 = vmatpush.msra.mxu0 1.0
        %980 = vmatpush.msra.mxu0 1.0
        %981 = vmatpush.msra.mxu0 1.0
        %982 = vmatpush.msra.mxu0 1.0
        %983 = vmatpush.msra.mxu0 1.0
        %984 = vmatpush.msra.mxu0 1.0
        %985 = vmatpush.msra.mxu0 1.0
        %986 = vmatpush.msra.mxu0 1.0
        %987 = vmatpush.msra.mxu0 1.0
        %988 = vmatpush.msra.mxu0 1.0
        %989 = vmatpush.msra.mxu0 1.0
        %990 = vmatpush.msra.mxu0 1.0
        %991 = vmatmul.f32.gmra.mxu0 %v943
        %v992 = vpop.f32.mrf.mxu0
        %v993 = vadd.f32 0.0, %v992
        %994 = vmatmul.f32.gmra.mxu0 %v947
        %v995 = vpop.f32.mrf.mxu0
        %v996 = vadd.f32 0.0, %v995
        %997 = vmatmul.f32.gmra.mxu0 %v951
        %v998 = vpop.f32.mrf.mxu0
        %v999 = vadd.f32 0.0, %v998
        %1000 = vmatmul.f32.gmra.mxu0 %v955
        %v1001 = vpop.f32.mrf.mxu0
        %v1002 = vadd.f32 0.0, %v1001
        %1003 = vmatmul.f32.gmra.mxu0 %v959
        %v1004 = vpop.f32.mrf.mxu0
        %v1005 = vadd.f32 0.0, %v1004
        %1006 = vmatmul.f32.gmra.mxu0 %v963
        %v1007 = vpop.f32.mrf.mxu0
        %v1008 = vadd.f32 0.0, %v1007
        %1009 = vmatmul.f32.gmra.mxu0 %v967
        %v1010 = vpop.f32.mrf.mxu0
        %v1011 = vadd.f32 0.0, %v1010
        %1012 = vmatmul.f32.gmra.mxu0 %v971
        %v1013 = vpop.f32.mrf.mxu0
        %v1014 = vadd.f32 0.0, %v1013
        %1015 = vdwg.mxu0
        %1016 = vmatpush.msra.mxu0 1.0
        %1017 = vmatpush.msra.mxu0 1.0
        %1018 = vmatpush.msra.mxu0 1.0
        %1019 = vmatpush.msra.mxu0 1.0
        %1020 = vmatpush.msra.mxu0 1.0
        %1021 = vmatpush.msra.mxu0 1.0
        %1022 = vmatpush.msra.mxu0 1.0
        %1023 = vmatpush.msra.mxu0 1.0
        %1024 = vmatpush.msra.mxu0 1.0
        %1025 = vmatpush.msra.mxu0 1.0
        %1026 = vmatpush.msra.mxu0 1.0
        %1027 = vmatpush.msra.mxu0 1.0
        %1028 = vmatpush.msra.mxu0 1.0
        %1029 = vmatpush.msra.mxu0 1.0
        %1030 = vmatpush.msra.mxu0 1.0
        %1031 = vmatpush.msra.mxu0 1.0
        %1032 = vmatmul.f32.gmra.mxu0 %v944
        %v1033 = vpop.f32.mrf.mxu0
        %v1034 = vadd.f32 %v993, %v1033
        %1035 = vmatmul.f32.gmra.mxu0 %v948
        %v1036 = vpop.f32.mrf.mxu0
        %v1037 = vadd.f32 %v996, %v1036
        %1038 = vmatmul.f32.gmra.mxu0 %v952
        %v1039 = vpop.f32.mrf.mxu0
        %v1040 = vadd.f32 %v999, %v1039
        %1041 = vmatmul.f32.gmra.mxu0 %v956
        %v1042 = vpop.f32.mrf.mxu0
        %v1043 = vadd.f32 %v1002, %v1042
        %1044 = vmatmul.f32.gmra.mxu0 %v960
        %v1045 = vpop.f32.mrf.mxu0
        %v1046 = vadd.f32 %v1005, %v1045
        %1047 = vmatmul.f32.gmra.mxu0 %v964
        %v1048 = vpop.f32.mrf.mxu0
        %v1049 = vadd.f32 %v1008, %v1048
        %1050 = vmatmul.f32.gmra.mxu0 %v968
        %v1051 = vpop.f32.mrf.mxu0
        %v1052 = vadd.f32 %v1011, %v1051
        %1053 = vmatmul.f32.gmra.mxu0 %v972
        %v1054 = vpop.f32.mrf.mxu0
        %v1055 = vadd.f32 %v1014, %v1054
        %1056 = vdwg.mxu0
        %1057 = vmatpush.msra.mxu0 1.0
        %1058 = vmatpush.msra.mxu0 1.0
        %1059 = vmatpush.msra.mxu0 1.0
        %1060 = vmatpush.msra.mxu0 1.0
        %1061 = vmatpush.msra.mxu0 1.0
        %1062 = vmatpush.msra.mxu0 1.0
        %1063 = vmatpush.msra.mxu0 1.0
        %1064 = vmatpush.msra.mxu0 1.0
        %1065 = vmatpush.msra.mxu0 1.0
        %1066 = vmatpush.msra.mxu0 1.0
        %1067 = vmatpush.msra.mxu0 1.0
        %1068 = vmatpush.msra.mxu0 1.0
        %1069 = vmatpush.msra.mxu0 1.0
        %1070 = vmatpush.msra.mxu0 1.0
        %1071 = vmatpush.msra.mxu0 1.0
        %1072 = vmatpush.msra.mxu0 1.0
        %1073 = vmatmul.f32.gmra.mxu0 %v945
        %v1074 = vpop.f32.mrf.mxu0
        %v1075 = vadd.f32 %v1034, %v1074
        %1076 = vmatmul.f32.gmra.mxu0 %v949
        %v1077 = vpop.f32.mrf.mxu0
        %v1078 = vadd.f32 %v1037, %v1077
        %1079 = vmatmul.f32.gmra.mxu0 %v953
        %v1080 = vpop.f32.mrf.mxu0
        %v1081 = vadd.f32 %v1040, %v1080
        %1082 = vmatmul.f32.gmra.mxu0 %v957
        %v1083 = vpop.f32.mrf.mxu0
        %v1084 = vadd.f32 %v1043, %v1083
        %1085 = vmatmul.f32.gmra.mxu0 %v961
        %v1086 = vpop.f32.mrf.mxu0
        %v1087 = vadd.f32 %v1046, %v1086
        %1088 = vmatmul.f32.gmra.mxu0 %v965
        %v1089 = vpop.f32.mrf.mxu0
        %v1090 = vadd.f32 %v1049, %v1089
        %1091 = vmatmul.f32.gmra.mxu0 %v969
        %v1092 = vpop.f32.mrf.mxu0
        %v1093 = vadd.f32 %v1052, %v1092
        %1094 = vmatmul.f32.gmra.mxu0 %v973
        %v1095 = vpop.f32.mrf.mxu0
        %v1096 = vadd.f32 %v1055, %v1095
        %1097 = vdwg.mxu0
        %1098 = vmatpush.msra.mxu0 1.0
        %1099 = vmatpush.msra.mxu0 1.0
        %1100 = vmatpush.msra.mxu0 1.0
        %1101 = vmatpush.msra.mxu0 1.0
        %1102 = vmatpush.msra.mxu0 1.0
        %1103 = vmatpush.msra.mxu0 1.0
        %1104 = vmatpush.msra.mxu0 1.0
        %1105 = vmatpush.msra.mxu0 1.0
        %1106 = vmatpush.msra.mxu0 1.0
        %1107 = vmatpush.msra.mxu0 1.0
        %1108 = vmatpush.msra.mxu0 1.0
        %1109 = vmatpush.msra.mxu0 1.0
        %1110 = vmatpush.msra.mxu0 1.0
        %1111 = vmatpush.msra.mxu0 1.0
        %1112 = vmatpush.msra.mxu0 1.0
        %1113 = vmatpush.msra.mxu0 1.0
        %1114 = vmatmul.f32.gmra.mxu0 %v946
        %v1115 = vpop.f32.mrf.mxu0
        %v1116 = vadd.f32 %v1075, %v1115
        %1117 = vmatmul.f32.gmra.mxu0 %v950
        %v1118 = vpop.f32.mrf.mxu0
        %v1119 = vadd.f32 %v1078, %v1118
        %1120 = vmatmul.f32.gmra.mxu0 %v954
        %v1121 = vpop.f32.mrf.mxu0
        %v1122 = vadd.f32 %v1081, %v1121
        %1123 = vmatmul.f32.gmra.mxu0 %v958
        %v1124 = vpop.f32.mrf.mxu0
        %v1125 = vadd.f32 %v1084, %v1124
        %1126 = vmatmul.f32.gmra.mxu0 %v962
        %v1127 = vpop.f32.mrf.mxu0
        %v1128 = vadd.f32 %v1087, %v1127
        %1129 = vmatmul.f32.gmra.mxu0 %v966
        %v1130 = vpop.f32.mrf.mxu0
        %v1131 = vadd.f32 %v1090, %v1130
        %1132 = vmatmul.f32.gmra.mxu0 %v970
        %v1133 = vpop.f32.mrf.mxu0
        %v1134 = vadd.f32 %v1093, %v1133
        %1135 = vmatmul.f32.gmra.mxu0 %v974
        %v1136 = vpop.f32.mrf.mxu0
        %v1137 = vadd.f32 %v1096, %v1136
        %1138 = vdwg.mxu0
        %v1139 = vrsqrt.pop %v1116
        %v1140 = vmul.f32 %v1139, %v1116
        %v1141 = vmul.f32 %v1140, %v1139
        %v1142 = vmul.f32 0.5, %v1141
        %v1143 = vsub.f32 1.5, %v1142
        %v1144 = vmul.f32 %v1139, %v1143
        %v1145 = vmul.f32 %v1116, %v1144
        %vm1146 = vcmp.eq.f32.partialorder %v1116, inf
        %v1147 = vsel %vm1146, %v1116, %v1145
        %vm1148 = vcmp.eq.f32.partialorder %v1116, 0.0
        %v1149 = vand.u32 %v1116, 2147483648
        %v1150 = vsel %vm1148, %v1149, %v1147
        %v1151 = vrsqrt.pop %v1119
        %v1152 = vmul.f32 %v1151, %v1119
        %v1153 = vmul.f32 %v1152, %v1151
        %v1154 = vmul.f32 0.5, %v1153
        %v1155 = vsub.f32 1.5, %v1154
        %v1156 = vmul.f32 %v1151, %v1155
        %v1157 = vmul.f32 %v1119, %v1156
        %vm1158 = vcmp.eq.f32.partialorder %v1119, inf
        %v1159 = vsel %vm1158, %v1119, %v1157
        %vm1160 = vcmp.eq.f32.partialorder %v1119, 0.0
        %v1161 = vand.u32 %v1119, 2147483648
        %v1162 = vsel %vm1160, %v1161, %v1159
        %v1163 = vrsqrt.pop %v1122
        %v1164 = vmul.f32 %v1163, %v1122
        %v1165 = vmul.f32 %v1164, %v1163
        %v1166 = vmul.f32 0.5, %v1165
        %v1167 = vsub.f32 1.5, %v1166
        %v1168 = vmul.f32 %v1163, %v1167
        %v1169 = vmul.f32 %v1122, %v1168
        %vm1170 = vcmp.eq.f32.partialorder %v1122, inf
        %v1171 = vsel %vm1170, %v1122, %v1169
        %vm1172 = vcmp.eq.f32.partialorder %v1122, 0.0
        %v1173 = vand.u32 %v1122, 2147483648
        %v1174 = vsel %vm1172, %v1173, %v1171
        %v1175 = vrsqrt.pop %v1125
        %v1176 = vmul.f32 %v1175, %v1125
        %v1177 = vmul.f32 %v1176, %v1175
        %v1178 = vmul.f32 0.5, %v1177
        %v1179 = vsub.f32 1.5, %v1178
        %v1180 = vmul.f32 %v1175, %v1179
        %v1181 = vmul.f32 %v1125, %v1180
        %vm1182 = vcmp.eq.f32.partialorder %v1125, inf
        %v1183 = vsel %vm1182, %v1125, %v1181
        %vm1184 = vcmp.eq.f32.partialorder %v1125, 0.0
        %v1185 = vand.u32 %v1125, 2147483648
        %v1186 = vsel %vm1184, %v1185, %v1183
        %v1187 = vrsqrt.pop %v1128
        %v1188 = vmul.f32 %v1187, %v1128
        %v1189 = vmul.f32 %v1188, %v1187
        %v1190 = vmul.f32 0.5, %v1189
        %v1191 = vsub.f32 1.5, %v1190
        %v1192 = vmul.f32 %v1187, %v1191
        %v1193 = vmul.f32 %v1128, %v1192
        %vm1194 = vcmp.eq.f32.partialorder %v1128, inf
        %v1195 = vsel %vm1194, %v1128, %v1193
        %vm1196 = vcmp.eq.f32.partialorder %v1128, 0.0
        %v1197 = vand.u32 %v1128, 2147483648
        %v1198 = vsel %vm1196, %v1197, %v1195
        %v1199 = vrsqrt.pop %v1131
        %v1200 = vmul.f32 %v1199, %v1131
        %v1201 = vmul.f32 %v1200, %v1199
        %v1202 = vmul.f32 0.5, %v1201
        %v1203 = vsub.f32 1.5, %v1202
        %v1204 = vmul.f32 %v1199, %v1203
        %v1205 = vmul.f32 %v1131, %v1204
        %vm1206 = vcmp.eq.f32.partialorder %v1131, inf
        %v1207 = vsel %vm1206, %v1131, %v1205
        %vm1208 = vcmp.eq.f32.partialorder %v1131, 0.0
        %v1209 = vand.u32 %v1131, 2147483648
        %v1210 = vsel %vm1208, %v1209, %v1207
        %v1211 = vrsqrt.pop %v1134
        %v1212 = vmul.f32 %v1211, %v1134
        %v1213 = vmul.f32 %v1212, %v1211
        %v1214 = vmul.f32 0.5, %v1213
        %v1215 = vsub.f32 1.5, %v1214
        %v1216 = vmul.f32 %v1211, %v1215
        %v1217 = vmul.f32 %v1134, %v1216
        %vm1218 = vcmp.eq.f32.partialorder %v1134, inf
        %v1219 = vsel %vm1218, %v1134, %v1217
        %vm1220 = vcmp.eq.f32.partialorder %v1134, 0.0
        %v1221 = vand.u32 %v1134, 2147483648
        %v1222 = vsel %vm1220, %v1221, %v1219
        %v1223 = vrsqrt.pop %v1137
        %v1224 = vmul.f32 %v1223, %v1137
        %v1225 = vmul.f32 %v1224, %v1223
        %v1226 = vmul.f32 0.5, %v1225
        %v1227 = vsub.f32 1.5, %v1226
        %v1228 = vmul.f32 %v1223, %v1227
        %v1229 = vmul.f32 %v1137, %v1228
        %vm1230 = vcmp.eq.f32.partialorder %v1137, inf
        %v1231 = vsel %vm1230, %v1137, %v1229
        %vm1232 = vcmp.eq.f32.partialorder %v1137, 0.0
        %v1233 = vand.u32 %v1137, 2147483648
        %v1234 = vsel %vm1232, %v1233, %v1231
        %v1235 = vmax.f32 %v1150, 1e-12
        %v1236 = vmax.f32 %v1162, 1e-12
        %v1237 = vmax.f32 %v1174, 1e-12
        %v1238 = vmax.f32 %v1186, 1e-12
        %v1239 = vmax.f32 %v1198, 1e-12
        %v1240 = vmax.f32 %v1210, 1e-12
        %v1241 = vmax.f32 %v1222, 1e-12
        %v1242 = vmax.f32 %v1234, 1e-12
        %v1243 = vrcp.pop %v1235
        %v1244 = vmul.f32 %v1235, %v1243
        %v1245 = vsub.f32 1.0, %v1244
        %v1246 = vmul.f32 %v1243, %v1245
        %v1247 = vadd.f32 %v1243, %v1246
        %vm1248 = vweird.f32 %v1235
        %vm1249 = vweird.f32 %v1243
        %vm1250 = vmor %vm1248, %vm1249
        %v1251 = vsel %vm1250, %v1243, %v1247
        %v1252 = vand.u32 2147483647, %v1235
        %vm1253 = vcmp.eq.f32.partialorder %v1252, 8.507059e+37
        %v1254 = vand.u32 %v1235, 2147483648
        %v1255 = vor.u32 1.1754944e-38, %v1254
        %v1256 = vsel %vm1253, %v1255, %v1251
        %v1257 = vmul.f32 1.0, %v1256
        %v1258 = vrcp.pop %v1236
        %v1259 = vmul.f32 %v1236, %v1258
        %v1260 = vsub.f32 1.0, %v1259
        %v1261 = vmul.f32 %v1258, %v1260
        %v1262 = vadd.f32 %v1258, %v1261
        %vm1263 = vweird.f32 %v1236
        %vm1264 = vweird.f32 %v1258
        %vm1265 = vmor %vm1263, %vm1264
        %v1266 = vsel %vm1265, %v1258, %v1262
        %v1267 = vand.u32 2147483647, %v1236
        %vm1268 = vcmp.eq.f32.partialorder %v1267, 8.507059e+37
        %v1269 = vand.u32 %v1236, 2147483648
        %v1270 = vor.u32 1.1754944e-38, %v1269
        %v1271 = vsel %vm1268, %v1270, %v1266
        %v1272 = vmul.f32 1.0, %v1271
        %v1273 = vrcp.pop %v1237
        %v1274 = vmul.f32 %v1237, %v1273
        %v1275 = vsub.f32 1.0, %v1274
        %v1276 = vmul.f32 %v1273, %v1275
        %v1277 = vadd.f32 %v1273, %v1276
        %vm1278 = vweird.f32 %v1237
        %vm1279 = vweird.f32 %v1273
        %vm1280 = vmor %vm1278, %vm1279
        %v1281 = vsel %vm1280, %v1273, %v1277
        %v1282 = vand.u32 2147483647, %v1237
        %vm1283 = vcmp.eq.f32.partialorder %v1282, 8.507059e+37
        %v1284 = vand.u32 %v1237, 2147483648
        %v1285 = vor.u32 1.1754944e-38, %v1284
        %v1286 = vsel %vm1283, %v1285, %v1281
        %v1287 = vmul.f32 1.0, %v1286
        %v1288 = vrcp.pop %v1238
        %v1289 = vmul.f32 %v1238, %v1288
        %v1290 = vsub.f32 1.0, %v1289
        %v1291 = vmul.f32 %v1288, %v1290
        %v1292 = vadd.f32 %v1288, %v1291
        %vm1293 = vweird.f32 %v1238
        %vm1294 = vweird.f32 %v1288
        %vm1295 = vmor %vm1293, %vm1294
        %v1296 = vsel %vm1295, %v1288, %v1292
        %v1297 = vand.u32 2147483647, %v1238
        %vm1298 = vcmp.eq.f32.partialorder %v1297, 8.507059e+37
        %v1299 = vand.u32 %v1238, 2147483648
        %v1300 = vor.u32 1.1754944e-38, %v1299
        %v1301 = vsel %vm1298, %v1300, %v1296
        %v1302 = vmul.f32 1.0, %v1301
        %v1303 = vrcp.pop %v1239
        %v1304 = vmul.f32 %v1239, %v1303
        %v1305 = vsub.f32 1.0, %v1304
        %v1306 = vmul.f32 %v1303, %v1305
        %v1307 = vadd.f32 %v1303, %v1306
        %vm1308 = vweird.f32 %v1239
        %vm1309 = vweird.f32 %v1303
        %vm1310 = vmor %vm1308, %vm1309
        %v1311 = vsel %vm1310, %v1303, %v1307
        %v1312 = vand.u32 2147483647, %v1239
        %vm1313 = vcmp.eq.f32.partialorder %v1312, 8.507059e+37
        %v1314 = vand.u32 %v1239, 2147483648
        %v1315 = vor.u32 1.1754944e-38, %v1314
        %v1316 = vsel %vm1313, %v1315, %v1311
        %v1317 = vmul.f32 1.0, %v1316
        %v1318 = vrcp.pop %v1240
        %v1319 = vmul.f32 %v1240, %v1318
        %v1320 = vsub.f32 1.0, %v1319
        %v1321 = vmul.f32 %v1318, %v1320
        %v1322 = vadd.f32 %v1318, %v1321
        %vm1323 = vweird.f32 %v1240
        %vm1324 = vweird.f32 %v1318
        %vm1325 = vmor %vm1323, %vm1324
        %v1326 = vsel %vm1325, %v1318, %v1322
        %v1327 = vand.u32 2147483647, %v1240
        %vm1328 = vcmp.eq.f32.partialorder %v1327, 8.507059e+37
        %v1329 = vand.u32 %v1240, 2147483648
        %v1330 = vor.u32 1.1754944e-38, %v1329
        %v1331 = vsel %vm1328, %v1330, %v1326
        %v1332 = vmul.f32 1.0, %v1331
        %v1333 = vrcp.pop %v1241
        %v1334 = vmul.f32 %v1241, %v1333
        %v1335 = vsub.f32 1.0, %v1334
        %v1336 = vmul.f32 %v1333, %v1335
        %v1337 = vadd.f32 %v1333, %v1336
        %vm1338 = vweird.f32 %v1241
        %vm1339 = vweird.f32 %v1333
        %vm1340 = vmor %vm1338, %vm1339
        %v1341 = vsel %vm1340, %v1333, %v1337
        %v1342 = vand.u32 2147483647, %v1241
        %vm1343 = vcmp.eq.f32.partialorder %v1342, 8.507059e+37
        %v1344 = vand.u32 %v1241, 2147483648
        %v1345 = vor.u32 1.1754944e-38, %v1344
        %v1346 = vsel %vm1343, %v1345, %v1341
        %v1347 = vmul.f32 1.0, %v1346
        %v1348 = vrcp.pop %v1242
        %v1349 = vmul.f32 %v1242, %v1348
        %v1350 = vsub.f32 1.0, %v1349
        %v1351 = vmul.f32 %v1348, %v1350
        %v1352 = vadd.f32 %v1348, %v1351
        %vm1353 = vweird.f32 %v1242
        %vm1354 = vweird.f32 %v1348
        %vm1355 = vmor %vm1353, %vm1354
        %v1356 = vsel %vm1355, %v1348, %v1352
        %v1357 = vand.u32 2147483647, %v1242
        %vm1358 = vcmp.eq.f32.partialorder %v1357, 8.507059e+37
        %v1359 = vand.u32 %v1242, 2147483648
        %v1360 = vor.u32 1.1754944e-38, %v1359
        %v1361 = vsel %vm1358, %v1360, %v1356
        %v1362 = vmul.f32 1.0, %v1361
        %v1363 = vmul.f32 %v1150, %v1257
        %v1364 = vmul.f32 %v1162, %v1272
        %v1365 = vmul.f32 %v1174, %v1287
        %v1366 = vmul.f32 %v1186, %v1302
        %v1367 = vmul.f32 %v1198, %v1317
        %v1368 = vmul.f32 %v1210, %v1332
        %v1369 = vmul.f32 %v1222, %v1347
        %v1370 = vmul.f32 %v1234, %v1362
        %v1371 = vmul.f32 %v1363, %v1363
        %v1372 = vmul.f32 %v1364, %v1364
        %v1373 = vmul.f32 %v1365, %v1365
        %v1374 = vmul.f32 %v1366, %v1366
        %v1375 = vmul.f32 %v1367, %v1367
        %v1376 = vmul.f32 %v1368, %v1368
        %v1377 = vmul.f32 %v1369, %v1369
        %v1378 = vmul.f32 %v1370, %v1370
        %vm1379 = vcmask 7168
        %v1380 = vsel %vm1379, %v1371, 0.0
        %v1381 = vsel %vm1379, %v1372, 0.0
        %v1382 = vadd.f32 %v1380, %v1381
        %v1383 = vsel %vm1379, %v1373, 0.0
        %v1384 = vadd.f32 %v1382, %v1383
        %v1385 = vsel %vm1379, %v1374, 0.0
        %v1386 = vadd.f32 %v1384, %v1385
        %v1387 = vsel %vm1379, %v1375, 0.0
        %v1388 = vadd.f32 %v1386, %v1387
        %v1389 = vsel %vm1379, %v1376, 0.0
        %v1390 = vadd.f32 %v1388, %v1389
        %v1391 = vsel %vm1379, %v1377, 0.0
        %v1392 = vadd.f32 %v1390, %v1391
        %v1393 = vsel %vm1379, %v1378, 0.0
        %v1394 = vadd.f32 %v1392, %v1393
        %1395 = vadd.xlane.f32.xlu0 %v1394
        %v1396 = vpop.xlane.xlu0 %1395
        %v1397 = vrot.slane %v1396, 4
        %v1398 = vadd.f32 %v1396, %v1397
        %v1399 = vrot.slane %v1398, 2
        %v1400 = vadd.f32 %v1398, %v1399
        %v1401 = vrot.slane %v1400, 1
        %v1402 = vadd.f32 %v1400, %v1401
        %s1403 = vtos %v1402
        %v1404 = vstv %s1403
        %v1405 = vrsqrt.pop %v1404
        %v1406 = vmul.f32 %v1405, %v1404
        %v1407 = vmul.f32 %v1406, %v1405
        %v1408 = vmul.f32 0.5, %v1407
        %v1409 = vsub.f32 1.5, %v1408
        %v1410 = vmul.f32 %v1405, %v1409
        %v1411 = vmul.f32 %v1404, %v1410
        %vm1412 = vcmp.eq.f32.partialorder %v1404, inf
        %v1413 = vsel %vm1412, %v1404, %v1411
        %vm1414 = vcmp.eq.f32.partialorder %v1404, 0.0
        %v1415 = vand.u32 %v1404, 2147483648
        %v1416 = vsel %vm1414, %v1415, %v1413
        %s1417 = vtos %v1416
        %s1418 = smax.f32 %s1417, 1e-12
        %v1419 = vstv %s1418
        %v1420 = vrcp.pop %v1419
        %v1421 = vmul.f32 %v1419, %v1420
        %v1422 = vsub.f32 1.0, %v1421
        %v1423 = vmul.f32 %v1420, %v1422
        %v1424 = vadd.f32 %v1420, %v1423
        %vm1425 = vweird.f32 %v1419
        %vm1426 = vweird.f32 %v1420
        %vm1427 = vmor %vm1425, %vm1426
        %v1428 = vsel %vm1427, %v1420, %v1424
        %v1429 = vand.u32 2147483647, %v1419
        %vm1430 = vcmp.eq.f32.partialorder %v1429, 8.507059e+37
        %v1431 = vand.u32 %v1419, 2147483648
        %v1432 = vor.u32 1.1754944e-38, %v1431
        %v1433 = vsel %vm1430, %v1432, %v1428
        %s1434 = vtos %v1433
        %v1435 = vstv %s1434
        %v1436 = vmul.f32 %v1257, %v1435
        %v1437 = vmul.f32 %v1272, %v1435
        %v1438 = vmul.f32 %v1287, %v1435
        %v1439 = vmul.f32 %v1302, %v1435
        %v1440 = vmul.f32 %v1317, %v1435
        %v1441 = vmul.f32 %v1332, %v1435
        %v1442 = vmul.f32 %v1347, %v1435
        %v1443 = vmul.f32 %v1362, %v1435
        %1445 = vset.pattern.permute.xlu0 0
        %1446 = vperm.xlu0 %1445, %v1436
        %v1447 = vpop.permute.xlu0 %1446
        %1450 = vset.pattern.permute.xlu0 0
        %1451 = vperm.xlu0 %1450, %v1437
        %v1452 = vpop.permute.xlu0 %1451
        %1455 = vset.pattern.permute.xlu0 0
        %1456 = vperm.xlu0 %1455, %v1438
        %v1457 = vpop.permute.xlu0 %1456
        %1460 = vset.pattern.permute.xlu0 0
        %1461 = vperm.xlu0 %1460, %v1439
        %v1462 = vpop.permute.xlu0 %1461
        %1465 = vset.pattern.permute.xlu0 0
        %1466 = vperm.xlu0 %1465, %v1440
        %v1467 = vpop.permute.xlu0 %1466
        %1470 = vset.pattern.permute.xlu0 0
        %1471 = vperm.xlu0 %1470, %v1441
        %v1472 = vpop.permute.xlu0 %1471
        %1475 = vset.pattern.permute.xlu0 0
        %1476 = vperm.xlu0 %1475, %v1442
        %v1477 = vpop.permute.xlu0 %1476
        %1480 = vset.pattern.permute.xlu0 0
        %1481 = vperm.xlu0 %1480, %v1443
        %v1482 = vpop.permute.xlu0 %1481
        %v1484 = vmul.f32 %v911, %v1447
        %v1485 = vmul.f32 %v912, %v1447
        %v1486 = vmul.f32 %v913, %v1447
        %v1487 = vmul.f32 %v914, %v1447
        %v1488 = vmul.f32 %v915, %v1452
        %v1489 = vmul.f32 %v916, %v1452
        %v1490 = vmul.f32 %v917, %v1452
        %v1491 = vmul.f32 %v918, %v1452
        %v1492 = vmul.f32 %v919, %v1457
        %v1493 = vmul.f32 %v920, %v1457
        %v1494 = vmul.f32 %v921, %v1457
        %v1495 = vmul.f32 %v922, %v1457
        %v1496 = vmul.f32 %v923, %v1462
        %v1497 = vmul.f32 %v924, %v1462
        %v1498 = vmul.f32 %v925, %v1462
        %v1499 = vmul.f32 %v926, %v1462
        %v1500 = vmul.f32 %v927, %v1467
        %v1501 = vmul.f32 %v928, %v1467
        %v1502 = vmul.f32 %v929, %v1467
        %v1503 = vmul.f32 %v930, %v1467
        %v1504 = vmul.f32 %v931, %v1472
        %v1505 = vmul.f32 %v932, %v1472
        %v1506 = vmul.f32 %v933, %v1472
        %v1507 = vmul.f32 %v934, %v1472
        %v1508 = vmul.f32 %v935, %v1477
        %v1509 = vmul.f32 %v936, %v1477
        %v1510 = vmul.f32 %v937, %v1477
        %v1511 = vmul.f32 %v938, %v1477
        %v1512 = vmul.f32 %v939, %v1482
        %v1513 = vmul.f32 %v940, %v1482
        %v1514 = vmul.f32 %v941, %v1482
        %v1515 = vmul.f32 %v942, %v1482
        %v1516 = vld [vmem:[#allocation9] sm:$0xff]
        %v1517 = vld [vmem:[#allocation9 + $0x8] sm:$0xff]
        %v1518 = vld [vmem:[#allocation9 + $0x10] sm:$0xff]
        %v1519 = vld [vmem:[#allocation9 + $0x18] sm:$0xff]
        %v1520 = vld [vmem:[#allocation9 + $0x20] sm:$0xff]
        %v1521 = vld [vmem:[#allocation9 + $0x28] sm:$0xff]
        %v1522 = vld [vmem:[#allocation9 + $0x30] sm:$0xff]
        %v1523 = vld [vmem:[#allocation9 + $0x38] sm:$0xff]
        %v1524 = vld [vmem:[#allocation9 + $0x40] sm:$0xff]
        %v1525 = vld [vmem:[#allocation9 + $0x48] sm:$0xff]
        %v1526 = vld [vmem:[#allocation9 + $0x50] sm:$0xff]
        %v1527 = vld [vmem:[#allocation9 + $0x58] sm:$0xff]
        %v1528 = vld [vmem:[#allocation9 + $0x60] sm:$0xff]
        %v1529 = vld [vmem:[#allocation9 + $0x68] sm:$0xff]
        %v1530 = vld [vmem:[#allocation9 + $0x70] sm:$0xff]
        %v1531 = vld [vmem:[#allocation9 + $0x78] sm:$0xff]
        %v1532 = vld [vmem:[#allocation9 + $0x80] sm:$0xff]
        %v1533 = vld [vmem:[#allocation9 + $0x88] sm:$0xff]
        %v1534 = vld [vmem:[#allocation9 + $0x90] sm:$0xff]
        %v1535 = vld [vmem:[#allocation9 + $0x98] sm:$0xff]
        %v1536 = vld [vmem:[#allocation9 + $0xa0] sm:$0xff]
        %v1537 = vld [vmem:[#allocation9 + $0xa8] sm:$0xff]
        %v1538 = vld [vmem:[#allocation9 + $0xb0] sm:$0xff]
        %v1539 = vld [vmem:[#allocation9 + $0xb8] sm:$0xff]
        %v1540 = vld [vmem:[#allocation9 + $0xc0] sm:$0xff]
        %v1541 = vld [vmem:[#allocation9 + $0xc8] sm:$0xff]
        %v1542 = vld [vmem:[#allocation9 + $0xd0] sm:$0xff]
        %v1543 = vld [vmem:[#allocation9 + $0xd8] sm:$0xff]
        %v1544 = vld [vmem:[#allocation9 + $0xe0] sm:$0xff]
        %v1545 = vld [vmem:[#allocation9 + $0xe8] sm:$0xff]
        %v1546 = vld [vmem:[#allocation9 + $0xf0] sm:$0xff]
        %v1547 = vld [vmem:[#allocation9 + $0xf8] sm:$0xff]
        %v1548 = vld [vmem:[#allocation9 + $0x100] sm:$0xff]
        %v1549 = vld [vmem:[#allocation9 + $0x108] sm:$0xff]
        %v1550 = vld [vmem:[#allocation9 + $0x110] sm:$0xff]
        %v1551 = vld [vmem:[#allocation9 + $0x118] sm:$0xff]
        %v1552 = vld [vmem:[#allocation9 + $0x120] sm:$0xff]
        %v1553 = vld [vmem:[#allocation9 + $0x128] sm:$0xff]
        %v1554 = vld [vmem:[#allocation9 + $0x130] sm:$0xff]
        %v1555 = vld [vmem:[#allocation9 + $0x138] sm:$0xff]
        %v1556 = vld [vmem:[#allocation9 + $0x140] sm:$0xff]
        %v1557 = vld [vmem:[#allocation9 + $0x148] sm:$0xff]
        %v1558 = vld [vmem:[#allocation9 + $0x150] sm:$0xff]
        %v1559 = vld [vmem:[#allocation9 + $0x158] sm:$0xff]
        %v1560 = vld [vmem:[#allocation9 + $0x160] sm:$0xff]
        %v1561 = vld [vmem:[#allocation9 + $0x168] sm:$0xff]
        %v1562 = vld [vmem:[#allocation9 + $0x170] sm:$0xff]
        %v1563 = vld [vmem:[#allocation9 + $0x178] sm:$0xff]
        %v1564 = vld [vmem:[#allocation9 + $0x180] sm:$0xff]
        %v1565 = vld [vmem:[#allocation9 + $0x188] sm:$0xff]
        %v1566 = vld [vmem:[#allocation9 + $0x190] sm:$0xff]
        %v1567 = vld [vmem:[#allocation9 + $0x198] sm:$0xff]
        %v1568 = vld [vmem:[#allocation9 + $0x1a0] sm:$0xff]
        %v1569 = vld [vmem:[#allocation9 + $0x1a8] sm:$0xff]
        %v1570 = vld [vmem:[#allocation9 + $0x1b0] sm:$0xff]
        %v1571 = vld [vmem:[#allocation9 + $0x1b8] sm:$0xff]
        %v1572 = vld [vmem:[#allocation9 + $0x1c0] sm:$0xff]
        %v1573 = vld [vmem:[#allocation9 + $0x1c8] sm:$0xff]
        %v1574 = vld [vmem:[#allocation9 + $0x1d0] sm:$0xff]
        %v1575 = vld [vmem:[#allocation9 + $0x1d8] sm:$0xff]
        %v1576 = vld [vmem:[#allocation9 + $0x1e0] sm:$0xff]
        %v1577 = vld [vmem:[#allocation9 + $0x1e8] sm:$0xff]
        %v1578 = vld [vmem:[#allocation9 + $0x1f0] sm:$0xff]
        %v1579 = vld [vmem:[#allocation9 + $0x1f8] sm:$0xff]
        %v1580 = vld [vmem:[#allocation9 + $0x200] sm:$0xff]
        %v1581 = vld [vmem:[#allocation9 + $0x208] sm:$0xff]
        %v1582 = vld [vmem:[#allocation9 + $0x210] sm:$0xff]
        %v1583 = vld [vmem:[#allocation9 + $0x218] sm:$0xff]
        %v1584 = vld [vmem:[#allocation9 + $0x220] sm:$0xff]
        %v1585 = vld [vmem:[#allocation9 + $0x228] sm:$0xff]
        %v1586 = vld [vmem:[#allocation9 + $0x230] sm:$0xff]
        %v1587 = vld [vmem:[#allocation9 + $0x238] sm:$0xff]
        %v1588 = vld [vmem:[#allocation9 + $0x240] sm:$0xff]
        %v1589 = vld [vmem:[#allocation9 + $0x248] sm:$0xff]
        %v1590 = vld [vmem:[#allocation9 + $0x250] sm:$0xff]
        %v1591 = vld [vmem:[#allocation9 + $0x258] sm:$0xff]
        %v1592 = vld [vmem:[#allocation9 + $0x260] sm:$0xff]
        %v1593 = vld [vmem:[#allocation9 + $0x268] sm:$0xff]
        %v1594 = vld [vmem:[#allocation9 + $0x270] sm:$0xff]
        %v1595 = vld [vmem:[#allocation9 + $0x278] sm:$0xff]
        %v1596 = vld [vmem:[#allocation9 + $0x280] sm:$0xff]
        %v1597 = vld [vmem:[#allocation9 + $0x288] sm:$0xff]
        %v1598 = vld [vmem:[#allocation9 + $0x290] sm:$0xff]
        %v1599 = vld [vmem:[#allocation9 + $0x298] sm:$0xff]
        %v1600 = vld [vmem:[#allocation9 + $0x2a0] sm:$0xff]
        %v1601 = vld [vmem:[#allocation9 + $0x2a8] sm:$0xff]
        %v1602 = vld [vmem:[#allocation9 + $0x2b0] sm:$0xff]
        %v1603 = vld [vmem:[#allocation9 + $0x2b8] sm:$0xff]
        %v1604 = vld [vmem:[#allocation9 + $0x2c0] sm:$0xff]
        %v1605 = vld [vmem:[#allocation9 + $0x2c8] sm:$0xff]
        %v1606 = vld [vmem:[#allocation9 + $0x2d0] sm:$0xff]
        %v1607 = vld [vmem:[#allocation9 + $0x2d8] sm:$0xff]
        %v1608 = vld [vmem:[#allocation9 + $0x2e0] sm:$0xff]
        %v1609 = vld [vmem:[#allocation9 + $0x2e8] sm:$0xff]
        %v1610 = vld [vmem:[#allocation9 + $0x2f0] sm:$0xff]
        %v1611 = vld [vmem:[#allocation9 + $0x2f8] sm:$0xff]
        %v1612 = vld [vmem:[#allocation9 + $0x300] sm:$0xff]
        %v1613 = vld [vmem:[#allocation9 + $0x308] sm:$0xff]
        %v1614 = vld [vmem:[#allocation9 + $0x310] sm:$0xff]
        %v1615 = vld [vmem:[#allocation9 + $0x318] sm:$0xff]
        %v1616 = vld [vmem:[#allocation9 + $0x320] sm:$0xff]
        %v1617 = vld [vmem:[#allocation9 + $0x328] sm:$0xff]
        %v1618 = vld [vmem:[#allocation9 + $0x330] sm:$0xff]
        %v1619 = vld [vmem:[#allocation9 + $0x338] sm:$0xff]
        %v1620 = vld [vmem:[#allocation9 + $0x340] sm:$0xff]
        %v1621 = vld [vmem:[#allocation9 + $0x348] sm:$0xff]
        %v1622 = vld [vmem:[#allocation9 + $0x350] sm:$0xff]
        %v1623 = vld [vmem:[#allocation9 + $0x358] sm:$0xff]
        %v1624 = vld [vmem:[#allocation9 + $0x360] sm:$0xff]
        %v1625 = vld [vmem:[#allocation9 + $0x368] sm:$0xff]
        %v1626 = vld [vmem:[#allocation9 + $0x370] sm:$0xff]
        %v1627 = vld [vmem:[#allocation9 + $0x378] sm:$0xff]
        %v1628 = vld [vmem:[#allocation9 + $0x380] sm:$0xff]
        %v1629 = vld [vmem:[#allocation9 + $0x388] sm:$0xff]
        %v1630 = vld [vmem:[#allocation9 + $0x390] sm:$0xff]
        %v1631 = vld [vmem:[#allocation9 + $0x398] sm:$0xff]
        %v1632 = vld [vmem:[#allocation9 + $0x3a0] sm:$0xff]
        %v1633 = vld [vmem:[#allocation9 + $0x3a8] sm:$0xff]
        %v1634 = vld [vmem:[#allocation9 + $0x3b0] sm:$0xff]
        %v1635 = vld [vmem:[#allocation9 + $0x3b8] sm:$0xff]
        %v1636 = vld [vmem:[#allocation9 + $0x3c0] sm:$0xff]
        %v1637 = vld [vmem:[#allocation9 + $0x3c8] sm:$0xff]
        %v1638 = vld [vmem:[#allocation9 + $0x3d0] sm:$0xff]
        %v1639 = vld [vmem:[#allocation9 + $0x3d8] sm:$0xff]
        %v1640 = vld [vmem:[#allocation9 + $0x3e0] sm:$0xff]
        %v1641 = vld [vmem:[#allocation9 + $0x3e8] sm:$0xff]
        %v1642 = vld [vmem:[#allocation9 + $0x3f0] sm:$0xff]
        %v1643 = vld [vmem:[#allocation9 + $0x3f8] sm:$0xff]
        %v1644 = vld [vmem:[#allocation9 + $0x400] sm:$0xff]
        %v1645 = vld [vmem:[#allocation9 + $0x408] sm:$0xff]
        %v1646 = vld [vmem:[#allocation9 + $0x410] sm:$0xff]
        %v1647 = vld [vmem:[#allocation9 + $0x418] sm:$0xff]
        %v1648 = vld [vmem:[#allocation9 + $0x420] sm:$0xff]
        %v1649 = vld [vmem:[#allocation9 + $0x428] sm:$0xff]
        %v1650 = vld [vmem:[#allocation9 + $0x430] sm:$0xff]
        %v1651 = vld [vmem:[#allocation9 + $0x438] sm:$0xff]
        %v1652 = vld [vmem:[#allocation9 + $0x440] sm:$0xff]
        %v1653 = vld [vmem:[#allocation9 + $0x448] sm:$0xff]
        %v1654 = vld [vmem:[#allocation9 + $0x450] sm:$0xff]
        %v1655 = vld [vmem:[#allocation9 + $0x458] sm:$0xff]
        %v1656 = vld [vmem:[#allocation9 + $0x460] sm:$0xff]
        %v1657 = vld [vmem:[#allocation9 + $0x468] sm:$0xff]
        %v1658 = vld [vmem:[#allocation9 + $0x470] sm:$0xff]
        %v1659 = vld [vmem:[#allocation9 + $0x478] sm:$0xff]
        %v1660 = vld [vmem:[#allocation9 + $0x480] sm:$0xff]
        %v1661 = vld [vmem:[#allocation9 + $0x488] sm:$0xff]
        %v1662 = vld [vmem:[#allocation9 + $0x490] sm:$0xff]
        %v1663 = vld [vmem:[#allocation9 + $0x498] sm:$0xff]
        %v1664 = vld [vmem:[#allocation9 + $0x4a0] sm:$0xff]
        %v1665 = vld [vmem:[#allocation9 + $0x4a8] sm:$0xff]
        %v1666 = vld [vmem:[#allocation9 + $0x4b0] sm:$0xff]
        %v1667 = vld [vmem:[#allocation9 + $0x4b8] sm:$0xff]
        %v1668 = vld [vmem:[#allocation9 + $0x4c0] sm:$0xff]
        %v1669 = vld [vmem:[#allocation9 + $0x4c8] sm:$0xff]
        %v1670 = vld [vmem:[#allocation9 + $0x4d0] sm:$0xff]
        %v1671 = vld [vmem:[#allocation9 + $0x4d8] sm:$0xff]
        %v1672 = vld [vmem:[#allocation9 + $0x4e0] sm:$0xff]
        %v1673 = vld [vmem:[#allocation9 + $0x4e8] sm:$0xff]
        %v1674 = vld [vmem:[#allocation9 + $0x4f0] sm:$0xff]
        %v1675 = vld [vmem:[#allocation9 + $0x4f8] sm:$0xff]
        %v1676 = vld [vmem:[#allocation9 + $0x500] sm:$0xff]
        %v1677 = vld [vmem:[#allocation9 + $0x508] sm:$0xff]
        %v1678 = vld [vmem:[#allocation9 + $0x510] sm:$0xff]
        %v1679 = vld [vmem:[#allocation9 + $0x518] sm:$0xff]
        %v1680 = vld [vmem:[#allocation9 + $0x520] sm:$0xff]
        %v1681 = vld [vmem:[#allocation9 + $0x528] sm:$0xff]
        %v1682 = vld [vmem:[#allocation9 + $0x530] sm:$0xff]
        %v1683 = vld [vmem:[#allocation9 + $0x538] sm:$0xff]
        %v1684 = vld [vmem:[#allocation9 + $0x540] sm:$0xff]
        %v1685 = vld [vmem:[#allocation9 + $0x548] sm:$0xff]
        %v1686 = vld [vmem:[#allocation9 + $0x550] sm:$0xff]
        %v1687 = vld [vmem:[#allocation9 + $0x558] sm:$0xff]
        %v1688 = vld [vmem:[#allocation9 + $0x560] sm:$0xff]
        %v1689 = vld [vmem:[#allocation9 + $0x568] sm:$0xff]
        %v1690 = vld [vmem:[#allocation9 + $0x570] sm:$0xff]
        %v1691 = vld [vmem:[#allocation9 + $0x578] sm:$0xff]
        %v1692 = vld [vmem:[#allocation9 + $0x580] sm:$0xff]
        %v1693 = vld [vmem:[#allocation9 + $0x588] sm:$0xff]
        %v1694 = vld [vmem:[#allocation9 + $0x590] sm:$0xff]
        %v1695 = vld [vmem:[#allocation9 + $0x598] sm:$0xff]
        %v1696 = vld [vmem:[#allocation9 + $0x5a0] sm:$0xff]
        %v1697 = vld [vmem:[#allocation9 + $0x5a8] sm:$0xff]
        %v1698 = vld [vmem:[#allocation9 + $0x5b0] sm:$0xff]
        %v1699 = vld [vmem:[#allocation9 + $0x5b8] sm:$0xff]
        %v1700 = vld [vmem:[#allocation9 + $0x5c0] sm:$0xff]
        %v1701 = vld [vmem:[#allocation9 + $0x5c8] sm:$0xff]
        %v1702 = vld [vmem:[#allocation9 + $0x5d0] sm:$0xff]
        %v1703 = vld [vmem:[#allocation9 + $0x5d8] sm:$0xff]
        %v1704 = vld [vmem:[#allocation9 + $0x5e0] sm:$0xff]
        %v1705 = vld [vmem:[#allocation9 + $0x5e8] sm:$0xff]
        %v1706 = vld [vmem:[#allocation9 + $0x5f0] sm:$0xff]
        %v1707 = vld [vmem:[#allocation9 + $0x5f8] sm:$0xff]
        %v1708 = vld [vmem:[#allocation9 + $0x600] sm:$0xff]
        %v1709 = vld [vmem:[#allocation9 + $0x608] sm:$0xff]
        %v1710 = vld [vmem:[#allocation9 + $0x610] sm:$0xff]
        %v1711 = vld [vmem:[#allocation9 + $0x618] sm:$0xff]
        %v1712 = vld [vmem:[#allocation9 + $0x620] sm:$0xff]
        %v1713 = vld [vmem:[#allocation9 + $0x628] sm:$0xff]
        %v1714 = vld [vmem:[#allocation9 + $0x630] sm:$0xff]
        %v1715 = vld [vmem:[#allocation9 + $0x638] sm:$0xff]
        %v1716 = vld [vmem:[#allocation9 + $0x640] sm:$0xff]
        %v1717 = vld [vmem:[#allocation9 + $0x648] sm:$0xff]
        %v1718 = vld [vmem:[#allocation9 + $0x650] sm:$0xff]
        %v1719 = vld [vmem:[#allocation9 + $0x658] sm:$0xff]
        %v1720 = vld [vmem:[#allocation9 + $0x660] sm:$0xff]
        %v1721 = vld [vmem:[#allocation9 + $0x668] sm:$0xff]
        %v1722 = vld [vmem:[#allocation9 + $0x670] sm:$0xff]
        %v1723 = vld [vmem:[#allocation9 + $0x678] sm:$0xff]
        %v1724 = vld [vmem:[#allocation9 + $0x680] sm:$0xff]
        %v1725 = vld [vmem:[#allocation9 + $0x688] sm:$0xff]
        %v1726 = vld [vmem:[#allocation9 + $0x690] sm:$0xff]
        %v1727 = vld [vmem:[#allocation9 + $0x698] sm:$0xff]
        %v1728 = vld [vmem:[#allocation9 + $0x6a0] sm:$0xff]
        %v1729 = vld [vmem:[#allocation9 + $0x6a8] sm:$0xff]
        %v1730 = vld [vmem:[#allocation9 + $0x6b0] sm:$0xff]
        %v1731 = vld [vmem:[#allocation9 + $0x6b8] sm:$0xff]
        %v1732 = vld [vmem:[#allocation9 + $0x6c0] sm:$0xff]
        %v1733 = vld [vmem:[#allocation9 + $0x6c8] sm:$0xff]
        %v1734 = vld [vmem:[#allocation9 + $0x6d0] sm:$0xff]
        %v1735 = vld [vmem:[#allocation9 + $0x6d8] sm:$0xff]
        %v1736 = vld [vmem:[#allocation9 + $0x6e0] sm:$0xff]
        %v1737 = vld [vmem:[#allocation9 + $0x6e8] sm:$0xff]
        %v1738 = vld [vmem:[#allocation9 + $0x6f0] sm:$0xff]
        %v1739 = vld [vmem:[#allocation9 + $0x6f8] sm:$0xff]
        %v1740 = vld [vmem:[#allocation9 + $0x700] sm:$0xff]
        %v1741 = vld [vmem:[#allocation9 + $0x708] sm:$0xff]
        %v1742 = vld [vmem:[#allocation9 + $0x710] sm:$0xff]
        %v1743 = vld [vmem:[#allocation9 + $0x718] sm:$0xff]
        %v1744 = vld [vmem:[#allocation9 + $0x720] sm:$0xff]
        %v1745 = vld [vmem:[#allocation9 + $0x728] sm:$0xff]
        %v1746 = vld [vmem:[#allocation9 + $0x730] sm:$0xff]
        %v1747 = vld [vmem:[#allocation9 + $0x738] sm:$0xff]
        %v1748 = vld [vmem:[#allocation9 + $0x740] sm:$0xff]
        %v1749 = vld [vmem:[#allocation9 + $0x748] sm:$0xff]
        %v1750 = vld [vmem:[#allocation9 + $0x750] sm:$0xff]
        %v1751 = vld [vmem:[#allocation9 + $0x758] sm:$0xff]
        %v1752 = vld [vmem:[#allocation9 + $0x760] sm:$0xff]
        %v1753 = vld [vmem:[#allocation9 + $0x768] sm:$0xff]
        %v1754 = vld [vmem:[#allocation9 + $0x770] sm:$0xff]
        %v1755 = vld [vmem:[#allocation9 + $0x778] sm:$0xff]
        %v1756 = vld [vmem:[#allocation9 + $0x780] sm:$0xff]
        %v1757 = vld [vmem:[#allocation9 + $0x788] sm:$0xff]
        %v1758 = vld [vmem:[#allocation9 + $0x790] sm:$0xff]
        %v1759 = vld [vmem:[#allocation9 + $0x798] sm:$0xff]
        %v1760 = vld [vmem:[#allocation9 + $0x7a0] sm:$0xff]
        %v1761 = vld [vmem:[#allocation9 + $0x7a8] sm:$0xff]
        %v1762 = vld [vmem:[#allocation9 + $0x7b0] sm:$0xff]
        %v1763 = vld [vmem:[#allocation9 + $0x7b8] sm:$0xff]
        %v1764 = vld [vmem:[#allocation9 + $0x7c0] sm:$0xff]
        %v1765 = vld [vmem:[#allocation9 + $0x7c8] sm:$0xff]
        %v1766 = vld [vmem:[#allocation9 + $0x7d0] sm:$0xff]
        %v1767 = vld [vmem:[#allocation9 + $0x7d8] sm:$0xff]
        %v1768 = vld [vmem:[#allocation9 + $0x7e0] sm:$0xff]
        %v1769 = vld [vmem:[#allocation9 + $0x7e8] sm:$0xff]
        %v1770 = vld [vmem:[#allocation9 + $0x7f0] sm:$0xff]
        %v1771 = vld [vmem:[#allocation9 + $0x7f8] sm:$0xff]
        %v1772 = vld [vmem:[#allocation9 + $0x800] sm:$0xff]
        %v1773 = vld [vmem:[#allocation9 + $0x808] sm:$0xff]
        %v1774 = vld [vmem:[#allocation9 + $0x810] sm:$0xff]
        %v1775 = vld [vmem:[#allocation9 + $0x818] sm:$0xff]
        %v1776 = vld [vmem:[#allocation9 + $0x820] sm:$0xff]
        %v1777 = vld [vmem:[#allocation9 + $0x828] sm:$0xff]
        %v1778 = vld [vmem:[#allocation9 + $0x830] sm:$0xff]
        %v1779 = vld [vmem:[#allocation9 + $0x838] sm:$0xff]
        %v1780 = vld [vmem:[#allocation9 + $0x840] sm:$0xff]
        %v1781 = vld [vmem:[#allocation9 + $0x848] sm:$0xff]
        %v1782 = vld [vmem:[#allocation9 + $0x850] sm:$0xff]
        %v1783 = vld [vmem:[#allocation9 + $0x858] sm:$0xff]
        %v1784 = vld [vmem:[#allocation9 + $0x860] sm:$0xff]
        %v1785 = vld [vmem:[#allocation9 + $0x868] sm:$0xff]
        %v1786 = vld [vmem:[#allocation9 + $0x870] sm:$0xff]
        %v1787 = vld [vmem:[#allocation9 + $0x878] sm:$0xff]
        %v1788 = vld [vmem:[#allocation9 + $0x880] sm:$0xff]
        %v1789 = vld [vmem:[#allocation9 + $0x888] sm:$0xff]
        %v1790 = vld [vmem:[#allocation9 + $0x890] sm:$0xff]
        %v1791 = vld [vmem:[#allocation9 + $0x898] sm:$0xff]
        %v1792 = vld [vmem:[#allocation9 + $0x8a0] sm:$0xff]
        %v1793 = vld [vmem:[#allocation9 + $0x8a8] sm:$0xff]
        %v1794 = vld [vmem:[#allocation9 + $0x8b0] sm:$0xff]
        %v1795 = vld [vmem:[#allocation9 + $0x8b8] sm:$0xff]
        %v1796 = vld [vmem:[#allocation9 + $0x8c0] sm:$0xff]
        %v1797 = vld [vmem:[#allocation9 + $0x8c8] sm:$0xff]
        %v1798 = vld [vmem:[#allocation9 + $0x8d0] sm:$0xff]
        %v1799 = vld [vmem:[#allocation9 + $0x8d8] sm:$0xff]
        %v1800 = vld [vmem:[#allocation9 + $0x8e0] sm:$0xff]
        %v1801 = vld [vmem:[#allocation9 + $0x8e8] sm:$0xff]
        %v1802 = vld [vmem:[#allocation9 + $0x8f0] sm:$0xff]
        %v1803 = vld [vmem:[#allocation9 + $0x8f8] sm:$0xff]
        %v1804 = vld [vmem:[#allocation9 + $0x900] sm:$0xff]
        %v1805 = vld [vmem:[#allocation9 + $0x908] sm:$0xff]
        %v1806 = vld [vmem:[#allocation9 + $0x910] sm:$0xff]
        %v1807 = vld [vmem:[#allocation9 + $0x918] sm:$0xff]
        %v1808 = vld [vmem:[#allocation9 + $0x920] sm:$0xff]
        %v1809 = vld [vmem:[#allocation9 + $0x928] sm:$0xff]
        %v1810 = vld [vmem:[#allocation9 + $0x930] sm:$0xff]
        %v1811 = vld [vmem:[#allocation9 + $0x938] sm:$0xff]
        %v1812 = vld [vmem:[#allocation9 + $0x940] sm:$0xff]
        %v1813 = vld [vmem:[#allocation9 + $0x948] sm:$0xff]
        %v1814 = vld [vmem:[#allocation9 + $0x950] sm:$0xff]
        %v1815 = vld [vmem:[#allocation9 + $0x958] sm:$0xff]
        %v1816 = vld [vmem:[#allocation9 + $0x960] sm:$0xff]
        %v1817 = vld [vmem:[#allocation9 + $0x968] sm:$0xff]
        %v1818 = vld [vmem:[#allocation9 + $0x970] sm:$0xff]
        %v1819 = vld [vmem:[#allocation9 + $0x978] sm:$0xff]
        %v1820 = vld [vmem:[#allocation9 + $0x980] sm:$0xff]
        %v1821 = vld [vmem:[#allocation9 + $0x988] sm:$0xff]
        %v1822 = vld [vmem:[#allocation9 + $0x990] sm:$0xff]
        %v1823 = vld [vmem:[#allocation9 + $0x998] sm:$0xff]
        %v1824 = vld [vmem:[#allocation9 + $0x9a0] sm:$0xff]
        %v1825 = vld [vmem:[#allocation9 + $0x9a8] sm:$0xff]
        %v1826 = vld [vmem:[#allocation9 + $0x9b0] sm:$0xff]
        %v1827 = vld [vmem:[#allocation9 + $0x9b8] sm:$0xff]
        %v1828 = vld [vmem:[#allocation9 + $0x9c0] sm:$0xff]
        %v1829 = vld [vmem:[#allocation9 + $0x9c8] sm:$0xff]
        %v1830 = vld [vmem:[#allocation9 + $0x9d0] sm:$0xff]
        %v1831 = vld [vmem:[#allocation9 + $0x9d8] sm:$0xff]
        %v1832 = vld [vmem:[#allocation9 + $0x9e0] sm:$0xff]
        %v1833 = vld [vmem:[#allocation9 + $0x9e8] sm:$0xff]
        %v1834 = vld [vmem:[#allocation9 + $0x9f0] sm:$0xff]
        %v1835 = vld [vmem:[#allocation9 + $0x9f8] sm:$0xff]
        %v1836 = vld [vmem:[#allocation9 + $0xa00] sm:$0xff]
        %v1837 = vld [vmem:[#allocation9 + $0xa08] sm:$0xff]
        %v1838 = vld [vmem:[#allocation9 + $0xa10] sm:$0xff]
        %v1839 = vld [vmem:[#allocation9 + $0xa18] sm:$0xff]
        %v1840 = vld [vmem:[#allocation9 + $0xa20] sm:$0xff]
        %v1841 = vld [vmem:[#allocation9 + $0xa28] sm:$0xff]
        %v1842 = vld [vmem:[#allocation9 + $0xa30] sm:$0xff]
        %v1843 = vld [vmem:[#allocation9 + $0xa38] sm:$0xff]
        %v1844 = vld [vmem:[#allocation9 + $0xa40] sm:$0xff]
        %v1845 = vld [vmem:[#allocation9 + $0xa48] sm:$0xff]
        %v1846 = vld [vmem:[#allocation9 + $0xa50] sm:$0xff]
        %v1847 = vld [vmem:[#allocation9 + $0xa58] sm:$0xff]
        %v1848 = vld [vmem:[#allocation9 + $0xa60] sm:$0xff]
        %v1849 = vld [vmem:[#allocation9 + $0xa68] sm:$0xff]
        %v1850 = vld [vmem:[#allocation9 + $0xa70] sm:$0xff]
        %v1851 = vld [vmem:[#allocation9 + $0xa78] sm:$0xff]
        %v1852 = vld [vmem:[#allocation9 + $0xa80] sm:$0xff]
        %v1853 = vld [vmem:[#allocation9 + $0xa88] sm:$0xff]
        %v1854 = vld [vmem:[#allocation9 + $0xa90] sm:$0xff]
        %v1855 = vld [vmem:[#allocation9 + $0xa98] sm:$0xff]
        %v1856 = vld [vmem:[#allocation9 + $0xaa0] sm:$0xff]
        %v1857 = vld [vmem:[#allocation9 + $0xaa8] sm:$0xff]
        %v1858 = vld [vmem:[#allocation9 + $0xab0] sm:$0xff]
        %v1859 = vld [vmem:[#allocation9 + $0xab8] sm:$0xff]
        %v1860 = vld [vmem:[#allocation9 + $0xac0] sm:$0xff]
        %v1861 = vld [vmem:[#allocation9 + $0xac8] sm:$0xff]
        %v1862 = vld [vmem:[#allocation9 + $0xad0] sm:$0xff]
        %v1863 = vld [vmem:[#allocation9 + $0xad8] sm:$0xff]
        %v1864 = vld [vmem:[#allocation9 + $0xae0] sm:$0xff]
        %v1865 = vld [vmem:[#allocation9 + $0xae8] sm:$0xff]
        %v1866 = vld [vmem:[#allocation9 + $0xaf0] sm:$0xff]
        %v1867 = vld [vmem:[#allocation9 + $0xaf8] sm:$0xff]
        %v1868 = vld [vmem:[#allocation9 + $0xb00] sm:$0xff]
        %v1869 = vld [vmem:[#allocation9 + $0xb08] sm:$0xff]
        %v1870 = vld [vmem:[#allocation9 + $0xb10] sm:$0xff]
        %v1871 = vld [vmem:[#allocation9 + $0xb18] sm:$0xff]
        %v1872 = vld [vmem:[#allocation9 + $0xb20] sm:$0xff]
        %v1873 = vld [vmem:[#allocation9 + $0xb28] sm:$0xff]
        %v1874 = vld [vmem:[#allocation9 + $0xb30] sm:$0xff]
        %v1875 = vld [vmem:[#allocation9 + $0xb38] sm:$0xff]
        %v1876 = vld [vmem:[#allocation9 + $0xb40] sm:$0xff]
        %v1877 = vld [vmem:[#allocation9 + $0xb48] sm:$0xff]
        %v1878 = vld [vmem:[#allocation9 + $0xb50] sm:$0xff]
        %v1879 = vld [vmem:[#allocation9 + $0xb58] sm:$0xff]
        %v1880 = vld [vmem:[#allocation9 + $0xb60] sm:$0xff]
        %v1881 = vld [vmem:[#allocation9 + $0xb68] sm:$0xff]
        %v1882 = vld [vmem:[#allocation9 + $0xb70] sm:$0xff]
        %v1883 = vld [vmem:[#allocation9 + $0xb78] sm:$0xff]
        %v1884 = vld [vmem:[#allocation9 + $0xb80] sm:$0xff]
        %v1885 = vld [vmem:[#allocation9 + $0xb88] sm:$0xff]
        %v1886 = vld [vmem:[#allocation9 + $0xb90] sm:$0xff]
        %v1887 = vld [vmem:[#allocation9 + $0xb98] sm:$0xff]
        %v1888 = vld [vmem:[#allocation9 + $0xba0] sm:$0xff]
        %v1889 = vld [vmem:[#allocation9 + $0xba8] sm:$0xff]
        %v1890 = vld [vmem:[#allocation9 + $0xbb0] sm:$0xff]
        %v1891 = vld [vmem:[#allocation9 + $0xbb8] sm:$0xff]
        %v1892 = vld [vmem:[#allocation9 + $0xbc0] sm:$0xff]
        %v1893 = vld [vmem:[#allocation9 + $0xbc8] sm:$0xff]
        %v1894 = vld [vmem:[#allocation9 + $0xbd0] sm:$0xff]
        %v1895 = vld [vmem:[#allocation9 + $0xbd8] sm:$0xff]
        %v1896 = vld [vmem:[#allocation9 + $0xbe0] sm:$0xff]
        %v1897 = vld [vmem:[#allocation9 + $0xbe8] sm:$0xff]
        %v1898 = vld [vmem:[#allocation9 + $0xbf0] sm:$0xff]
        %v1899 = vld [vmem:[#allocation9 + $0xbf8] sm:$0xff]
        %v1900 = vld [vmem:[#allocation9 + $0xc00] sm:$0xff]
        %v1901 = vld [vmem:[#allocation9 + $0xc08] sm:$0xff]
        %v1902 = vld [vmem:[#allocation9 + $0xc10] sm:$0xff]
        %v1903 = vld [vmem:[#allocation9 + $0xc18] sm:$0xff]
        %v1904 = vld [vmem:[#allocation9 + $0xc20] sm:$0xff]
        %v1905 = vld [vmem:[#allocation9 + $0xc28] sm:$0xff]
        %v1906 = vld [vmem:[#allocation9 + $0xc30] sm:$0xff]
        %v1907 = vld [vmem:[#allocation9 + $0xc38] sm:$0xff]
        %v1908 = vld [vmem:[#allocation9 + $0xc40] sm:$0xff]
        %v1909 = vld [vmem:[#allocation9 + $0xc48] sm:$0xff]
        %v1910 = vld [vmem:[#allocation9 + $0xc50] sm:$0xff]
        %v1911 = vld [vmem:[#allocation9 + $0xc58] sm:$0xff]
        %v1912 = vld [vmem:[#allocation9 + $0xc60] sm:$0xff]
        %v1913 = vld [vmem:[#allocation9 + $0xc68] sm:$0xff]
        %v1914 = vld [vmem:[#allocation9 + $0xc70] sm:$0xff]
        %v1915 = vld [vmem:[#allocation9 + $0xc78] sm:$0xff]
        %v1916 = vld [vmem:[#allocation9 + $0xc80] sm:$0xff]
        %v1917 = vld [vmem:[#allocation9 + $0xc88] sm:$0xff]
        %v1918 = vld [vmem:[#allocation9 + $0xc90] sm:$0xff]
        %v1919 = vld [vmem:[#allocation9 + $0xc98] sm:$0xff]
        %v1920 = vld [vmem:[#allocation9 + $0xca0] sm:$0xff]
        %v1921 = vld [vmem:[#allocation9 + $0xca8] sm:$0xff]
        %v1922 = vld [vmem:[#allocation9 + $0xcb0] sm:$0xff]
        %v1923 = vld [vmem:[#allocation9 + $0xcb8] sm:$0xff]
        %v1924 = vld [vmem:[#allocation9 + $0xcc0] sm:$0xff]
        %v1925 = vld [vmem:[#allocation9 + $0xcc8] sm:$0xff]
        %v1926 = vld [vmem:[#allocation9 + $0xcd0] sm:$0xff]
        %v1927 = vld [vmem:[#allocation9 + $0xcd8] sm:$0xff]
        %v1928 = vld [vmem:[#allocation9 + $0xce0] sm:$0xff]
        %v1929 = vld [vmem:[#allocation9 + $0xce8] sm:$0xff]
        %v1930 = vld [vmem:[#allocation9 + $0xcf0] sm:$0xff]
        %v1931 = vld [vmem:[#allocation9 + $0xcf8] sm:$0xff]
        %v1932 = vld [vmem:[#allocation9 + $0xd00] sm:$0xff]
        %v1933 = vld [vmem:[#allocation9 + $0xd08] sm:$0xff]
        %v1934 = vld [vmem:[#allocation9 + $0xd10] sm:$0xff]
        %v1935 = vld [vmem:[#allocation9 + $0xd18] sm:$0xff]
        %v1936 = vld [vmem:[#allocation9 + $0xd20] sm:$0xff]
        %v1937 = vld [vmem:[#allocation9 + $0xd28] sm:$0xff]
        %v1938 = vld [vmem:[#allocation9 + $0xd30] sm:$0xff]
        %v1939 = vld [vmem:[#allocation9 + $0xd38] sm:$0xff]
        %v1940 = vld [vmem:[#allocation9 + $0xd40] sm:$0xff]
        %v1941 = vld [vmem:[#allocation9 + $0xd48] sm:$0xff]
        %v1942 = vld [vmem:[#allocation9 + $0xd50] sm:$0xff]
        %v1943 = vld [vmem:[#allocation9 + $0xd58] sm:$0xff]
        %v1944 = vld [vmem:[#allocation9 + $0xd60] sm:$0xff]
        %v1945 = vld [vmem:[#allocation9 + $0xd68] sm:$0xff]
        %v1946 = vld [vmem:[#allocation9 + $0xd70] sm:$0xff]
        %v1947 = vld [vmem:[#allocation9 + $0xd78] sm:$0xff]
        %v1948 = vld [vmem:[#allocation9 + $0xd80] sm:$0xff]
        %v1949 = vld [vmem:[#allocation9 + $0xd88] sm:$0xff]
        %v1950 = vld [vmem:[#allocation9 + $0xd90] sm:$0xff]
        %v1951 = vld [vmem:[#allocation9 + $0xd98] sm:$0xff]
        %v1952 = vld [vmem:[#allocation9 + $0xda0] sm:$0xff]
        %v1953 = vld [vmem:[#allocation9 + $0xda8] sm:$0xff]
        %v1954 = vld [vmem:[#allocation9 + $0xdb0] sm:$0xff]
        %v1955 = vld [vmem:[#allocation9 + $0xdb8] sm:$0xff]
        %v1956 = vld [vmem:[#allocation9 + $0xdc0] sm:$0xff]
        %v1957 = vld [vmem:[#allocation9 + $0xdc8] sm:$0xff]
        %v1958 = vld [vmem:[#allocation9 + $0xdd0] sm:$0xff]
        %v1959 = vld [vmem:[#allocation9 + $0xdd8] sm:$0xff]
        %v1960 = vld [vmem:[#allocation9 + $0xde0] sm:$0xff]
        %v1961 = vld [vmem:[#allocation9 + $0xde8] sm:$0xff]
        %v1962 = vld [vmem:[#allocation9 + $0xdf0] sm:$0xff]
        %v1963 = vld [vmem:[#allocation9 + $0xdf8] sm:$0xff]
        %v1964 = vld [vmem:[#allocation9 + $0xe00] sm:$0xff]
        %v1965 = vld [vmem:[#allocation9 + $0xe08] sm:$0xff]
        %v1966 = vld [vmem:[#allocation9 + $0xe10] sm:$0xff]
        %v1967 = vld [vmem:[#allocation9 + $0xe18] sm:$0xff]
        %v1968 = vld [vmem:[#allocation9 + $0xe20] sm:$0xff]
        %v1969 = vld [vmem:[#allocation9 + $0xe28] sm:$0xff]
        %v1970 = vld [vmem:[#allocation9 + $0xe30] sm:$0xff]
        %v1971 = vld [vmem:[#allocation9 + $0xe38] sm:$0xff]
        %v1972 = vld [vmem:[#allocation9 + $0xe40] sm:$0xff]
        %v1973 = vld [vmem:[#allocation9 + $0xe48] sm:$0xff]
        %v1974 = vld [vmem:[#allocation9 + $0xe50] sm:$0xff]
        %v1975 = vld [vmem:[#allocation9 + $0xe58] sm:$0xff]
        %v1976 = vld [vmem:[#allocation9 + $0xe60] sm:$0xff]
        %v1977 = vld [vmem:[#allocation9 + $0xe68] sm:$0xff]
        %v1978 = vld [vmem:[#allocation9 + $0xe70] sm:$0xff]
        %v1979 = vld [vmem:[#allocation9 + $0xe78] sm:$0xff]
        %v1980 = vld [vmem:[#allocation9 + $0xe80] sm:$0xff]
        %v1981 = vld [vmem:[#allocation9 + $0xe88] sm:$0xff]
        %v1982 = vld [vmem:[#allocation9 + $0xe90] sm:$0xff]
        %v1983 = vld [vmem:[#allocation9 + $0xe98] sm:$0xff]
        %v1984 = vld [vmem:[#allocation9 + $0xea0] sm:$0xff]
        %v1985 = vld [vmem:[#allocation9 + $0xea8] sm:$0xff]
        %v1986 = vld [vmem:[#allocation9 + $0xeb0] sm:$0xff]
        %v1987 = vld [vmem:[#allocation9 + $0xeb8] sm:$0xff]
        %v1988 = vld [vmem:[#allocation9 + $0xec0] sm:$0xff]
        %v1989 = vld [vmem:[#allocation9 + $0xec8] sm:$0xff]
        %v1990 = vld [vmem:[#allocation9 + $0xed0] sm:$0xff]
        %v1991 = vld [vmem:[#allocation9 + $0xed8] sm:$0xff]
        %v1992 = vld [vmem:[#allocation9 + $0xee0] sm:$0xff]
        %v1993 = vld [vmem:[#allocation9 + $0xee8] sm:$0xff]
        %v1994 = vld [vmem:[#allocation9 + $0xef0] sm:$0xff]
        %v1995 = vld [vmem:[#allocation9 + $0xef8] sm:$0xff]
        %v1996 = vld [vmem:[#allocation9 + $0xf00] sm:$0xff]
        %v1997 = vld [vmem:[#allocation9 + $0xf08] sm:$0xff]
        %v1998 = vld [vmem:[#allocation9 + $0xf10] sm:$0xff]
        %v1999 = vld [vmem:[#allocation9 + $0xf18] sm:$0xff]
        %v2000 = vld [vmem:[#allocation9 + $0xf20] sm:$0xff]
        %v2001 = vld [vmem:[#allocation9 + $0xf28] sm:$0xff]
        %v2002 = vld [vmem:[#allocation9 + $0xf30] sm:$0xff]
        %v2003 = vld [vmem:[#allocation9 + $0xf38] sm:$0xff]
        %v2004 = vld [vmem:[#allocation9 + $0xf40] sm:$0xff]
        %v2005 = vld [vmem:[#allocation9 + $0xf48] sm:$0xff]
        %v2006 = vld [vmem:[#allocation9 + $0xf50] sm:$0xff]
        %v2007 = vld [vmem:[#allocation9 + $0xf58] sm:$0xff]
        %v2008 = vld [vmem:[#allocation9 + $0xf60] sm:$0xff]
        %v2009 = vld [vmem:[#allocation9 + $0xf68] sm:$0xff]
        %v2010 = vld [vmem:[#allocation9 + $0xf70] sm:$0xff]
        %v2011 = vld [vmem:[#allocation9 + $0xf78] sm:$0xff]
        %v2012 = vld [vmem:[#allocation9 + $0xf80] sm:$0xff]
        %v2013 = vld [vmem:[#allocation9 + $0xf88] sm:$0xff]
        %v2014 = vld [vmem:[#allocation9 + $0xf90] sm:$0xff]
        %v2015 = vld [vmem:[#allocation9 + $0xf98] sm:$0xff]
        %v2016 = vld [vmem:[#allocation9 + $0xfa0] sm:$0xff]
        %v2017 = vld [vmem:[#allocation9 + $0xfa8] sm:$0xff]
        %v2018 = vld [vmem:[#allocation9 + $0xfb0] sm:$0xff]
        %v2019 = vld [vmem:[#allocation9 + $0xfb8] sm:$0xff]
        %v2020 = vld [vmem:[#allocation9 + $0xfc0] sm:$0xff]
        %v2021 = vld [vmem:[#allocation9 + $0xfc8] sm:$0xff]
        %v2022 = vld [vmem:[#allocation9 + $0xfd0] sm:$0xff]
        %v2023 = vld [vmem:[#allocation9 + $0xfd8] sm:$0xff]
        %v2024 = vld [vmem:[#allocation9 + $0xfe0] sm:$0xff]
        %v2025 = vld [vmem:[#allocation9 + $0xfe8] sm:$0xff]
        %v2026 = vld [vmem:[#allocation9 + $0xff0] sm:$0xff]
        %v2027 = vld [vmem:[#allocation9 + $0xff8] sm:$0xff]
        %v2028 = vld [vmem:[#allocation9 + $0x1000] sm:$0xff]
        %v2029 = vld [vmem:[#allocation9 + $0x1008] sm:$0xff]
        %v2030 = vld [vmem:[#allocation9 + $0x1010] sm:$0xff]
        %v2031 = vld [vmem:[#allocation9 + $0x1018] sm:$0xff]
        %v2032 = vld [vmem:[#allocation9 + $0x1020] sm:$0xff]
        %v2033 = vld [vmem:[#allocation9 + $0x1028] sm:$0xff]
        %v2034 = vld [vmem:[#allocation9 + $0x1030] sm:$0xff]
        %v2035 = vld [vmem:[#allocation9 + $0x1038] sm:$0xff]
        %v2036 = vld [vmem:[#allocation9 + $0x1040] sm:$0xff]
        %v2037 = vld [vmem:[#allocation9 + $0x1048] sm:$0xff]
        %v2038 = vld [vmem:[#allocation9 + $0x1050] sm:$0xff]
        %v2039 = vld [vmem:[#allocation9 + $0x1058] sm:$0xff]
        %v2040 = vld [vmem:[#allocation9 + $0x1060] sm:$0xff]
        %v2041 = vld [vmem:[#allocation9 + $0x1068] sm:$0xff]
        %v2042 = vld [vmem:[#allocation9 + $0x1070] sm:$0xff]
        %v2043 = vld [vmem:[#allocation9 + $0x1078] sm:$0xff]
        %v2044 = vld [vmem:[#allocation9 + $0x1080] sm:$0xff]
        %v2045 = vld [vmem:[#allocation9 + $0x1088] sm:$0xff]
        %v2046 = vld [vmem:[#allocation9 + $0x1090] sm:$0xff]
        %v2047 = vld [vmem:[#allocation9 + $0x1098] sm:$0xff]
        %v2048 = vld [vmem:[#allocation9 + $0x10a0] sm:$0xff]
        %v2049 = vld [vmem:[#allocation9 + $0x10a8] sm:$0xff]
        %v2050 = vld [vmem:[#allocation9 + $0x10b0] sm:$0xff]
        %v2051 = vld [vmem:[#allocation9 + $0x10b8] sm:$0xff]
        %v2052 = vld [vmem:[#allocation9 + $0x10c0] sm:$0xff]
        %v2053 = vld [vmem:[#allocation9 + $0x10c8] sm:$0xff]
        %v2054 = vld [vmem:[#allocation9 + $0x10d0] sm:$0xff]
        %v2055 = vld [vmem:[#allocation9 + $0x10d8] sm:$0xff]
        %v2056 = vld [vmem:[#allocation9 + $0x10e0] sm:$0xff]
        %v2057 = vld [vmem:[#allocation9 + $0x10e8] sm:$0xff]
        %v2058 = vld [vmem:[#allocation9 + $0x10f0] sm:$0xff]
        %v2059 = vld [vmem:[#allocation9 + $0x10f8] sm:$0xff]
        %v2060 = vld [vmem:[#allocation9 + $0x1100] sm:$0xff]
        %v2061 = vld [vmem:[#allocation9 + $0x1108] sm:$0xff]
        %v2062 = vld [vmem:[#allocation9 + $0x1110] sm:$0xff]
        %v2063 = vld [vmem:[#allocation9 + $0x1118] sm:$0xff]
        %v2064 = vld [vmem:[#allocation9 + $0x1120] sm:$0xff]
        %v2065 = vld [vmem:[#allocation9 + $0x1128] sm:$0xff]
        %v2066 = vld [vmem:[#allocation9 + $0x1130] sm:$0xff]
        %v2067 = vld [vmem:[#allocation9 + $0x1138] sm:$0xff]
        %v2068 = vld [vmem:[#allocation9 + $0x1140] sm:$0xff]
        %v2069 = vld [vmem:[#allocation9 + $0x1148] sm:$0xff]
        %v2070 = vld [vmem:[#allocation9 + $0x1150] sm:$0xff]
        %v2071 = vld [vmem:[#allocation9 + $0x1158] sm:$0xff]
        %v2072 = vld [vmem:[#allocation9 + $0x1160] sm:$0xff]
        %v2073 = vld [vmem:[#allocation9 + $0x1168] sm:$0xff]
        %v2074 = vld [vmem:[#allocation9 + $0x1170] sm:$0xff]
        %v2075 = vld [vmem:[#allocation9 + $0x1178] sm:$0xff]
        %v2076 = vld [vmem:[#allocation9 + $0x1180] sm:$0xff]
        %v2077 = vld [vmem:[#allocation9 + $0x1188] sm:$0xff]
        %v2078 = vld [vmem:[#allocation9 + $0x1190] sm:$0xff]
        %v2079 = vld [vmem:[#allocation9 + $0x1198] sm:$0xff]
        %v2080 = vld [vmem:[#allocation9 + $0x11a0] sm:$0xff]
        %v2081 = vld [vmem:[#allocation9 + $0x11a8] sm:$0xff]
        %v2082 = vld [vmem:[#allocation9 + $0x11b0] sm:$0xff]
        %v2083 = vld [vmem:[#allocation9 + $0x11b8] sm:$0xff]
        %v2084 = vld [vmem:[#allocation9 + $0x11c0] sm:$0xff]
        %v2085 = vld [vmem:[#allocation9 + $0x11c8] sm:$0xff]
        %v2086 = vld [vmem:[#allocation9 + $0x11d0] sm:$0xff]
        %v2087 = vld [vmem:[#allocation9 + $0x11d8] sm:$0xff]
        %v2088 = vld [vmem:[#allocation9 + $0x11e0] sm:$0xff]
        %v2089 = vld [vmem:[#allocation9 + $0x11e8] sm:$0xff]
        %v2090 = vld [vmem:[#allocation9 + $0x11f0] sm:$0xff]
        %v2091 = vld [vmem:[#allocation9 + $0x11f8] sm:$0xff]
        %v2092 = vmul.f32 %v1516, %v1484
        %v2093 = vmul.f32 %v1517, %v1485
        %v2094 = vmul.f32 %v1518, %v1486
        %v2095 = vmul.f32 %v1519, %v1487
        %v2096 = vmul.f32 %v1520, %v1488
        %v2097 = vmul.f32 %v1521, %v1489
        %v2098 = vmul.f32 %v1522, %v1490
        %v2099 = vmul.f32 %v1523, %v1491
        %v2100 = vmul.f32 %v1524, %v1492
        %v2101 = vmul.f32 %v1525, %v1493
        %v2102 = vmul.f32 %v1526, %v1494
        %v2103 = vmul.f32 %v1527, %v1495
        %v2104 = vmul.f32 %v1528, %v1496
        %v2105 = vmul.f32 %v1529, %v1497
        %v2106 = vmul.f32 %v1530, %v1498
        %v2107 = vmul.f32 %v1531, %v1499
        %v2108 = vmul.f32 %v1532, %v1500
        %v2109 = vmul.f32 %v1533, %v1501
        %v2110 = vmul.f32 %v1534, %v1502
        %v2111 = vmul.f32 %v1535, %v1503
        %v2112 = vmul.f32 %v1536, %v1504
        %v2113 = vmul.f32 %v1537, %v1505
        %v2114 = vmul.f32 %v1538, %v1506
        %v2115 = vmul.f32 %v1539, %v1507
        %v2116 = vmul.f32 %v1540, %v1508
        %v2117 = vmul.f32 %v1541, %v1509
        %v2118 = vmul.f32 %v1542, %v1510
        %v2119 = vmul.f32 %v1543, %v1511
        %v2120 = vmul.f32 %v1544, %v1512
        %v2121 = vmul.f32 %v1545, %v1513
        %v2122 = vmul.f32 %v1546, %v1514
        %v2123 = vmul.f32 %v1547, %v1515
        %v2124 = vmul.f32 %v1548, %v1484
        %v2125 = vmul.f32 %v1549, %v1485
        %v2126 = vmul.f32 %v1550, %v1486
        %v2127 = vmul.f32 %v1551, %v1487
        %v2128 = vmul.f32 %v1552, %v1488
        %v2129 = vmul.f32 %v1553, %v1489
        %v2130 = vmul.f32 %v1554, %v1490
        %v2131 = vmul.f32 %v1555, %v1491
        %v2132 = vmul.f32 %v1556, %v1492
        %v2133 = vmul.f32 %v1557, %v1493
        %v2134 = vmul.f32 %v1558, %v1494
        %v2135 = vmul.f32 %v1559, %v1495
        %v2136 = vmul.f32 %v1560, %v1496
        %v2137 = vmul.f32 %v1561, %v1497
        %v2138 = vmul.f32 %v1562, %v1498
        %v2139 = vmul.f32 %v1563, %v1499
        %v2140 = vmul.f32 %v1564, %v1500
        %v2141 = vmul.f32 %v1565, %v1501
        %v2142 = vmul.f32 %v1566, %v1502
        %v2143 = vmul.f32 %v1567, %v1503
        %v2144 = vmul.f32 %v1568, %v1504
        %v2145 = vmul.f32 %v1569, %v1505
        %v2146 = vmul.f32 %v1570, %v1506
        %v2147 = vmul.f32 %v1571, %v1507
        %v2148 = vmul.f32 %v1572, %v1508
        %v2149 = vmul.f32 %v1573, %v1509
        %v2150 = vmul.f32 %v1574, %v1510
        %v2151 = vmul.f32 %v1575, %v1511
        %v2152 = vmul.f32 %v1576, %v1512
        %v2153 = vmul.f32 %v1577, %v1513
        %v2154 = vmul.f32 %v1578, %v1514
        %v2155 = vmul.f32 %v1579, %v1515
        %v2156 = vmul.f32 %v1580, %v1484
        %v2157 = vmul.f32 %v1581, %v1485
        %v2158 = vmul.f32 %v1582, %v1486
        %v2159 = vmul.f32 %v1583, %v1487
        %v2160 = vmul.f32 %v1584, %v1488
        %v2161 = vmul.f32 %v1585, %v1489
        %v2162 = vmul.f32 %v1586, %v1490
        %v2163 = vmul.f32 %v1587, %v1491
        %v2164 = vmul.f32 %v1588, %v1492
        %v2165 = vmul.f32 %v1589, %v1493
        %v2166 = vmul.f32 %v1590, %v1494
        %v2167 = vmul.f32 %v1591, %v1495
        %v2168 = vmul.f32 %v1592, %v1496
        %v2169 = vmul.f32 %v1593, %v1497
        %v2170 = vmul.f32 %v1594, %v1498
        %v2171 = vmul.f32 %v1595, %v1499
        %v2172 = vmul.f32 %v1596, %v1500
        %v2173 = vmul.f32 %v1597, %v1501
        %v2174 = vmul.f32 %v1598, %v1502
        %v2175 = vmul.f32 %v1599, %v1503
        %v2176 = vmul.f32 %v1600, %v1504
        %v2177 = vmul.f32 %v1601, %v1505
        %v2178 = vmul.f32 %v1602, %v1506
        %v2179 = vmul.f32 %v1603, %v1507
        %v2180 = vmul.f32 %v1604, %v1508
        %v2181 = vmul.f32 %v1605, %v1509
        %v2182 = vmul.f32 %v1606, %v1510
        %v2183 = vmul.f32 %v1607, %v1511
        %v2184 = vmul.f32 %v1608, %v1512
        %v2185 = vmul.f32 %v1609, %v1513
        %v2186 = vmul.f32 %v1610, %v1514
        %v2187 = vmul.f32 %v1611, %v1515
        %v2188 = vmul.f32 %v1612, %v1484
        %v2189 = vmul.f32 %v1613, %v1485
        %v2190 = vmul.f32 %v1614, %v1486
        %v2191 = vmul.f32 %v1615, %v1487
        %v2192 = vmul.f32 %v1616, %v1488
        %v2193 = vmul.f32 %v1617, %v1489
        %v2194 = vmul.f32 %v1618, %v1490
        %v2195 = vmul.f32 %v1619, %v1491
        %v2196 = vmul.f32 %v1620, %v1492
        %v2197 = vmul.f32 %v1621, %v1493
        %v2198 = vmul.f32 %v1622, %v1494
        %v2199 = vmul.f32 %v1623, %v1495
        %v2200 = vmul.f32 %v1624, %v1496
        %v2201 = vmul.f32 %v1625, %v1497
        %v2202 = vmul.f32 %v1626, %v1498
        %v2203 = vmul.f32 %v1627, %v1499
        %v2204 = vmul.f32 %v1628, %v1500
        %v2205 = vmul.f32 %v1629, %v1501
        %v2206 = vmul.f32 %v1630, %v1502
        %v2207 = vmul.f32 %v1631, %v1503
        %v2208 = vmul.f32 %v1632, %v1504
        %v2209 = vmul.f32 %v1633, %v1505
        %v2210 = vmul.f32 %v1634, %v1506
        %v2211 = vmul.f32 %v1635, %v1507
        %v2212 = vmul.f32 %v1636, %v1508
        %v2213 = vmul.f32 %v1637, %v1509
        %v2214 = vmul.f32 %v1638, %v1510
        %v2215 = vmul.f32 %v1639, %v1511
        %v2216 = vmul.f32 %v1640, %v1512
        %v2217 = vmul.f32 %v1641, %v1513
        %v2218 = vmul.f32 %v1642, %v1514
        %v2219 = vmul.f32 %v1643, %v1515
        %v2220 = vmul.f32 %v1644, %v1484
        %v2221 = vmul.f32 %v1645, %v1485
        %v2222 = vmul.f32 %v1646, %v1486
        %v2223 = vmul.f32 %v1647, %v1487
        %v2224 = vmul.f32 %v1648, %v1488
        %v2225 = vmul.f32 %v1649, %v1489
        %v2226 = vmul.f32 %v1650, %v1490
        %v2227 = vmul.f32 %v1651, %v1491
        %v2228 = vmul.f32 %v1652, %v1492
        %v2229 = vmul.f32 %v1653, %v1493
        %v2230 = vmul.f32 %v1654, %v1494
        %v2231 = vmul.f32 %v1655, %v1495
        %v2232 = vmul.f32 %v1656, %v1496
        %v2233 = vmul.f32 %v1657, %v1497
        %v2234 = vmul.f32 %v1658, %v1498
        %v2235 = vmul.f32 %v1659, %v1499
        %v2236 = vmul.f32 %v1660, %v1500
        %v2237 = vmul.f32 %v1661, %v1501
        %v2238 = vmul.f32 %v1662, %v1502
        %v2239 = vmul.f32 %v1663, %v1503
        %v2240 = vmul.f32 %v1664, %v1504
        %v2241 = vmul.f32 %v1665, %v1505
        %v2242 = vmul.f32 %v1666, %v1506
        %v2243 = vmul.f32 %v1667, %v1507
        %v2244 = vmul.f32 %v1668, %v1508
        %v2245 = vmul.f32 %v1669, %v1509
        %v2246 = vmul.f32 %v1670, %v1510
        %v2247 = vmul.f32 %v1671, %v1511
        %v2248 = vmul.f32 %v1672, %v1512
        %v2249 = vmul.f32 %v1673, %v1513
        %v2250 = vmul.f32 %v1674, %v1514
        %v2251 = vmul.f32 %v1675, %v1515
        %v2252 = vmul.f32 %v1676, %v1484
        %v2253 = vmul.f32 %v1677, %v1485
        %v2254 = vmul.f32 %v1678, %v1486
        %v2255 = vmul.f32 %v1679, %v1487
        %v2256 = vmul.f32 %v1680, %v1488
        %v2257 = vmul.f32 %v1681, %v1489
        %v2258 = vmul.f32 %v1682, %v1490
        %v2259 = vmul.f32 %v1683, %v1491
        %v2260 = vmul.f32 %v1684, %v1492
        %v2261 = vmul.f32 %v1685, %v1493
        %v2262 = vmul.f32 %v1686, %v1494
        %v2263 = vmul.f32 %v1687, %v1495
        %v2264 = vmul.f32 %v1688, %v1496
        %v2265 = vmul.f32 %v1689, %v1497
        %v2266 = vmul.f32 %v1690, %v1498
        %v2267 = vmul.f32 %v1691, %v1499
        %v2268 = vmul.f32 %v1692, %v1500
        %v2269 = vmul.f32 %v1693, %v1501
        %v2270 = vmul.f32 %v1694, %v1502
        %v2271 = vmul.f32 %v1695, %v1503
        %v2272 = vmul.f32 %v1696, %v1504
        %v2273 = vmul.f32 %v1697, %v1505
        %v2274 = vmul.f32 %v1698, %v1506
        %v2275 = vmul.f32 %v1699, %v1507
        %v2276 = vmul.f32 %v1700, %v1508
        %v2277 = vmul.f32 %v1701, %v1509
        %v2278 = vmul.f32 %v1702, %v1510
        %v2279 = vmul.f32 %v1703, %v1511
        %v2280 = vmul.f32 %v1704, %v1512
        %v2281 = vmul.f32 %v1705, %v1513
        %v2282 = vmul.f32 %v1706, %v1514
        %v2283 = vmul.f32 %v1707, %v1515
        %v2284 = vmul.f32 %v1708, %v1484
        %v2285 = vmul.f32 %v1709, %v1485
        %v2286 = vmul.f32 %v1710, %v1486
        %v2287 = vmul.f32 %v1711, %v1487
        %v2288 = vmul.f32 %v1712, %v1488
        %v2289 = vmul.f32 %v1713, %v1489
        %v2290 = vmul.f32 %v1714, %v1490
        %v2291 = vmul.f32 %v1715, %v1491
        %v2292 = vmul.f32 %v1716, %v1492
        %v2293 = vmul.f32 %v1717, %v1493
        %v2294 = vmul.f32 %v1718, %v1494
        %v2295 = vmul.f32 %v1719, %v1495
        %v2296 = vmul.f32 %v1720, %v1496
        %v2297 = vmul.f32 %v1721, %v1497
        %v2298 = vmul.f32 %v1722, %v1498
        %v2299 = vmul.f32 %v1723, %v1499
        %v2300 = vmul.f32 %v1724, %v1500
        %v2301 = vmul.f32 %v1725, %v1501
        %v2302 = vmul.f32 %v1726, %v1502
        %v2303 = vmul.f32 %v1727, %v1503
        %v2304 = vmul.f32 %v1728, %v1504
        %v2305 = vmul.f32 %v1729, %v1505
        %v2306 = vmul.f32 %v1730, %v1506
        %v2307 = vmul.f32 %v1731, %v1507
        %v2308 = vmul.f32 %v1732, %v1508
        %v2309 = vmul.f32 %v1733, %v1509
        %v2310 = vmul.f32 %v1734, %v1510
        %v2311 = vmul.f32 %v1735, %v1511
        %v2312 = vmul.f32 %v1736, %v1512
        %v2313 = vmul.f32 %v1737, %v1513
        %v2314 = vmul.f32 %v1738, %v1514
        %v2315 = vmul.f32 %v1739, %v1515
        %v2316 = vmul.f32 %v1740, %v1484
        %v2317 = vmul.f32 %v1741, %v1485
        %v2318 = vmul.f32 %v1742, %v1486
        %v2319 = vmul.f32 %v1743, %v1487
        %v2320 = vmul.f32 %v1744, %v1488
        %v2321 = vmul.f32 %v1745, %v1489
        %v2322 = vmul.f32 %v1746, %v1490
        %v2323 = vmul.f32 %v1747, %v1491
        %v2324 = vmul.f32 %v1748, %v1492
        %v2325 = vmul.f32 %v1749, %v1493
        %v2326 = vmul.f32 %v1750, %v1494
        %v2327 = vmul.f32 %v1751, %v1495
        %v2328 = vmul.f32 %v1752, %v1496
        %v2329 = vmul.f32 %v1753, %v1497
        %v2330 = vmul.f32 %v1754, %v1498
        %v2331 = vmul.f32 %v1755, %v1499
        %v2332 = vmul.f32 %v1756, %v1500
        %v2333 = vmul.f32 %v1757, %v1501
        %v2334 = vmul.f32 %v1758, %v1502
        %v2335 = vmul.f32 %v1759, %v1503
        %v2336 = vmul.f32 %v1760, %v1504
        %v2337 = vmul.f32 %v1761, %v1505
        %v2338 = vmul.f32 %v1762, %v1506
        %v2339 = vmul.f32 %v1763, %v1507
        %v2340 = vmul.f32 %v1764, %v1508
        %v2341 = vmul.f32 %v1765, %v1509
        %v2342 = vmul.f32 %v1766, %v1510
        %v2343 = vmul.f32 %v1767, %v1511
        %v2344 = vmul.f32 %v1768, %v1512
        %v2345 = vmul.f32 %v1769, %v1513
        %v2346 = vmul.f32 %v1770, %v1514
        %v2347 = vmul.f32 %v1771, %v1515
        %v2348 = vmul.f32 %v1772, %v1484
        %v2349 = vmul.f32 %v1773, %v1485
        %v2350 = vmul.f32 %v1774, %v1486
        %v2351 = vmul.f32 %v1775, %v1487
        %v2352 = vmul.f32 %v1776, %v1488
        %v2353 = vmul.f32 %v1777, %v1489
        %v2354 = vmul.f32 %v1778, %v1490
        %v2355 = vmul.f32 %v1779, %v1491
        %v2356 = vmul.f32 %v1780, %v1492
        %v2357 = vmul.f32 %v1781, %v1493
        %v2358 = vmul.f32 %v1782, %v1494
        %v2359 = vmul.f32 %v1783, %v1495
        %v2360 = vmul.f32 %v1784, %v1496
        %v2361 = vmul.f32 %v1785, %v1497
        %v2362 = vmul.f32 %v1786, %v1498
        %v2363 = vmul.f32 %v1787, %v1499
        %v2364 = vmul.f32 %v1788, %v1500
        %v2365 = vmul.f32 %v1789, %v1501
        %v2366 = vmul.f32 %v1790, %v1502
        %v2367 = vmul.f32 %v1791, %v1503
        %v2368 = vmul.f32 %v1792, %v1504
        %v2369 = vmul.f32 %v1793, %v1505
        %v2370 = vmul.f32 %v1794, %v1506
        %v2371 = vmul.f32 %v1795, %v1507
        %v2372 = vmul.f32 %v1796, %v1508
        %v2373 = vmul.f32 %v1797, %v1509
        %v2374 = vmul.f32 %v1798, %v1510
        %v2375 = vmul.f32 %v1799, %v1511
        %v2376 = vmul.f32 %v1800, %v1512
        %v2377 = vmul.f32 %v1801, %v1513
        %v2378 = vmul.f32 %v1802, %v1514
        %v2379 = vmul.f32 %v1803, %v1515
        %v2380 = vmul.f32 %v1804, %v1484
        %v2381 = vmul.f32 %v1805, %v1485
        %v2382 = vmul.f32 %v1806, %v1486
        %v2383 = vmul.f32 %v1807, %v1487
        %v2384 = vmul.f32 %v1808, %v1488
        %v2385 = vmul.f32 %v1809, %v1489
        %v2386 = vmul.f32 %v1810, %v1490
        %v2387 = vmul.f32 %v1811, %v1491
        %v2388 = vmul.f32 %v1812, %v1492
        %v2389 = vmul.f32 %v1813, %v1493
        %v2390 = vmul.f32 %v1814, %v1494
        %v2391 = vmul.f32 %v1815, %v1495
        %v2392 = vmul.f32 %v1816, %v1496
        %v2393 = vmul.f32 %v1817, %v1497
        %v2394 = vmul.f32 %v1818, %v1498
        %v2395 = vmul.f32 %v1819, %v1499
        %v2396 = vmul.f32 %v1820, %v1500
        %v2397 = vmul.f32 %v1821, %v1501
        %v2398 = vmul.f32 %v1822, %v1502
        %v2399 = vmul.f32 %v1823, %v1503
        %v2400 = vmul.f32 %v1824, %v1504
        %v2401 = vmul.f32 %v1825, %v1505
        %v2402 = vmul.f32 %v1826, %v1506
        %v2403 = vmul.f32 %v1827, %v1507
        %v2404 = vmul.f32 %v1828, %v1508
        %v2405 = vmul.f32 %v1829, %v1509
        %v2406 = vmul.f32 %v1830, %v1510
        %v2407 = vmul.f32 %v1831, %v1511
        %v2408 = vmul.f32 %v1832, %v1512
        %v2409 = vmul.f32 %v1833, %v1513
        %v2410 = vmul.f32 %v1834, %v1514
        %v2411 = vmul.f32 %v1835, %v1515
        %v2412 = vmul.f32 %v1836, %v1484
        %v2413 = vmul.f32 %v1837, %v1485
        %v2414 = vmul.f32 %v1838, %v1486
        %v2415 = vmul.f32 %v1839, %v1487
        %v2416 = vmul.f32 %v1840, %v1488
        %v2417 = vmul.f32 %v1841, %v1489
        %v2418 = vmul.f32 %v1842, %v1490
        %v2419 = vmul.f32 %v1843, %v1491
        %v2420 = vmul.f32 %v1844, %v1492
        %v2421 = vmul.f32 %v1845, %v1493
        %v2422 = vmul.f32 %v1846, %v1494
        %v2423 = vmul.f32 %v1847, %v1495
        %v2424 = vmul.f32 %v1848, %v1496
        %v2425 = vmul.f32 %v1849, %v1497
        %v2426 = vmul.f32 %v1850, %v1498
        %v2427 = vmul.f32 %v1851, %v1499
        %v2428 = vmul.f32 %v1852, %v1500
        %v2429 = vmul.f32 %v1853, %v1501
        %v2430 = vmul.f32 %v1854, %v1502
        %v2431 = vmul.f32 %v1855, %v1503
        %v2432 = vmul.f32 %v1856, %v1504
        %v2433 = vmul.f32 %v1857, %v1505
        %v2434 = vmul.f32 %v1858, %v1506
        %v2435 = vmul.f32 %v1859, %v1507
        %v2436 = vmul.f32 %v1860, %v1508
        %v2437 = vmul.f32 %v1861, %v1509
        %v2438 = vmul.f32 %v1862, %v1510
        %v2439 = vmul.f32 %v1863, %v1511
        %v2440 = vmul.f32 %v1864, %v1512
        %v2441 = vmul.f32 %v1865, %v1513
        %v2442 = vmul.f32 %v1866, %v1514
        %v2443 = vmul.f32 %v1867, %v1515
        %v2444 = vmul.f32 %v1868, %v1484
        %v2445 = vmul.f32 %v1869, %v1485
        %v2446 = vmul.f32 %v1870, %v1486
        %v2447 = vmul.f32 %v1871, %v1487
        %v2448 = vmul.f32 %v1872, %v1488
        %v2449 = vmul.f32 %v1873, %v1489
        %v2450 = vmul.f32 %v1874, %v1490
        %v2451 = vmul.f32 %v1875, %v1491
        %v2452 = vmul.f32 %v1876, %v1492
        %v2453 = vmul.f32 %v1877, %v1493
        %v2454 = vmul.f32 %v1878, %v1494
        %v2455 = vmul.f32 %v1879, %v1495
        %v2456 = vmul.f32 %v1880, %v1496
        %v2457 = vmul.f32 %v1881, %v1497
        %v2458 = vmul.f32 %v1882, %v1498
        %v2459 = vmul.f32 %v1883, %v1499
        %v2460 = vmul.f32 %v1884, %v1500
        %v2461 = vmul.f32 %v1885, %v1501
        %v2462 = vmul.f32 %v1886, %v1502
        %v2463 = vmul.f32 %v1887, %v1503
        %v2464 = vmul.f32 %v1888, %v1504
        %v2465 = vmul.f32 %v1889, %v1505
        %v2466 = vmul.f32 %v1890, %v1506
        %v2467 = vmul.f32 %v1891, %v1507
        %v2468 = vmul.f32 %v1892, %v1508
        %v2469 = vmul.f32 %v1893, %v1509
        %v2470 = vmul.f32 %v1894, %v1510
        %v2471 = vmul.f32 %v1895, %v1511
        %v2472 = vmul.f32 %v1896, %v1512
        %v2473 = vmul.f32 %v1897, %v1513
        %v2474 = vmul.f32 %v1898, %v1514
        %v2475 = vmul.f32 %v1899, %v1515
        %v2476 = vmul.f32 %v1900, %v1484
        %v2477 = vmul.f32 %v1901, %v1485
        %v2478 = vmul.f32 %v1902, %v1486
        %v2479 = vmul.f32 %v1903, %v1487
        %v2480 = vmul.f32 %v1904, %v1488
        %v2481 = vmul.f32 %v1905, %v1489
        %v2482 = vmul.f32 %v1906, %v1490
        %v2483 = vmul.f32 %v1907, %v1491
        %v2484 = vmul.f32 %v1908, %v1492
        %v2485 = vmul.f32 %v1909, %v1493
        %v2486 = vmul.f32 %v1910, %v1494
        %v2487 = vmul.f32 %v1911, %v1495
        %v2488 = vmul.f32 %v1912, %v1496
        %v2489 = vmul.f32 %v1913, %v1497
        %v2490 = vmul.f32 %v1914, %v1498
        %v2491 = vmul.f32 %v1915, %v1499
        %v2492 = vmul.f32 %v1916, %v1500
        %v2493 = vmul.f32 %v1917, %v1501
        %v2494 = vmul.f32 %v1918, %v1502
        %v2495 = vmul.f32 %v1919, %v1503
        %v2496 = vmul.f32 %v1920, %v1504
        %v2497 = vmul.f32 %v1921, %v1505
        %v2498 = vmul.f32 %v1922, %v1506
        %v2499 = vmul.f32 %v1923, %v1507
        %v2500 = vmul.f32 %v1924, %v1508
        %v2501 = vmul.f32 %v1925, %v1509
        %v2502 = vmul.f32 %v1926, %v1510
        %v2503 = vmul.f32 %v1927, %v1511
        %v2504 = vmul.f32 %v1928, %v1512
        %v2505 = vmul.f32 %v1929, %v1513
        %v2506 = vmul.f32 %v1930, %v1514
        %v2507 = vmul.f32 %v1931, %v1515
        %v2508 = vmul.f32 %v1932, %v1484
        %v2509 = vmul.f32 %v1933, %v1485
        %v2510 = vmul.f32 %v1934, %v1486
        %v2511 = vmul.f32 %v1935, %v1487
        %v2512 = vmul.f32 %v1936, %v1488
        %v2513 = vmul.f32 %v1937, %v1489
        %v2514 = vmul.f32 %v1938, %v1490
        %v2515 = vmul.f32 %v1939, %v1491
        %v2516 = vmul.f32 %v1940, %v1492
        %v2517 = vmul.f32 %v1941, %v1493
        %v2518 = vmul.f32 %v1942, %v1494
        %v2519 = vmul.f32 %v1943, %v1495
        %v2520 = vmul.f32 %v1944, %v1496
        %v2521 = vmul.f32 %v1945, %v1497
        %v2522 = vmul.f32 %v1946, %v1498
        %v2523 = vmul.f32 %v1947, %v1499
        %v2524 = vmul.f32 %v1948, %v1500
        %v2525 = vmul.f32 %v1949, %v1501
        %v2526 = vmul.f32 %v1950, %v1502
        %v2527 = vmul.f32 %v1951, %v1503
        %v2528 = vmul.f32 %v1952, %v1504
        %v2529 = vmul.f32 %v1953, %v1505
        %v2530 = vmul.f32 %v1954, %v1506
        %v2531 = vmul.f32 %v1955, %v1507
        %v2532 = vmul.f32 %v1956, %v1508
        %v2533 = vmul.f32 %v1957, %v1509
        %v2534 = vmul.f32 %v1958, %v1510
        %v2535 = vmul.f32 %v1959, %v1511
        %v2536 = vmul.f32 %v1960, %v1512
        %v2537 = vmul.f32 %v1961, %v1513
        %v2538 = vmul.f32 %v1962, %v1514
        %v2539 = vmul.f32 %v1963, %v1515
        %v2540 = vmul.f32 %v1964, %v1484
        %v2541 = vmul.f32 %v1965, %v1485
        %v2542 = vmul.f32 %v1966, %v1486
        %v2543 = vmul.f32 %v1967, %v1487
        %v2544 = vmul.f32 %v1968, %v1488
        %v2545 = vmul.f32 %v1969, %v1489
        %v2546 = vmul.f32 %v1970, %v1490
        %v2547 = vmul.f32 %v1971, %v1491
        %v2548 = vmul.f32 %v1972, %v1492
        %v2549 = vmul.f32 %v1973, %v1493
        %v2550 = vmul.f32 %v1974, %v1494
        %v2551 = vmul.f32 %v1975, %v1495
        %v2552 = vmul.f32 %v1976, %v1496
        %v2553 = vmul.f32 %v1977, %v1497
        %v2554 = vmul.f32 %v1978, %v1498
        %v2555 = vmul.f32 %v1979, %v1499
        %v2556 = vmul.f32 %v1980, %v1500
        %v2557 = vmul.f32 %v1981, %v1501
        %v2558 = vmul.f32 %v1982, %v1502
        %v2559 = vmul.f32 %v1983, %v1503
        %v2560 = vmul.f32 %v1984, %v1504
        %v2561 = vmul.f32 %v1985, %v1505
        %v2562 = vmul.f32 %v1986, %v1506
        %v2563 = vmul.f32 %v1987, %v1507
        %v2564 = vmul.f32 %v1988, %v1508
        %v2565 = vmul.f32 %v1989, %v1509
        %v2566 = vmul.f32 %v1990, %v1510
        %v2567 = vmul.f32 %v1991, %v1511
        %v2568 = vmul.f32 %v1992, %v1512
        %v2569 = vmul.f32 %v1993, %v1513
        %v2570 = vmul.f32 %v1994, %v1514
        %v2571 = vmul.f32 %v1995, %v1515
        %v2572 = vmul.f32 %v1996, %v1484
        %v2573 = vmul.f32 %v1997, %v1485
        %v2574 = vmul.f32 %v1998, %v1486
        %v2575 = vmul.f32 %v1999, %v1487
        %v2576 = vmul.f32 %v2000, %v1488
        %v2577 = vmul.f32 %v2001, %v1489
        %v2578 = vmul.f32 %v2002, %v1490
        %v2579 = vmul.f32 %v2003, %v1491
        %v2580 = vmul.f32 %v2004, %v1492
        %v2581 = vmul.f32 %v2005, %v1493
        %v2582 = vmul.f32 %v2006, %v1494
        %v2583 = vmul.f32 %v2007, %v1495
        %v2584 = vmul.f32 %v2008, %v1496
        %v2585 = vmul.f32 %v2009, %v1497
        %v2586 = vmul.f32 %v2010, %v1498
        %v2587 = vmul.f32 %v2011, %v1499
        %v2588 = vmul.f32 %v2012, %v1500
        %v2589 = vmul.f32 %v2013, %v1501
        %v2590 = vmul.f32 %v2014, %v1502
        %v2591 = vmul.f32 %v2015, %v1503
        %v2592 = vmul.f32 %v2016, %v1504
        %v2593 = vmul.f32 %v2017, %v1505
        %v2594 = vmul.f32 %v2018, %v1506
        %v2595 = vmul.f32 %v2019, %v1507
        %v2596 = vmul.f32 %v2020, %v1508
        %v2597 = vmul.f32 %v2021, %v1509
        %v2598 = vmul.f32 %v2022, %v1510
        %v2599 = vmul.f32 %v2023, %v1511
        %v2600 = vmul.f32 %v2024, %v1512
        %v2601 = vmul.f32 %v2025, %v1513
        %v2602 = vmul.f32 %v2026, %v1514
        %v2603 = vmul.f32 %v2027, %v1515
        %v2604 = vmul.f32 %v2028, %v1484
        %v2605 = vmul.f32 %v2029, %v1485
        %v2606 = vmul.f32 %v2030, %v1486
        %v2607 = vmul.f32 %v2031, %v1487
        %v2608 = vmul.f32 %v2032, %v1488
        %v2609 = vmul.f32 %v2033, %v1489
        %v2610 = vmul.f32 %v2034, %v1490
        %v2611 = vmul.f32 %v2035, %v1491
        %v2612 = vmul.f32 %v2036, %v1492
        %v2613 = vmul.f32 %v2037, %v1493
        %v2614 = vmul.f32 %v2038, %v1494
        %v2615 = vmul.f32 %v2039, %v1495
        %v2616 = vmul.f32 %v2040, %v1496
        %v2617 = vmul.f32 %v2041, %v1497
        %v2618 = vmul.f32 %v2042, %v1498
        %v2619 = vmul.f32 %v2043, %v1499
        %v2620 = vmul.f32 %v2044, %v1500
        %v2621 = vmul.f32 %v2045, %v1501
        %v2622 = vmul.f32 %v2046, %v1502
        %v2623 = vmul.f32 %v2047, %v1503
        %v2624 = vmul.f32 %v2048, %v1504
        %v2625 = vmul.f32 %v2049, %v1505
        %v2626 = vmul.f32 %v2050, %v1506
        %v2627 = vmul.f32 %v2051, %v1507
        %v2628 = vmul.f32 %v2052, %v1508
        %v2629 = vmul.f32 %v2053, %v1509
        %v2630 = vmul.f32 %v2054, %v1510
        %v2631 = vmul.f32 %v2055, %v1511
        %v2632 = vmul.f32 %v2056, %v1512
        %v2633 = vmul.f32 %v2057, %v1513
        %v2634 = vmul.f32 %v2058, %v1514
        %v2635 = vmul.f32 %v2059, %v1515
        %v2636 = vmul.f32 %v2060, %v1484
        %v2637 = vmul.f32 %v2061, %v1485
        %v2638 = vmul.f32 %v2062, %v1486
        %v2639 = vmul.f32 %v2063, %v1487
        %v2640 = vmul.f32 %v2064, %v1488
        %v2641 = vmul.f32 %v2065, %v1489
        %v2642 = vmul.f32 %v2066, %v1490
        %v2643 = vmul.f32 %v2067, %v1491
        %v2644 = vmul.f32 %v2068, %v1492
        %v2645 = vmul.f32 %v2069, %v1493
        %v2646 = vmul.f32 %v2070, %v1494
        %v2647 = vmul.f32 %v2071, %v1495
        %v2648 = vmul.f32 %v2072, %v1496
        %v2649 = vmul.f32 %v2073, %v1497
        %v2650 = vmul.f32 %v2074, %v1498
        %v2651 = vmul.f32 %v2075, %v1499
        %v2652 = vmul.f32 %v2076, %v1500
        %v2653 = vmul.f32 %v2077, %v1501
        %v2654 = vmul.f32 %v2078, %v1502
        %v2655 = vmul.f32 %v2079, %v1503
        %v2656 = vmul.f32 %v2080, %v1504
        %v2657 = vmul.f32 %v2081, %v1505
        %v2658 = vmul.f32 %v2082, %v1506
        %v2659 = vmul.f32 %v2083, %v1507
        %v2660 = vmul.f32 %v2084, %v1508
        %v2661 = vmul.f32 %v2085, %v1509
        %v2662 = vmul.f32 %v2086, %v1510
        %v2663 = vmul.f32 %v2087, %v1511
        %v2664 = vmul.f32 %v2088, %v1512
        %v2665 = vmul.f32 %v2089, %v1513
        %v2666 = vmul.f32 %v2090, %v1514
        %v2667 = vmul.f32 %v2091, %v1515
        %v2668 = vadd.f32 %v2092, %v2096
        %v2669 = vadd.f32 %v2668, %v2100
        %v2670 = vadd.f32 %v2669, %v2104
        %v2671 = vadd.f32 %v2670, %v2108
        %v2672 = vadd.f32 %v2671, %v2112
        %v2673 = vadd.f32 %v2672, %v2116
        %v2674 = vadd.f32 %v2673, %v2120
        %v2675 = vrot.slane %v2674, 4
        %v2676 = vadd.f32 %v2674, %v2675
        %v2677 = vrot.slane %v2676, 2
        %v2678 = vadd.f32 %v2676, %v2677
        %v2679 = vrot.slane %v2678, 1
        %v2680 = vadd.f32 %v2678, %v2679
        %v2681 = vadd.f32 %v2093, %v2097
        %v2682 = vadd.f32 %v2681, %v2101
        %v2683 = vadd.f32 %v2682, %v2105
        %v2684 = vadd.f32 %v2683, %v2109
        %v2685 = vadd.f32 %v2684, %v2113
        %v2686 = vadd.f32 %v2685, %v2117
        %v2687 = vadd.f32 %v2686, %v2121
        %v2688 = vrot.slane %v2687, 4
        %v2689 = vadd.f32 %v2687, %v2688
        %v2690 = vrot.slane %v2689, 2
        %v2691 = vadd.f32 %v2689, %v2690
        %v2692 = vrot.slane %v2691, 1
        %v2693 = vadd.f32 %v2691, %v2692
        %v2694 = vadd.f32 %v2094, %v2098
        %v2695 = vadd.f32 %v2694, %v2102
        %v2696 = vadd.f32 %v2695, %v2106
        %v2697 = vadd.f32 %v2696, %v2110
        %v2698 = vadd.f32 %v2697, %v2114
        %v2699 = vadd.f32 %v2698, %v2118
        %v2700 = vadd.f32 %v2699, %v2122
        %v2701 = vrot.slane %v2700, 4
        %v2702 = vadd.f32 %v2700, %v2701
        %v2703 = vrot.slane %v2702, 2
        %v2704 = vadd.f32 %v2702, %v2703
        %v2705 = vrot.slane %v2704, 1
        %v2706 = vadd.f32 %v2704, %v2705
        %v2707 = vadd.f32 %v2095, %v2099
        %v2708 = vadd.f32 %v2707, %v2103
        %v2709 = vadd.f32 %v2708, %v2107
        %v2710 = vadd.f32 %v2709, %v2111
        %v2711 = vadd.f32 %v2710, %v2115
        %v2712 = vadd.f32 %v2711, %v2119
        %v2713 = vadd.f32 %v2712, %v2123
        %v2714 = vrot.slane %v2713, 4
        %v2715 = vadd.f32 %v2713, %v2714
        %v2716 = vrot.slane %v2715, 2
        %v2717 = vadd.f32 %v2715, %v2716
        %v2718 = vrot.slane %v2717, 1
        %v2719 = vadd.f32 %v2717, %v2718
        %v2720 = vadd.f32 %v2124, %v2128
        %v2721 = vadd.f32 %v2720, %v2132
        %v2722 = vadd.f32 %v2721, %v2136
        %v2723 = vadd.f32 %v2722, %v2140
        %v2724 = vadd.f32 %v2723, %v2144
        %v2725 = vadd.f32 %v2724, %v2148
        %v2726 = vadd.f32 %v2725, %v2152
        %v2727 = vrot.slane %v2726, 4
        %v2728 = vadd.f32 %v2726, %v2727
        %v2729 = vrot.slane %v2728, 2
        %v2730 = vadd.f32 %v2728, %v2729
        %v2731 = vrot.slane %v2730, 1
        %v2732 = vadd.f32 %v2730, %v2731
        %v2733 = vadd.f32 %v2125, %v2129
        %v2734 = vadd.f32 %v2733, %v2133
        %v2735 = vadd.f32 %v2734, %v2137
        %v2736 = vadd.f32 %v2735, %v2141
        %v2737 = vadd.f32 %v2736, %v2145
        %v2738 = vadd.f32 %v2737, %v2149
        %v2739 = vadd.f32 %v2738, %v2153
        %v2740 = vrot.slane %v2739, 4
        %v2741 = vadd.f32 %v2739, %v2740
        %v2742 = vrot.slane %v2741, 2
        %v2743 = vadd.f32 %v2741, %v2742
        %v2744 = vrot.slane %v2743, 1
        %v2745 = vadd.f32 %v2743, %v2744
        %v2746 = vadd.f32 %v2126, %v2130
        %v2747 = vadd.f32 %v2746, %v2134
        %v2748 = vadd.f32 %v2747, %v2138
        %v2749 = vadd.f32 %v2748, %v2142
        %v2750 = vadd.f32 %v2749, %v2146
        %v2751 = vadd.f32 %v2750, %v2150
        %v2752 = vadd.f32 %v2751, %v2154
        %v2753 = vrot.slane %v2752, 4
        %v2754 = vadd.f32 %v2752, %v2753
        %v2755 = vrot.slane %v2754, 2
        %v2756 = vadd.f32 %v2754, %v2755
        %v2757 = vrot.slane %v2756, 1
        %v2758 = vadd.f32 %v2756, %v2757
        %v2759 = vadd.f32 %v2127, %v2131
        %v2760 = vadd.f32 %v2759, %v2135
        %v2761 = vadd.f32 %v2760, %v2139
        %v2762 = vadd.f32 %v2761, %v2143
        %v2763 = vadd.f32 %v2762, %v2147
        %v2764 = vadd.f32 %v2763, %v2151
        %v2765 = vadd.f32 %v2764, %v2155
        %v2766 = vrot.slane %v2765, 4
        %v2767 = vadd.f32 %v2765, %v2766
        %v2768 = vrot.slane %v2767, 2
        %v2769 = vadd.f32 %v2767, %v2768
        %v2770 = vrot.slane %v2769, 1
        %v2771 = vadd.f32 %v2769, %v2770
        %v2772 = vadd.f32 %v2156, %v2160
        %v2773 = vadd.f32 %v2772, %v2164
        %v2774 = vadd.f32 %v2773, %v2168
        %v2775 = vadd.f32 %v2774, %v2172
        %v2776 = vadd.f32 %v2775, %v2176
        %v2777 = vadd.f32 %v2776, %v2180
        %v2778 = vadd.f32 %v2777, %v2184
        %v2779 = vrot.slane %v2778, 4
        %v2780 = vadd.f32 %v2778, %v2779
        %v2781 = vrot.slane %v2780, 2
        %v2782 = vadd.f32 %v2780, %v2781
        %v2783 = vrot.slane %v2782, 1
        %v2784 = vadd.f32 %v2782, %v2783
        %v2785 = vadd.f32 %v2157, %v2161
        %v2786 = vadd.f32 %v2785, %v2165
        %v2787 = vadd.f32 %v2786, %v2169
        %v2788 = vadd.f32 %v2787, %v2173
        %v2789 = vadd.f32 %v2788, %v2177
        %v2790 = vadd.f32 %v2789, %v2181
        %v2791 = vadd.f32 %v2790, %v2185
        %v2792 = vrot.slane %v2791, 4
        %v2793 = vadd.f32 %v2791, %v2792
        %v2794 = vrot.slane %v2793, 2
        %v2795 = vadd.f32 %v2793, %v2794
        %v2796 = vrot.slane %v2795, 1
        %v2797 = vadd.f32 %v2795, %v2796
        %v2798 = vadd.f32 %v2158, %v2162
        %v2799 = vadd.f32 %v2798, %v2166
        %v2800 = vadd.f32 %v2799, %v2170
        %v2801 = vadd.f32 %v2800, %v2174
        %v2802 = vadd.f32 %v2801, %v2178
        %v2803 = vadd.f32 %v2802, %v2182
        %v2804 = vadd.f32 %v2803, %v2186
        %v2805 = vrot.slane %v2804, 4
        %v2806 = vadd.f32 %v2804, %v2805
        %v2807 = vrot.slane %v2806, 2
        %v2808 = vadd.f32 %v2806, %v2807
        %v2809 = vrot.slane %v2808, 1
        %v2810 = vadd.f32 %v2808, %v2809
        %v2811 = vadd.f32 %v2159, %v2163
        %v2812 = vadd.f32 %v2811, %v2167
        %v2813 = vadd.f32 %v2812, %v2171
        %v2814 = vadd.f32 %v2813, %v2175
        %v2815 = vadd.f32 %v2814, %v2179
        %v2816 = vadd.f32 %v2815, %v2183
        %v2817 = vadd.f32 %v2816, %v2187
        %v2818 = vrot.slane %v2817, 4
        %v2819 = vadd.f32 %v2817, %v2818
        %v2820 = vrot.slane %v2819, 2
        %v2821 = vadd.f32 %v2819, %v2820
        %v2822 = vrot.slane %v2821, 1
        %v2823 = vadd.f32 %v2821, %v2822
        %v2824 = vadd.f32 %v2188, %v2192
        %v2825 = vadd.f32 %v2824, %v2196
        %v2826 = vadd.f32 %v2825, %v2200
        %v2827 = vadd.f32 %v2826, %v2204
        %v2828 = vadd.f32 %v2827, %v2208
        %v2829 = vadd.f32 %v2828, %v2212
        %v2830 = vadd.f32 %v2829, %v2216
        %v2831 = vrot.slane %v2830, 4
        %v2832 = vadd.f32 %v2830, %v2831
        %v2833 = vrot.slane %v2832, 2
        %v2834 = vadd.f32 %v2832, %v2833
        %v2835 = vrot.slane %v2834, 1
        %v2836 = vadd.f32 %v2834, %v2835
        %v2837 = vadd.f32 %v2189, %v2193
        %v2838 = vadd.f32 %v2837, %v2197
        %v2839 = vadd.f32 %v2838, %v2201
        %v2840 = vadd.f32 %v2839, %v2205
        %v2841 = vadd.f32 %v2840, %v2209
        %v2842 = vadd.f32 %v2841, %v2213
        %v2843 = vadd.f32 %v2842, %v2217
        %v2844 = vrot.slane %v2843, 4
        %v2845 = vadd.f32 %v2843, %v2844
        %v2846 = vrot.slane %v2845, 2
        %v2847 = vadd.f32 %v2845, %v2846
        %v2848 = vrot.slane %v2847, 1
        %v2849 = vadd.f32 %v2847, %v2848
        %v2850 = vadd.f32 %v2190, %v2194
        %v2851 = vadd.f32 %v2850, %v2198
        %v2852 = vadd.f32 %v2851, %v2202
        %v2853 = vadd.f32 %v2852, %v2206
        %v2854 = vadd.f32 %v2853, %v2210
        %v2855 = vadd.f32 %v2854, %v2214
        %v2856 = vadd.f32 %v2855, %v2218
        %v2857 = vrot.slane %v2856, 4
        %v2858 = vadd.f32 %v2856, %v2857
        %v2859 = vrot.slane %v2858, 2
        %v2860 = vadd.f32 %v2858, %v2859
        %v2861 = vrot.slane %v2860, 1
        %v2862 = vadd.f32 %v2860, %v2861
        %v2863 = vadd.f32 %v2191, %v2195
        %v2864 = vadd.f32 %v2863, %v2199
        %v2865 = vadd.f32 %v2864, %v2203
        %v2866 = vadd.f32 %v2865, %v2207
        %v2867 = vadd.f32 %v2866, %v2211
        %v2868 = vadd.f32 %v2867, %v2215
        %v2869 = vadd.f32 %v2868, %v2219
        %v2870 = vrot.slane %v2869, 4
        %v2871 = vadd.f32 %v2869, %v2870
        %v2872 = vrot.slane %v2871, 2
        %v2873 = vadd.f32 %v2871, %v2872
        %v2874 = vrot.slane %v2873, 1
        %v2875 = vadd.f32 %v2873, %v2874
        %v2876 = vadd.f32 %v2220, %v2224
        %v2877 = vadd.f32 %v2876, %v2228
        %v2878 = vadd.f32 %v2877, %v2232
        %v2879 = vadd.f32 %v2878, %v2236
        %v2880 = vadd.f32 %v2879, %v2240
        %v2881 = vadd.f32 %v2880, %v2244
        %v2882 = vadd.f32 %v2881, %v2248
        %v2883 = vrot.slane %v2882, 4
        %v2884 = vadd.f32 %v2882, %v2883
        %v2885 = vrot.slane %v2884, 2
        %v2886 = vadd.f32 %v2884, %v2885
        %v2887 = vrot.slane %v2886, 1
        %v2888 = vadd.f32 %v2886, %v2887
        %v2889 = vadd.f32 %v2221, %v2225
        %v2890 = vadd.f32 %v2889, %v2229
        %v2891 = vadd.f32 %v2890, %v2233
        %v2892 = vadd.f32 %v2891, %v2237
        %v2893 = vadd.f32 %v2892, %v2241
        %v2894 = vadd.f32 %v2893, %v2245
        %v2895 = vadd.f32 %v2894, %v2249
        %v2896 = vrot.slane %v2895, 4
        %v2897 = vadd.f32 %v2895, %v2896
        %v2898 = vrot.slane %v2897, 2
        %v2899 = vadd.f32 %v2897, %v2898
        %v2900 = vrot.slane %v2899, 1
        %v2901 = vadd.f32 %v2899, %v2900
        %v2902 = vadd.f32 %v2222, %v2226
        %v2903 = vadd.f32 %v2902, %v2230
        %v2904 = vadd.f32 %v2903, %v2234
        %v2905 = vadd.f32 %v2904, %v2238
        %v2906 = vadd.f32 %v2905, %v2242
        %v2907 = vadd.f32 %v2906, %v2246
        %v2908 = vadd.f32 %v2907, %v2250
        %v2909 = vrot.slane %v2908, 4
        %v2910 = vadd.f32 %v2908, %v2909
        %v2911 = vrot.slane %v2910, 2
        %v2912 = vadd.f32 %v2910, %v2911
        %v2913 = vrot.slane %v2912, 1
        %v2914 = vadd.f32 %v2912, %v2913
        %v2915 = vadd.f32 %v2223, %v2227
        %v2916 = vadd.f32 %v2915, %v2231
        %v2917 = vadd.f32 %v2916, %v2235
        %v2918 = vadd.f32 %v2917, %v2239
        %v2919 = vadd.f32 %v2918, %v2243
        %v2920 = vadd.f32 %v2919, %v2247
        %v2921 = vadd.f32 %v2920, %v2251
        %v2922 = vrot.slane %v2921, 4
        %v2923 = vadd.f32 %v2921, %v2922
        %v2924 = vrot.slane %v2923, 2
        %v2925 = vadd.f32 %v2923, %v2924
        %v2926 = vrot.slane %v2925, 1
        %v2927 = vadd.f32 %v2925, %v2926
        %v2928 = vadd.f32 %v2252, %v2256
        %v2929 = vadd.f32 %v2928, %v2260
        %v2930 = vadd.f32 %v2929, %v2264
        %v2931 = vadd.f32 %v2930, %v2268
        %v2932 = vadd.f32 %v2931, %v2272
        %v2933 = vadd.f32 %v2932, %v2276
        %v2934 = vadd.f32 %v2933, %v2280
        %v2935 = vrot.slane %v2934, 4
        %v2936 = vadd.f32 %v2934, %v2935
        %v2937 = vrot.slane %v2936, 2
        %v2938 = vadd.f32 %v2936, %v2937
        %v2939 = vrot.slane %v2938, 1
        %v2940 = vadd.f32 %v2938, %v2939
        %v2941 = vadd.f32 %v2253, %v2257
        %v2942 = vadd.f32 %v2941, %v2261
        %v2943 = vadd.f32 %v2942, %v2265
        %v2944 = vadd.f32 %v2943, %v2269
        %v2945 = vadd.f32 %v2944, %v2273
        %v2946 = vadd.f32 %v2945, %v2277
        %v2947 = vadd.f32 %v2946, %v2281
        %v2948 = vrot.slane %v2947, 4
        %v2949 = vadd.f32 %v2947, %v2948
        %v2950 = vrot.slane %v2949, 2
        %v2951 = vadd.f32 %v2949, %v2950
        %v2952 = vrot.slane %v2951, 1
        %v2953 = vadd.f32 %v2951, %v2952
        %v2954 = vadd.f32 %v2254, %v2258
        %v2955 = vadd.f32 %v2954, %v2262
        %v2956 = vadd.f32 %v2955, %v2266
        %v2957 = vadd.f32 %v2956, %v2270
        %v2958 = vadd.f32 %v2957, %v2274
        %v2959 = vadd.f32 %v2958, %v2278
        %v2960 = vadd.f32 %v2959, %v2282
        %v2961 = vrot.slane %v2960, 4
        %v2962 = vadd.f32 %v2960, %v2961
        %v2963 = vrot.slane %v2962, 2
        %v2964 = vadd.f32 %v2962, %v2963
        %v2965 = vrot.slane %v2964, 1
        %v2966 = vadd.f32 %v2964, %v2965
        %v2967 = vadd.f32 %v2255, %v2259
        %v2968 = vadd.f32 %v2967, %v2263
        %v2969 = vadd.f32 %v2968, %v2267
        %v2970 = vadd.f32 %v2969, %v2271
        %v2971 = vadd.f32 %v2970, %v2275
        %v2972 = vadd.f32 %v2971, %v2279
        %v2973 = vadd.f32 %v2972, %v2283
        %v2974 = vrot.slane %v2973, 4
        %v2975 = vadd.f32 %v2973, %v2974
        %v2976 = vrot.slane %v2975, 2
        %v2977 = vadd.f32 %v2975, %v2976
        %v2978 = vrot.slane %v2977, 1
        %v2979 = vadd.f32 %v2977, %v2978
        %v2980 = vadd.f32 %v2284, %v2288
        %v2981 = vadd.f32 %v2980, %v2292
        %v2982 = vadd.f32 %v2981, %v2296
        %v2983 = vadd.f32 %v2982, %v2300
        %v2984 = vadd.f32 %v2983, %v2304
        %v2985 = vadd.f32 %v2984, %v2308
        %v2986 = vadd.f32 %v2985, %v2312
        %v2987 = vrot.slane %v2986, 4
        %v2988 = vadd.f32 %v2986, %v2987
        %v2989 = vrot.slane %v2988, 2
        %v2990 = vadd.f32 %v2988, %v2989
        %v2991 = vrot.slane %v2990, 1
        %v2992 = vadd.f32 %v2990, %v2991
        %v2993 = vadd.f32 %v2285, %v2289
        %v2994 = vadd.f32 %v2993, %v2293
        %v2995 = vadd.f32 %v2994, %v2297
        %v2996 = vadd.f32 %v2995, %v2301
        %v2997 = vadd.f32 %v2996, %v2305
        %v2998 = vadd.f32 %v2997, %v2309
        %v2999 = vadd.f32 %v2998, %v2313
        %v3000 = vrot.slane %v2999, 4
        %v3001 = vadd.f32 %v2999, %v3000
        %v3002 = vrot.slane %v3001, 2
        %v3003 = vadd.f32 %v3001, %v3002
        %v3004 = vrot.slane %v3003, 1
        %v3005 = vadd.f32 %v3003, %v3004
        %v3006 = vadd.f32 %v2286, %v2290
        %v3007 = vadd.f32 %v3006, %v2294
        %v3008 = vadd.f32 %v3007, %v2298
        %v3009 = vadd.f32 %v3008, %v2302
        %v3010 = vadd.f32 %v3009, %v2306
        %v3011 = vadd.f32 %v3010, %v2310
        %v3012 = vadd.f32 %v3011, %v2314
        %v3013 = vrot.slane %v3012, 4
        %v3014 = vadd.f32 %v3012, %v3013
        %v3015 = vrot.slane %v3014, 2
        %v3016 = vadd.f32 %v3014, %v3015
        %v3017 = vrot.slane %v3016, 1
        %v3018 = vadd.f32 %v3016, %v3017
        %v3019 = vadd.f32 %v2287, %v2291
        %v3020 = vadd.f32 %v3019, %v2295
        %v3021 = vadd.f32 %v3020, %v2299
        %v3022 = vadd.f32 %v3021, %v2303
        %v3023 = vadd.f32 %v3022, %v2307
        %v3024 = vadd.f32 %v3023, %v2311
        %v3025 = vadd.f32 %v3024, %v2315
        %v3026 = vrot.slane %v3025, 4
        %v3027 = vadd.f32 %v3025, %v3026
        %v3028 = vrot.slane %v3027, 2
        %v3029 = vadd.f32 %v3027, %v3028
        %v3030 = vrot.slane %v3029, 1
        %v3031 = vadd.f32 %v3029, %v3030
        %v3032 = vadd.f32 %v2316, %v2320
        %v3033 = vadd.f32 %v3032, %v2324
        %v3034 = vadd.f32 %v3033, %v2328
        %v3035 = vadd.f32 %v3034, %v2332
        %v3036 = vadd.f32 %v3035, %v2336
        %v3037 = vadd.f32 %v3036, %v2340
        %v3038 = vadd.f32 %v3037, %v2344
        %v3039 = vrot.slane %v3038, 4
        %v3040 = vadd.f32 %v3038, %v3039
        %v3041 = vrot.slane %v3040, 2
        %v3042 = vadd.f32 %v3040, %v3041
        %v3043 = vrot.slane %v3042, 1
        %v3044 = vadd.f32 %v3042, %v3043
        %v3045 = vadd.f32 %v2317, %v2321
        %v3046 = vadd.f32 %v3045, %v2325
        %v3047 = vadd.f32 %v3046, %v2329
        %v3048 = vadd.f32 %v3047, %v2333
        %v3049 = vadd.f32 %v3048, %v2337
        %v3050 = vadd.f32 %v3049, %v2341
        %v3051 = vadd.f32 %v3050, %v2345
        %v3052 = vrot.slane %v3051, 4
        %v3053 = vadd.f32 %v3051, %v3052
        %v3054 = vrot.slane %v3053, 2
        %v3055 = vadd.f32 %v3053, %v3054
        %v3056 = vrot.slane %v3055, 1
        %v3057 = vadd.f32 %v3055, %v3056
        %v3058 = vadd.f32 %v2318, %v2322
        %v3059 = vadd.f32 %v3058, %v2326
        %v3060 = vadd.f32 %v3059, %v2330
        %v3061 = vadd.f32 %v3060, %v2334
        %v3062 = vadd.f32 %v3061, %v2338
        %v3063 = vadd.f32 %v3062, %v2342
        %v3064 = vadd.f32 %v3063, %v2346
        %v3065 = vrot.slane %v3064, 4
        %v3066 = vadd.f32 %v3064, %v3065
        %v3067 = vrot.slane %v3066, 2
        %v3068 = vadd.f32 %v3066, %v3067
        %v3069 = vrot.slane %v3068, 1
        %v3070 = vadd.f32 %v3068, %v3069
        %v3071 = vadd.f32 %v2319, %v2323
        %v3072 = vadd.f32 %v3071, %v2327
        %v3073 = vadd.f32 %v3072, %v2331
        %v3074 = vadd.f32 %v3073, %v2335
        %v3075 = vadd.f32 %v3074, %v2339
        %v3076 = vadd.f32 %v3075, %v2343
        %v3077 = vadd.f32 %v3076, %v2347
        %v3078 = vrot.slane %v3077, 4
        %v3079 = vadd.f32 %v3077, %v3078
        %v3080 = vrot.slane %v3079, 2
        %v3081 = vadd.f32 %v3079, %v3080
        %v3082 = vrot.slane %v3081, 1
        %v3083 = vadd.f32 %v3081, %v3082
        %v3084 = vadd.f32 %v2348, %v2352
        %v3085 = vadd.f32 %v3084, %v2356
        %v3086 = vadd.f32 %v3085, %v2360
        %v3087 = vadd.f32 %v3086, %v2364
        %v3088 = vadd.f32 %v3087, %v2368
        %v3089 = vadd.f32 %v3088, %v2372
        %v3090 = vadd.f32 %v3089, %v2376
        %v3091 = vrot.slane %v3090, 4
        %v3092 = vadd.f32 %v3090, %v3091
        %v3093 = vrot.slane %v3092, 2
        %v3094 = vadd.f32 %v3092, %v3093
        %v3095 = vrot.slane %v3094, 1
        %v3096 = vadd.f32 %v3094, %v3095
        %v3097 = vadd.f32 %v2349, %v2353
        %v3098 = vadd.f32 %v3097, %v2357
        %v3099 = vadd.f32 %v3098, %v2361
        %v3100 = vadd.f32 %v3099, %v2365
        %v3101 = vadd.f32 %v3100, %v2369
        %v3102 = vadd.f32 %v3101, %v2373
        %v3103 = vadd.f32 %v3102, %v2377
        %v3104 = vrot.slane %v3103, 4
        %v3105 = vadd.f32 %v3103, %v3104
        %v3106 = vrot.slane %v3105, 2
        %v3107 = vadd.f32 %v3105, %v3106
        %v3108 = vrot.slane %v3107, 1
        %v3109 = vadd.f32 %v3107, %v3108
        %v3110 = vadd.f32 %v2350, %v2354
        %v3111 = vadd.f32 %v3110, %v2358
        %v3112 = vadd.f32 %v3111, %v2362
        %v3113 = vadd.f32 %v3112, %v2366
        %v3114 = vadd.f32 %v3113, %v2370
        %v3115 = vadd.f32 %v3114, %v2374
        %v3116 = vadd.f32 %v3115, %v2378
        %v3117 = vrot.slane %v3116, 4
        %v3118 = vadd.f32 %v3116, %v3117
        %v3119 = vrot.slane %v3118, 2
        %v3120 = vadd.f32 %v3118, %v3119
        %v3121 = vrot.slane %v3120, 1
        %v3122 = vadd.f32 %v3120, %v3121
        %v3123 = vadd.f32 %v2351, %v2355
        %v3124 = vadd.f32 %v3123, %v2359
        %v3125 = vadd.f32 %v3124, %v2363
        %v3126 = vadd.f32 %v3125, %v2367
        %v3127 = vadd.f32 %v3126, %v2371
        %v3128 = vadd.f32 %v3127, %v2375
        %v3129 = vadd.f32 %v3128, %v2379
        %v3130 = vrot.slane %v3129, 4
        %v3131 = vadd.f32 %v3129, %v3130
        %v3132 = vrot.slane %v3131, 2
        %v3133 = vadd.f32 %v3131, %v3132
        %v3134 = vrot.slane %v3133, 1
        %v3135 = vadd.f32 %v3133, %v3134
        %v3136 = vadd.f32 %v2380, %v2384
        %v3137 = vadd.f32 %v3136, %v2388
        %v3138 = vadd.f32 %v3137, %v2392
        %v3139 = vadd.f32 %v3138, %v2396
        %v3140 = vadd.f32 %v3139, %v2400
        %v3141 = vadd.f32 %v3140, %v2404
        %v3142 = vadd.f32 %v3141, %v2408
        %v3143 = vrot.slane %v3142, 4
        %v3144 = vadd.f32 %v3142, %v3143
        %v3145 = vrot.slane %v3144, 2
        %v3146 = vadd.f32 %v3144, %v3145
        %v3147 = vrot.slane %v3146, 1
        %v3148 = vadd.f32 %v3146, %v3147
        %v3149 = vadd.f32 %v2381, %v2385
        %v3150 = vadd.f32 %v3149, %v2389
        %v3151 = vadd.f32 %v3150, %v2393
        %v3152 = vadd.f32 %v3151, %v2397
        %v3153 = vadd.f32 %v3152, %v2401
        %v3154 = vadd.f32 %v3153, %v2405
        %v3155 = vadd.f32 %v3154, %v2409
        %v3156 = vrot.slane %v3155, 4
        %v3157 = vadd.f32 %v3155, %v3156
        %v3158 = vrot.slane %v3157, 2
        %v3159 = vadd.f32 %v3157, %v3158
        %v3160 = vrot.slane %v3159, 1
        %v3161 = vadd.f32 %v3159, %v3160
        %v3162 = vadd.f32 %v2382, %v2386
        %v3163 = vadd.f32 %v3162, %v2390
        %v3164 = vadd.f32 %v3163, %v2394
        %v3165 = vadd.f32 %v3164, %v2398
        %v3166 = vadd.f32 %v3165, %v2402
        %v3167 = vadd.f32 %v3166, %v2406
        %v3168 = vadd.f32 %v3167, %v2410
        %v3169 = vrot.slane %v3168, 4
        %v3170 = vadd.f32 %v3168, %v3169
        %v3171 = vrot.slane %v3170, 2
        %v3172 = vadd.f32 %v3170, %v3171
        %v3173 = vrot.slane %v3172, 1
        %v3174 = vadd.f32 %v3172, %v3173
        %v3175 = vadd.f32 %v2383, %v2387
        %v3176 = vadd.f32 %v3175, %v2391
        %v3177 = vadd.f32 %v3176, %v2395
        %v3178 = vadd.f32 %v3177, %v2399
        %v3179 = vadd.f32 %v3178, %v2403
        %v3180 = vadd.f32 %v3179, %v2407
        %v3181 = vadd.f32 %v3180, %v2411
        %v3182 = vrot.slane %v3181, 4
        %v3183 = vadd.f32 %v3181, %v3182
        %v3184 = vrot.slane %v3183, 2
        %v3185 = vadd.f32 %v3183, %v3184
        %v3186 = vrot.slane %v3185, 1
        %v3187 = vadd.f32 %v3185, %v3186
        %v3188 = vadd.f32 %v2412, %v2416
        %v3189 = vadd.f32 %v3188, %v2420
        %v3190 = vadd.f32 %v3189, %v2424
        %v3191 = vadd.f32 %v3190, %v2428
        %v3192 = vadd.f32 %v3191, %v2432
        %v3193 = vadd.f32 %v3192, %v2436
        %v3194 = vadd.f32 %v3193, %v2440
        %v3195 = vrot.slane %v3194, 4
        %v3196 = vadd.f32 %v3194, %v3195
        %v3197 = vrot.slane %v3196, 2
        %v3198 = vadd.f32 %v3196, %v3197
        %v3199 = vrot.slane %v3198, 1
        %v3200 = vadd.f32 %v3198, %v3199
        %v3201 = vadd.f32 %v2413, %v2417
        %v3202 = vadd.f32 %v3201, %v2421
        %v3203 = vadd.f32 %v3202, %v2425
        %v3204 = vadd.f32 %v3203, %v2429
        %v3205 = vadd.f32 %v3204, %v2433
        %v3206 = vadd.f32 %v3205, %v2437
        %v3207 = vadd.f32 %v3206, %v2441
        %v3208 = vrot.slane %v3207, 4
        %v3209 = vadd.f32 %v3207, %v3208
        %v3210 = vrot.slane %v3209, 2
        %v3211 = vadd.f32 %v3209, %v3210
        %v3212 = vrot.slane %v3211, 1
        %v3213 = vadd.f32 %v3211, %v3212
        %v3214 = vadd.f32 %v2414, %v2418
        %v3215 = vadd.f32 %v3214, %v2422
        %v3216 = vadd.f32 %v3215, %v2426
        %v3217 = vadd.f32 %v3216, %v2430
        %v3218 = vadd.f32 %v3217, %v2434
        %v3219 = vadd.f32 %v3218, %v2438
        %v3220 = vadd.f32 %v3219, %v2442
        %v3221 = vrot.slane %v3220, 4
        %v3222 = vadd.f32 %v3220, %v3221
        %v3223 = vrot.slane %v3222, 2
        %v3224 = vadd.f32 %v3222, %v3223
        %v3225 = vrot.slane %v3224, 1
        %v3226 = vadd.f32 %v3224, %v3225
        %v3227 = vadd.f32 %v2415, %v2419
        %v3228 = vadd.f32 %v3227, %v2423
        %v3229 = vadd.f32 %v3228, %v2427
        %v3230 = vadd.f32 %v3229, %v2431
        %v3231 = vadd.f32 %v3230, %v2435
        %v3232 = vadd.f32 %v3231, %v2439
        %v3233 = vadd.f32 %v3232, %v2443
        %v3234 = vrot.slane %v3233, 4
        %v3235 = vadd.f32 %v3233, %v3234
        %v3236 = vrot.slane %v3235, 2
        %v3237 = vadd.f32 %v3235, %v3236
        %v3238 = vrot.slane %v3237, 1
        %v3239 = vadd.f32 %v3237, %v3238
        %v3240 = vadd.f32 %v2444, %v2448
        %v3241 = vadd.f32 %v3240, %v2452
        %v3242 = vadd.f32 %v3241, %v2456
        %v3243 = vadd.f32 %v3242, %v2460
        %v3244 = vadd.f32 %v3243, %v2464
        %v3245 = vadd.f32 %v3244, %v2468
        %v3246 = vadd.f32 %v3245, %v2472
        %v3247 = vrot.slane %v3246, 4
        %v3248 = vadd.f32 %v3246, %v3247
        %v3249 = vrot.slane %v3248, 2
        %v3250 = vadd.f32 %v3248, %v3249
        %v3251 = vrot.slane %v3250, 1
        %v3252 = vadd.f32 %v3250, %v3251
        %v3253 = vadd.f32 %v2445, %v2449
        %v3254 = vadd.f32 %v3253, %v2453
        %v3255 = vadd.f32 %v3254, %v2457
        %v3256 = vadd.f32 %v3255, %v2461
        %v3257 = vadd.f32 %v3256, %v2465
        %v3258 = vadd.f32 %v3257, %v2469
        %v3259 = vadd.f32 %v3258, %v2473
        %v3260 = vrot.slane %v3259, 4
        %v3261 = vadd.f32 %v3259, %v3260
        %v3262 = vrot.slane %v3261, 2
        %v3263 = vadd.f32 %v3261, %v3262
        %v3264 = vrot.slane %v3263, 1
        %v3265 = vadd.f32 %v3263, %v3264
        %v3266 = vadd.f32 %v2446, %v2450
        %v3267 = vadd.f32 %v3266, %v2454
        %v3268 = vadd.f32 %v3267, %v2458
        %v3269 = vadd.f32 %v3268, %v2462
        %v3270 = vadd.f32 %v3269, %v2466
        %v3271 = vadd.f32 %v3270, %v2470
        %v3272 = vadd.f32 %v3271, %v2474
        %v3273 = vrot.slane %v3272, 4
        %v3274 = vadd.f32 %v3272, %v3273
        %v3275 = vrot.slane %v3274, 2
        %v3276 = vadd.f32 %v3274, %v3275
        %v3277 = vrot.slane %v3276, 1
        %v3278 = vadd.f32 %v3276, %v3277
        %v3279 = vadd.f32 %v2447, %v2451
        %v3280 = vadd.f32 %v3279, %v2455
        %v3281 = vadd.f32 %v3280, %v2459
        %v3282 = vadd.f32 %v3281, %v2463
        %v3283 = vadd.f32 %v3282, %v2467
        %v3284 = vadd.f32 %v3283, %v2471
        %v3285 = vadd.f32 %v3284, %v2475
        %v3286 = vrot.slane %v3285, 4
        %v3287 = vadd.f32 %v3285, %v3286
        %v3288 = vrot.slane %v3287, 2
        %v3289 = vadd.f32 %v3287, %v3288
        %v3290 = vrot.slane %v3289, 1
        %v3291 = vadd.f32 %v3289, %v3290
        %v3292 = vadd.f32 %v2476, %v2480
        %v3293 = vadd.f32 %v3292, %v2484
        %v3294 = vadd.f32 %v3293, %v2488
        %v3295 = vadd.f32 %v3294, %v2492
        %v3296 = vadd.f32 %v3295, %v2496
        %v3297 = vadd.f32 %v3296, %v2500
        %v3298 = vadd.f32 %v3297, %v2504
        %v3299 = vrot.slane %v3298, 4
        %v3300 = vadd.f32 %v3298, %v3299
        %v3301 = vrot.slane %v3300, 2
        %v3302 = vadd.f32 %v3300, %v3301
        %v3303 = vrot.slane %v3302, 1
        %v3304 = vadd.f32 %v3302, %v3303
        %v3305 = vadd.f32 %v2477, %v2481
        %v3306 = vadd.f32 %v3305, %v2485
        %v3307 = vadd.f32 %v3306, %v2489
        %v3308 = vadd.f32 %v3307, %v2493
        %v3309 = vadd.f32 %v3308, %v2497
        %v3310 = vadd.f32 %v3309, %v2501
        %v3311 = vadd.f32 %v3310, %v2505
        %v3312 = vrot.slane %v3311, 4
        %v3313 = vadd.f32 %v3311, %v3312
        %v3314 = vrot.slane %v3313, 2
        %v3315 = vadd.f32 %v3313, %v3314
        %v3316 = vrot.slane %v3315, 1
        %v3317 = vadd.f32 %v3315, %v3316
        %v3318 = vadd.f32 %v2478, %v2482
        %v3319 = vadd.f32 %v3318, %v2486
        %v3320 = vadd.f32 %v3319, %v2490
        %v3321 = vadd.f32 %v3320, %v2494
        %v3322 = vadd.f32 %v3321, %v2498
        %v3323 = vadd.f32 %v3322, %v2502
        %v3324 = vadd.f32 %v3323, %v2506
        %v3325 = vrot.slane %v3324, 4
        %v3326 = vadd.f32 %v3324, %v3325
        %v3327 = vrot.slane %v3326, 2
        %v3328 = vadd.f32 %v3326, %v3327
        %v3329 = vrot.slane %v3328, 1
        %v3330 = vadd.f32 %v3328, %v3329
        %v3331 = vadd.f32 %v2479, %v2483
        %v3332 = vadd.f32 %v3331, %v2487
        %v3333 = vadd.f32 %v3332, %v2491
        %v3334 = vadd.f32 %v3333, %v2495
        %v3335 = vadd.f32 %v3334, %v2499
        %v3336 = vadd.f32 %v3335, %v2503
        %v3337 = vadd.f32 %v3336, %v2507
        %v3338 = vrot.slane %v3337, 4
        %v3339 = vadd.f32 %v3337, %v3338
        %v3340 = vrot.slane %v3339, 2
        %v3341 = vadd.f32 %v3339, %v3340
        %v3342 = vrot.slane %v3341, 1
        %v3343 = vadd.f32 %v3341, %v3342
        %v3344 = vadd.f32 %v2508, %v2512
        %v3345 = vadd.f32 %v3344, %v2516
        %v3346 = vadd.f32 %v3345, %v2520
        %v3347 = vadd.f32 %v3346, %v2524
        %v3348 = vadd.f32 %v3347, %v2528
        %v3349 = vadd.f32 %v3348, %v2532
        %v3350 = vadd.f32 %v3349, %v2536
        %v3351 = vrot.slane %v3350, 4
        %v3352 = vadd.f32 %v3350, %v3351
        %v3353 = vrot.slane %v3352, 2
        %v3354 = vadd.f32 %v3352, %v3353
        %v3355 = vrot.slane %v3354, 1
        %v3356 = vadd.f32 %v3354, %v3355
        %v3357 = vadd.f32 %v2509, %v2513
        %v3358 = vadd.f32 %v3357, %v2517
        %v3359 = vadd.f32 %v3358, %v2521
        %v3360 = vadd.f32 %v3359, %v2525
        %v3361 = vadd.f32 %v3360, %v2529
        %v3362 = vadd.f32 %v3361, %v2533
        %v3363 = vadd.f32 %v3362, %v2537
        %v3364 = vrot.slane %v3363, 4
        %v3365 = vadd.f32 %v3363, %v3364
        %v3366 = vrot.slane %v3365, 2
        %v3367 = vadd.f32 %v3365, %v3366
        %v3368 = vrot.slane %v3367, 1
        %v3369 = vadd.f32 %v3367, %v3368
        %v3370 = vadd.f32 %v2510, %v2514
        %v3371 = vadd.f32 %v3370, %v2518
        %v3372 = vadd.f32 %v3371, %v2522
        %v3373 = vadd.f32 %v3372, %v2526
        %v3374 = vadd.f32 %v3373, %v2530
        %v3375 = vadd.f32 %v3374, %v2534
        %v3376 = vadd.f32 %v3375, %v2538
        %v3377 = vrot.slane %v3376, 4
        %v3378 = vadd.f32 %v3376, %v3377
        %v3379 = vrot.slane %v3378, 2
        %v3380 = vadd.f32 %v3378, %v3379
        %v3381 = vrot.slane %v3380, 1
        %v3382 = vadd.f32 %v3380, %v3381
        %v3383 = vadd.f32 %v2511, %v2515
        %v3384 = vadd.f32 %v3383, %v2519
        %v3385 = vadd.f32 %v3384, %v2523
        %v3386 = vadd.f32 %v3385, %v2527
        %v3387 = vadd.f32 %v3386, %v2531
        %v3388 = vadd.f32 %v3387, %v2535
        %v3389 = vadd.f32 %v3388, %v2539
        %v3390 = vrot.slane %v3389, 4
        %v3391 = vadd.f32 %v3389, %v3390
        %v3392 = vrot.slane %v3391, 2
        %v3393 = vadd.f32 %v3391, %v3392
        %v3394 = vrot.slane %v3393, 1
        %v3395 = vadd.f32 %v3393, %v3394
        %v3396 = vadd.f32 %v2540, %v2544
        %v3397 = vadd.f32 %v3396, %v2548
        %v3398 = vadd.f32 %v3397, %v2552
        %v3399 = vadd.f32 %v3398, %v2556
        %v3400 = vadd.f32 %v3399, %v2560
        %v3401 = vadd.f32 %v3400, %v2564
        %v3402 = vadd.f32 %v3401, %v2568
        %v3403 = vrot.slane %v3402, 4
        %v3404 = vadd.f32 %v3402, %v3403
        %v3405 = vrot.slane %v3404, 2
        %v3406 = vadd.f32 %v3404, %v3405
        %v3407 = vrot.slane %v3406, 1
        %v3408 = vadd.f32 %v3406, %v3407
        %v3409 = vadd.f32 %v2541, %v2545
        %v3410 = vadd.f32 %v3409, %v2549
        %v3411 = vadd.f32 %v3410, %v2553
        %v3412 = vadd.f32 %v3411, %v2557
        %v3413 = vadd.f32 %v3412, %v2561
        %v3414 = vadd.f32 %v3413, %v2565
        %v3415 = vadd.f32 %v3414, %v2569
        %v3416 = vrot.slane %v3415, 4
        %v3417 = vadd.f32 %v3415, %v3416
        %v3418 = vrot.slane %v3417, 2
        %v3419 = vadd.f32 %v3417, %v3418
        %v3420 = vrot.slane %v3419, 1
        %v3421 = vadd.f32 %v3419, %v3420
        %v3422 = vadd.f32 %v2542, %v2546
        %v3423 = vadd.f32 %v3422, %v2550
        %v3424 = vadd.f32 %v3423, %v2554
        %v3425 = vadd.f32 %v3424, %v2558
        %v3426 = vadd.f32 %v3425, %v2562
        %v3427 = vadd.f32 %v3426, %v2566
        %v3428 = vadd.f32 %v3427, %v2570
        %v3429 = vrot.slane %v3428, 4
        %v3430 = vadd.f32 %v3428, %v3429
        %v3431 = vrot.slane %v3430, 2
        %v3432 = vadd.f32 %v3430, %v3431
        %v3433 = vrot.slane %v3432, 1
        %v3434 = vadd.f32 %v3432, %v3433
        %v3435 = vadd.f32 %v2543, %v2547
        %v3436 = vadd.f32 %v3435, %v2551
        %v3437 = vadd.f32 %v3436, %v2555
        %v3438 = vadd.f32 %v3437, %v2559
        %v3439 = vadd.f32 %v3438, %v2563
        %v3440 = vadd.f32 %v3439, %v2567
        %v3441 = vadd.f32 %v3440, %v2571
        %v3442 = vrot.slane %v3441, 4
        %v3443 = vadd.f32 %v3441, %v3442
        %v3444 = vrot.slane %v3443, 2
        %v3445 = vadd.f32 %v3443, %v3444
        %v3446 = vrot.slane %v3445, 1
        %v3447 = vadd.f32 %v3445, %v3446
        %v3448 = vadd.f32 %v2572, %v2576
        %v3449 = vadd.f32 %v3448, %v2580
        %v3450 = vadd.f32 %v3449, %v2584
        %v3451 = vadd.f32 %v3450, %v2588
        %v3452 = vadd.f32 %v3451, %v2592
        %v3453 = vadd.f32 %v3452, %v2596
        %v3454 = vadd.f32 %v3453, %v2600
        %v3455 = vrot.slane %v3454, 4
        %v3456 = vadd.f32 %v3454, %v3455
        %v3457 = vrot.slane %v3456, 2
        %v3458 = vadd.f32 %v3456, %v3457
        %v3459 = vrot.slane %v3458, 1
        %v3460 = vadd.f32 %v3458, %v3459
        %v3461 = vadd.f32 %v2573, %v2577
        %v3462 = vadd.f32 %v3461, %v2581
        %v3463 = vadd.f32 %v3462, %v2585
        %v3464 = vadd.f32 %v3463, %v2589
        %v3465 = vadd.f32 %v3464, %v2593
        %v3466 = vadd.f32 %v3465, %v2597
        %v3467 = vadd.f32 %v3466, %v2601
        %v3468 = vrot.slane %v3467, 4
        %v3469 = vadd.f32 %v3467, %v3468
        %v3470 = vrot.slane %v3469, 2
        %v3471 = vadd.f32 %v3469, %v3470
        %v3472 = vrot.slane %v3471, 1
        %v3473 = vadd.f32 %v3471, %v3472
        %v3474 = vadd.f32 %v2574, %v2578
        %v3475 = vadd.f32 %v3474, %v2582
        %v3476 = vadd.f32 %v3475, %v2586
        %v3477 = vadd.f32 %v3476, %v2590
        %v3478 = vadd.f32 %v3477, %v2594
        %v3479 = vadd.f32 %v3478, %v2598
        %v3480 = vadd.f32 %v3479, %v2602
        %v3481 = vrot.slane %v3480, 4
        %v3482 = vadd.f32 %v3480, %v3481
        %v3483 = vrot.slane %v3482, 2
        %v3484 = vadd.f32 %v3482, %v3483
        %v3485 = vrot.slane %v3484, 1
        %v3486 = vadd.f32 %v3484, %v3485
        %v3487 = vadd.f32 %v2575, %v2579
        %v3488 = vadd.f32 %v3487, %v2583
        %v3489 = vadd.f32 %v3488, %v2587
        %v3490 = vadd.f32 %v3489, %v2591
        %v3491 = vadd.f32 %v3490, %v2595
        %v3492 = vadd.f32 %v3491, %v2599
        %v3493 = vadd.f32 %v3492, %v2603
        %v3494 = vrot.slane %v3493, 4
        %v3495 = vadd.f32 %v3493, %v3494
        %v3496 = vrot.slane %v3495, 2
        %v3497 = vadd.f32 %v3495, %v3496
        %v3498 = vrot.slane %v3497, 1
        %v3499 = vadd.f32 %v3497, %v3498
        %v3500 = vadd.f32 %v2604, %v2608
        %v3501 = vadd.f32 %v3500, %v2612
        %v3502 = vadd.f32 %v3501, %v2616
        %v3503 = vadd.f32 %v3502, %v2620
        %v3504 = vadd.f32 %v3503, %v2624
        %v3505 = vadd.f32 %v3504, %v2628
        %v3506 = vadd.f32 %v3505, %v2632
        %v3507 = vrot.slane %v3506, 4
        %v3508 = vadd.f32 %v3506, %v3507
        %v3509 = vrot.slane %v3508, 2
        %v3510 = vadd.f32 %v3508, %v3509
        %v3511 = vrot.slane %v3510, 1
        %v3512 = vadd.f32 %v3510, %v3511
        %v3513 = vadd.f32 %v2605, %v2609
        %v3514 = vadd.f32 %v3513, %v2613
        %v3515 = vadd.f32 %v3514, %v2617
        %v3516 = vadd.f32 %v3515, %v2621
        %v3517 = vadd.f32 %v3516, %v2625
        %v3518 = vadd.f32 %v3517, %v2629
        %v3519 = vadd.f32 %v3518, %v2633
        %v3520 = vrot.slane %v3519, 4
        %v3521 = vadd.f32 %v3519, %v3520
        %v3522 = vrot.slane %v3521, 2
        %v3523 = vadd.f32 %v3521, %v3522
        %v3524 = vrot.slane %v3523, 1
        %v3525 = vadd.f32 %v3523, %v3524
        %v3526 = vadd.f32 %v2606, %v2610
        %v3527 = vadd.f32 %v3526, %v2614
        %v3528 = vadd.f32 %v3527, %v2618
        %v3529 = vadd.f32 %v3528, %v2622
        %v3530 = vadd.f32 %v3529, %v2626
        %v3531 = vadd.f32 %v3530, %v2630
        %v3532 = vadd.f32 %v3531, %v2634
        %v3533 = vrot.slane %v3532, 4
        %v3534 = vadd.f32 %v3532, %v3533
        %v3535 = vrot.slane %v3534, 2
        %v3536 = vadd.f32 %v3534, %v3535
        %v3537 = vrot.slane %v3536, 1
        %v3538 = vadd.f32 %v3536, %v3537
        %v3539 = vadd.f32 %v2607, %v2611
        %v3540 = vadd.f32 %v3539, %v2615
        %v3541 = vadd.f32 %v3540, %v2619
        %v3542 = vadd.f32 %v3541, %v2623
        %v3543 = vadd.f32 %v3542, %v2627
        %v3544 = vadd.f32 %v3543, %v2631
        %v3545 = vadd.f32 %v3544, %v2635
        %v3546 = vrot.slane %v3545, 4
        %v3547 = vadd.f32 %v3545, %v3546
        %v3548 = vrot.slane %v3547, 2
        %v3549 = vadd.f32 %v3547, %v3548
        %v3550 = vrot.slane %v3549, 1
        %v3551 = vadd.f32 %v3549, %v3550
        %v3552 = vadd.f32 %v2636, %v2640
        %v3553 = vadd.f32 %v3552, %v2644
        %v3554 = vadd.f32 %v3553, %v2648
        %v3555 = vadd.f32 %v3554, %v2652
        %v3556 = vadd.f32 %v3555, %v2656
        %v3557 = vadd.f32 %v3556, %v2660
        %v3558 = vadd.f32 %v3557, %v2664
        %v3559 = vrot.slane %v3558, 4
        %v3560 = vadd.f32 %v3558, %v3559
        %v3561 = vrot.slane %v3560, 2
        %v3562 = vadd.f32 %v3560, %v3561
        %v3563 = vrot.slane %v3562, 1
        %v3564 = vadd.f32 %v3562, %v3563
        %v3565 = vadd.f32 %v2637, %v2641
        %v3566 = vadd.f32 %v3565, %v2645
        %v3567 = vadd.f32 %v3566, %v2649
        %v3568 = vadd.f32 %v3567, %v2653
        %v3569 = vadd.f32 %v3568, %v2657
        %v3570 = vadd.f32 %v3569, %v2661
        %v3571 = vadd.f32 %v3570, %v2665
        %v3572 = vrot.slane %v3571, 4
        %v3573 = vadd.f32 %v3571, %v3572
        %v3574 = vrot.slane %v3573, 2
        %v3575 = vadd.f32 %v3573, %v3574
        %v3576 = vrot.slane %v3575, 1
        %v3577 = vadd.f32 %v3575, %v3576
        %v3578 = vadd.f32 %v2638, %v2642
        %v3579 = vadd.f32 %v3578, %v2646
        %v3580 = vadd.f32 %v3579, %v2650
        %v3581 = vadd.f32 %v3580, %v2654
        %v3582 = vadd.f32 %v3581, %v2658
        %v3583 = vadd.f32 %v3582, %v2662
        %v3584 = vadd.f32 %v3583, %v2666
        %v3585 = vrot.slane %v3584, 4
        %v3586 = vadd.f32 %v3584, %v3585
        %v3587 = vrot.slane %v3586, 2
        %v3588 = vadd.f32 %v3586, %v3587
        %v3589 = vrot.slane %v3588, 1
        %v3590 = vadd.f32 %v3588, %v3589
        %v3591 = vadd.f32 %v2639, %v2643
        %v3592 = vadd.f32 %v3591, %v2647
        %v3593 = vadd.f32 %v3592, %v2651
        %v3594 = vadd.f32 %v3593, %v2655
        %v3595 = vadd.f32 %v3594, %v2659
        %v3596 = vadd.f32 %v3595, %v2663
        %v3597 = vadd.f32 %v3596, %v2667
        %v3598 = vrot.slane %v3597, 4
        %v3599 = vadd.f32 %v3597, %v3598
        %v3600 = vrot.slane %v3599, 2
        %v3601 = vadd.f32 %v3599, %v3600
        %v3602 = vrot.slane %v3601, 1
        %v3603 = vadd.f32 %v3601, %v3602
        %vm3676 = vcmask 1041409
        %v3677 = vsel %vm3676, %v2732, %v2680
        %vm3678 = vcmask 1042434
        %v3679 = vsel %vm3678, %v2784, %v3677
        %vm3680 = vcmask 1043459
        %v3681 = vsel %vm3680, %v2836, %v3679
        %vm3682 = vcmask 1044484
        %v3683 = vsel %vm3682, %v2888, %v3681
        %vm3684 = vcmask 1045509
        %v3685 = vsel %vm3684, %v2940, %v3683
        %vm3686 = vcmask 1046534
        %v3687 = vsel %vm3686, %v2992, %v3685
        %vm3688 = vcmask 1047559
        %v3689 = vsel %vm3688, %v3044, %v3687
        %v3690 = vsel %vm3676, %v2745, %v2693
        %v3691 = vsel %vm3678, %v2797, %v3690
        %v3692 = vsel %vm3680, %v2849, %v3691
        %v3693 = vsel %vm3682, %v2901, %v3692
        %v3694 = vsel %vm3684, %v2953, %v3693
        %v3695 = vsel %vm3686, %v3005, %v3694
        %v3696 = vsel %vm3688, %v3057, %v3695
        %v3697 = vsel %vm3676, %v2758, %v2706
        %v3698 = vsel %vm3678, %v2810, %v3697
        %v3699 = vsel %vm3680, %v2862, %v3698
        %v3700 = vsel %vm3682, %v2914, %v3699
        %v3701 = vsel %vm3684, %v2966, %v3700
        %v3702 = vsel %vm3686, %v3018, %v3701
        %v3703 = vsel %vm3688, %v3070, %v3702
        %v3704 = vsel %vm3676, %v2771, %v2719
        %v3705 = vsel %vm3678, %v2823, %v3704
        %v3706 = vsel %vm3680, %v2875, %v3705
        %v3707 = vsel %vm3682, %v2927, %v3706
        %v3708 = vsel %vm3684, %v2979, %v3707
        %v3709 = vsel %vm3686, %v3031, %v3708
        %v3710 = vsel %vm3688, %v3083, %v3709
        %v3711 = vsel %vm3676, %v3148, %v3096
        %v3712 = vsel %vm3678, %v3200, %v3711
        %v3713 = vsel %vm3680, %v3252, %v3712
        %v3714 = vsel %vm3682, %v3304, %v3713
        %v3715 = vsel %vm3684, %v3356, %v3714
        %v3716 = vsel %vm3686, %v3408, %v3715
        %v3717 = vsel %vm3688, %v3460, %v3716
        %v3718 = vsel %vm3676, %v3161, %v3109
        %v3719 = vsel %vm3678, %v3213, %v3718
        %v3720 = vsel %vm3680, %v3265, %v3719
        %v3721 = vsel %vm3682, %v3317, %v3720
        %v3722 = vsel %vm3684, %v3369, %v3721
        %v3723 = vsel %vm3686, %v3421, %v3722
        %v3724 = vsel %vm3688, %v3473, %v3723
        %v3725 = vsel %vm3676, %v3174, %v3122
        %v3726 = vsel %vm3678, %v3226, %v3725
        %v3727 = vsel %vm3680, %v3278, %v3726
        %v3728 = vsel %vm3682, %v3330, %v3727
        %v3729 = vsel %vm3684, %v3382, %v3728
        %v3730 = vsel %vm3686, %v3434, %v3729
        %v3731 = vsel %vm3688, %v3486, %v3730
        %v3732 = vsel %vm3676, %v3187, %v3135
        %v3733 = vsel %vm3678, %v3239, %v3732
        %v3734 = vsel %vm3680, %v3291, %v3733
        %v3735 = vsel %vm3682, %v3343, %v3734
        %v3736 = vsel %vm3684, %v3395, %v3735
        %v3737 = vsel %vm3686, %v3447, %v3736
        %v3738 = vsel %vm3688, %v3499, %v3737
        %v3739 = vsel %vm3676, %v3564, %v3512
        %v3740 = vsel %vm3676, %v3577, %v3525
        %v3741 = vsel %vm3676, %v3590, %v3538
        %v3742 = vsel %vm3676, %v3603, %v3551
        %v3755 = vadd.f32 %v3689, %v3696
        %v3756 = vadd.f32 %v3755, %v3703
        %v3757 = vadd.f32 %v3756, %v3710
        %3758 = vadd.xlane.f32.xlu0 %v3757
        %v3759 = vpop.xlane.xlu0 %3758
        %v3760 = vadd.f32 %v3717, %v3724
        %v3761 = vadd.f32 %v3760, %v3731
        %v3762 = vadd.f32 %v3761, %v3738
        %3763 = vadd.xlane.f32.xlu0 %v3762
        %v3764 = vpop.xlane.xlu0 %3763
        %vm3765 = vcmask 1041408
        %v3766 = vsel %vm3765, %v3739, 0.0
        %v3767 = vsel %vm3765, %v3740, 0.0
        %v3768 = vadd.f32 %v3766, %v3767
        %v3769 = vsel %vm3765, %v3741, 0.0
        %v3770 = vadd.f32 %v3768, %v3769
        %v3771 = vsel %vm3765, %v3742, 0.0
        %v3772 = vadd.f32 %v3770, %v3771
        %3773 = vadd.xlane.f32.xlu0 %v3772
        %v3774 = vpop.xlane.xlu0 %3773
        %v3775 = vld [vmem:[%s6] sm:$0xff]
        %v3776 = vld [vmem:[%s6 + $0x8] sm:$0xff]
        %v3777 = vld [vmem:[%s6 + $0x10] sm:$0x3]
        %v3778 = vadd.f32 %v3759, %v3775
        %v3779 = vadd.f32 %v3764, %v3776
        %v3780 = vadd.f32 %v3774, %v3777
        %v3781 = vsub.f32 0.0, %v3778
        %v3782 = vsub.f32 0.0, %v3779
        %v3783 = vsub.f32 0.0, %v3780
        %v3784 = vmul.f32 %v3781, 1.442695
        %v3785 = vpow.pop %v3784
        %v3786 = vmul.f32 %v3782, 1.442695
        %v3787 = vpow.pop %v3786
        %v3788 = vmul.f32 %v3783, 1.442695
        %v3789 = vpow.pop %v3788
        %v3790 = vadd.f32 %v3785, 1.0
        %v3791 = vadd.f32 %v3787, 1.0
        %v3792 = vadd.f32 %v3789, 1.0
        %v3793 = vrcp.pop %v3790
        %v3794 = vmul.f32 %v3790, %v3793
        %v3795 = vsub.f32 1.0, %v3794
        %v3796 = vmul.f32 %v3793, %v3795
        %v3797 = vadd.f32 %v3793, %v3796
        %vm3798 = vweird.f32 %v3790
        %vm3799 = vweird.f32 %v3793
        %vm3800 = vmor %vm3798, %vm3799
        %v3801 = vsel %vm3800, %v3793, %v3797
        %v3802 = vand.u32 2147483647, %v3790
        %vm3803 = vcmp.eq.f32.partialorder %v3802, 8.507059e+37
        %v3804 = vand.u32 %v3790, 2147483648
        %v3805 = vor.u32 1.1754944e-38, %v3804
        %v3806 = vsel %vm3803, %v3805, %v3801
        %v3807 = vmul.f32 1.0, %v3806
        %v3808 = vrcp.pop %v3791
        %v3809 = vmul.f32 %v3791, %v3808
        %v3810 = vsub.f32 1.0, %v3809
        %v3811 = vmul.f32 %v3808, %v3810
        %v3812 = vadd.f32 %v3808, %v3811
        %vm3813 = vweird.f32 %v3791
        %vm3814 = vweird.f32 %v3808
        %vm3815 = vmor %vm3813, %vm3814
        %v3816 = vsel %vm3815, %v3808, %v3812
        %v3817 = vand.u32 2147483647, %v3791
        %vm3818 = vcmp.eq.f32.partialorder %v3817, 8.507059e+37
        %v3819 = vand.u32 %v3791, 2147483648
        %v3820 = vor.u32 1.1754944e-38, %v3819
        %v3821 = vsel %vm3818, %v3820, %v3816
        %v3822 = vmul.f32 1.0, %v3821
        %v3823 = vrcp.pop %v3792
        %v3824 = vmul.f32 %v3792, %v3823
        %v3825 = vsub.f32 1.0, %v3824
        %v3826 = vmul.f32 %v3823, %v3825
        %v3827 = vadd.f32 %v3823, %v3826
        %vm3828 = vweird.f32 %v3792
        %vm3829 = vweird.f32 %v3823
        %vm3830 = vmor %vm3828, %vm3829
        %v3831 = vsel %vm3830, %v3823, %v3827
        %v3832 = vand.u32 2147483647, %v3792
        %vm3833 = vcmp.eq.f32.partialorder %v3832, 8.507059e+37
        %v3834 = vand.u32 %v3792, 2147483648
        %v3835 = vor.u32 1.1754944e-38, %v3834
        %v3836 = vsel %vm3833, %v3835, %v3831
        %v3837 = vmul.f32 1.0, %v3836
        %3838 = vst.msk [vmem:[%s360] sm:$0xff] %vm1379, %v3807
        %3839 = vst.msk [vmem:[%s360 + $0x8] sm:$0xff] %vm1379, %v3822
        %vm3840 = vcmask 1024
        %3841 = vst.msk [vmem:[%s360 + $0x10] sm:$0x3] %vm3840, %v3837
        %p3842 = scmp.lt.s32.totalorder %s23, 1
        %s3843 = scalar_select %p3842, %s23, 1
        %s3844 = smul.addr %s3843, 3
        %s3845 = smul.addr %s3844, 8
        %s3846 = scalar_lea.vmem %s7, %s3845
        // Predicated region
        $region69: #{tpu_custom_call.1} parent=47 // pred_check
          %p3847 = pneg %p193
        $region70: #{tpu_custom_call.1} parent=47 // pred_check_branch
          %3849 = sbr.rel (%p3847) target = $region72
        $region71: #{tpu_custom_call.1} parent=47 // pred_region
          _
        $region72: #{tpu_custom_call.1} parent=47 // pred_fallthru
          _
      $region48: #{tpu_custom_call.1} parent=5 // pred_fallthru
        _
      %p3850 = scmp.le.s32.totalorder 2, %s18
      // Predicated region
      $region73: #{tpu_custom_call.1} parent=5 // pred_check
        %p3851 = pneg %p3850
      $region74: #{tpu_custom_call.1} parent=5 // pred_check_branch
        %3853 = sbr.rel (%p3851) target = $region76
      $region75: #{tpu_custom_call.1} parent=5 // pred_region
        %s3854 = ssub.s32 %s18, 2
        // Predicated region
        $region77: #{tpu_custom_call.1} parent=75 // pred_check
          %p3855 = pneg %p199
        $region78: #{tpu_custom_call.1} parent=75 // pred_check_branch
          %3857 = sbr.rel (%p3855) target = $region80
        $region79: #{tpu_custom_call.1} parent=75 // pred_region
          %p3858 = scmp.lt.s32.totalorder %s24, 1
          %s3859 = scalar_select %p3858, %s24, 1
          %s3860 = smul.addr %s3859, 3
          %s3861 = smul.addr %s3860, 8
          %s3862 = scalar_lea.vmem %s7, %s3861
        $region80: #{tpu_custom_call.1} parent=75 // pred_fallthru
          _
      $region76: #{tpu_custom_call.1} parent=5 // pred_fallthru
        _
    $region6: #{tpu_custom_call.1} parent=1 // loop_footer
      %s22 = sadd.s32 1, %s18
    $region7: #{tpu_custom_call.1} parent=1 // loop_footer_branch
      %17 = sbr.rel target = $region3
    $region8: #{tpu_custom_call.1} parent=1 // loop_exit
      _
    %3863 = vsyncpa [#allocation3], 1
    %s3864 = scalar_lea.sflag [#allocation3], 1
    %3865 = vsyncpa %s3864, 1
    %3866 = vsyncpa [#allocation5], 1
    %3867 = vsyncpa [#allocation8], 1

</llo_original>
